<compile_context>
chip_gen: v7x
topology: tpu7x:2x2x1
jax: 0.10.0
libtpu: 0.0.40
codegen_flags: <defaults>
</compile_context>

<pallas_src>
import functools

import jax
import jax.numpy as jnp
import numpy as np
from jax.experimental import pallas as pl
from jax.experimental.pallas import tpu as pltpu

NEG_SLOPE = 0.01   # F.leaky_relu default negative_slope
BN_EPS = 1e-5      # nn.BatchNorm2d default eps


def _round_up(x, m):
    return ((x + m - 1) // m) * m


# ----------------------------------------------------------------------------
# Single fused Pallas kernel: the whole forward pass (6 matmuls + bias + leaky_relu).
# All operands are whole-array VMEM blocks; intermediates stay in vregs.
# ----------------------------------------------------------------------------
def _cifarnet_kernel(x_ref, t1_ref, b1_ref, t2_ref, b2_ref, t3_ref, b3_ref,
                     wf3_ref, bf3_ref, wf4_ref, bf4_ref, wl_ref, bl_ref, o_ref):
    def dense(h, w_ref, b_ref, act):
        y = jnp.dot(h, w_ref[...], preferred_element_type=jnp.float32) + b_ref[...]
        if act:
            y = jnp.where(y >= 0.0, y, NEG_SLOPE * y)   # leaky_relu
        return y

    h = x_ref[...]                          # (M_pad, Cin*H*W), CHW-flattened input
    h = dense(h, t1_ref, b1_ref, True)      # conv1 (Toeplitz, BN1 folded) + leaky_relu
    h = dense(h, t2_ref, b2_ref, True)      # conv2 (Toeplitz, BN2 folded) + leaky_relu
    h = dense(h, t3_ref, b3_ref, True)      # conv3 (Toeplitz, BN3 folded) + leaky_relu
    h = dense(h, wf3_ref, bf3_ref, True)    # fc3 + leaky_relu  (flatten is identity in CHW)
    h = dense(h, wf4_ref, bf4_ref, True)    # fc4 + leaky_relu
    h = dense(h, wl_ref, bl_ref, False)     # last -> logits (padded to 128 lanes)
    o_ref[...] = h


def cifarnet_fused_forward(x_nchw, fused, *, n_classes):
    n = x_nchw.shape[0]
    x_flat = x_nchw.reshape(n, -1).astype(jnp.float32)   # per-sample CHW flatten (free)
    m_pad = _round_up(max(n, 1), 8)
    if m_pad != n:
        x_flat = jnp.pad(x_flat, ((0, m_pad - n), (0, 0)))

    operands = [x_flat,
                fused['t1'], fused['b1'],
                fused['t2'], fused['b2'],
                fused['t3'], fused['b3'],
                fused['w_fc3'], fused['b_fc3'],
                fused['w_fc4'], fused['b_fc4'],
                fused['w_last'], fused['b_last']]
    n_out_pad = fused['w_last'].shape[1]

    vmem = pltpu.MemorySpace.VMEM
    logits_padded = pl.pallas_call(
        _cifarnet_kernel,
        out_shape=jax.ShapeDtypeStruct((m_pad, n_out_pad), jnp.float32),
        in_specs=[pl.BlockSpec(memory_space=vmem) for _ in operands],
        out_specs=pl.BlockSpec(memory_space=vmem),
        compiler_params=pltpu.CompilerParams(vmem_limit_bytes=32 * 1024 * 1024),
    )(*operands)
    return logits_padded[:n, :n_classes]


# ----------------------------------------------------------------------------
# Static (one-time) parameter prep: conv -> Toeplitz matrix, BN folding, flatten-order
# alignment, lane padding of the last layer.  Pure numpy, outside the hot path.
# ----------------------------------------------------------------------------
def conv_to_toeplitz(w, hi_size, wi_size, stride=2, pad=1):
    """Dense matrix T s.t. (x_chw_flat @ T) == conv2d(x, w, stride, pad) in CHW-flat order."""
    w = np.asarray(w, np.float32)
    c_out, c_in, kh_size, kw_size = w.shape
    ho_size = (hi_size + 2 * pad - kh_size) // stride + 1
    wo_size = (wi_size + 2 * pad - kw_size) // stride + 1
    t = np.zeros((c_in, hi_size, wi_size, c_out, ho_size, wo_size), np.float32)
    ho = np.arange(ho_size)
    wo = np.arange(wo_size)
    for kh in range(kh_size):
        hi = stride * ho + kh - pad
        hsel = (hi >= 0) & (hi < hi_size)
        ho_v, hi_v = ho[hsel], hi[hsel]
        for kw in range(kw_size):
            wi = stride * wo + kw - pad
            wsel = (wi >= 0) & (wi < wi_size)
            wo_v, wi_v = wo[wsel], wi[wsel]
            # t[ci, hi, wi, co, ho, wo] = w[co, ci, kh, kw] for all valid output positions.
            t[:, hi_v[:, None], wi_v[None, :], :, ho_v[:, None], wo_v[None, :]] = \
                w[:, :, kh, kw].T
    t = t.reshape(c_in * hi_size * wi_size, c_out * ho_size * wo_size)
    return t, (ho_size, wo_size)


def _fold_bn_into_matrix(t_mat, gamma, beta, mean, var, spatial):
    gamma, beta, mean, var = (np.asarray(a, np.float32) for a in (gamma, beta, mean, var))
    scale = gamma / np.sqrt(var + BN_EPS)              # per-channel
    shift = beta - mean * scale
    t_f = t_mat * np.repeat(scale, spatial)[None, :]   # columns ordered (co, ho, wo)
    b_f = np.repeat(shift, spatial)
    return t_f.astype(np.float32), b_f.astype(np.float32)


def build_fused_params(p, in_size, n_classes):
    t1, (h1, w1) = conv_to_toeplitz(p['conv1_w'], in_size, in_size)
    t1, b1 = _fold_bn_into_matrix(t1, p['bn1_g'], p['bn1_b'], p['bn1_m'], p['bn1_v'], h1 * w1)
    t2, (h2, w2) = conv_to_toeplitz(p['conv2_w'], h1, w1)
    t2, b2 = _fold_bn_into_matrix(t2, p['bn2_g'], p['bn2_b'], p['bn2_m'], p['bn2_v'], h2 * w2)
    t3, (h3, w3) = conv_to_toeplitz(p['conv3_w'], h2, w2)
    t3, b3 = _fold_bn_into_matrix(t3, p['bn3_g'], p['bn3_b'], p['bn3_m'], p['bn3_v'], h3 * w3)

    w_fc3 = np.asarray(p['fc3_w'], np.float32).T        # (fc3_in, 128), CHW-ordered rows
    w_fc4 = np.asarray(p['fc4_w'], np.float32).T        # (128, 64)
    w_last = np.asarray(p['last_w'], np.float32).T      # (64, n_classes)
    b_fc3 = np.asarray(p['fc3_b'], np.float32)
    b_fc4 = np.asarray(p['fc4_b'], np.float32)
    b_last = np.asarray(p['last_b'], np.float32)

    # Pad the final layer to 128 lanes so the single output store is unmasked / lane-dense.
    n_out_pad = _round_up(n_classes, 128)
    w_last_p = np.zeros((w_last.shape[0], n_out_pad), np.float32)
    w_last_p[:, :n_classes] = w_last
    b_last_p = np.zeros((n_out_pad,), np.float32)
    b_last_p[:n_classes] = b_last

    as2d = lambda b: jnp.asarray(b[None, :], jnp.float32)
    return {
        't1': jnp.asarray(t1), 'b1': as2d(b1),
        't2': jnp.asarray(t2), 'b2': as2d(b2),
        't3': jnp.asarray(t3), 'b3': as2d(b3),
        'w_fc3': jnp.asarray(w_fc3), 'b_fc3': as2d(b_fc3),
        'w_fc4': jnp.asarray(w_fc4), 'b_fc4': as2d(b_fc4),
        'w_last': jnp.asarray(w_last_p), 'b_last': as2d(b_last_p),
    }


# ----------------------------------------------------------------------------
# Pure-JAX reference (lax.conv) for correctness check.
# ----------------------------------------------------------------------------
def reference_forward(x_nchw, p):
    hi = jax.lax.Precision.HIGHEST

    def conv(x, w):
        return jax.lax.conv_general_dilated(
            x, w, (2, 2), ((1, 1), (1, 1)),
            dimension_numbers=('NCHW', 'OIHW', 'NCHW'), precision=hi)

    def bn(x, g, b, m, v):
        g, b, m, v = (a[None, :, None, None] for a in (g, b, m, v))
        return (x - m) / jnp.sqrt(v + BN_EPS) * g + b

    def lrelu(x):
        return jnp.where(x >= 0, x, NEG_SLOPE * x)

    x = lrelu(bn(conv(x_nchw, p['conv1_w']), p['bn1_g'], p['bn1_b'], p['bn1_m'], p['bn1_v']))
    x = lrelu(bn(conv(x, p['conv2_w']), p['bn2_g'], p['bn2_b'], p['bn2_m'], p['bn2_v']))
    x = lrelu(bn(conv(x, p['conv3_w']), p['bn3_g'], p['bn3_b'], p['bn3_m'], p['bn3_v']))
    x = x.reshape(x.shape[0], -1)                       # torch x.view([-1, C*H*W])
    x = lrelu(jnp.dot(x, p['fc3_w'].T, precision=hi) + p['fc3_b'])
    x = lrelu(jnp.dot(x, p['fc4_w'].T, precision=hi) + p['fc4_b'])
    return jnp.dot(x, p['last_w'].T, precision=hi) + p['last_b']


# ----------------------------------------------------------------------------
# Deterministic parameter construction (shapes per CifarNet.__init__).
# ----------------------------------------------------------------------------
def make_params(key, n_channels, n_classes, d, in_size, n_conv):
    cod = in_size // 8 if n_conv == 3 else in_size // 4
    fc3_in = d * 4 * cod * cod

    def split():
        nonlocal key
        key, sub = jax.random.split(key)
        return sub

    def nrm(shape, scale=0.1):
        return (scale * jax.random.normal(split(), shape)).astype(jnp.float32)

    def bn_params(c):
        return (1.0 + 0.1 * jax.random.normal(split(), (c,)).astype(jnp.float32),  # gamma
                nrm((c,)),                                                          # beta
                nrm((c,)),                                                          # running mean
                jax.random.uniform(split(), (c,), jnp.float32, 0.5, 1.5))           # running var

    p = {}
    p['conv1_w'] = nrm((d, n_channels, 4, 4))
    p['bn1_g'], p['bn1_b'], p['bn1_m'], p['bn1_v'] = bn_params(d)
    p['conv2_w'] = nrm((d * 2, d, 4, 4))
    p['bn2_g'], p['bn2_b'], p['bn2_m'], p['bn2_v'] = bn_params(d * 2)
    p['conv3_w'] = nrm((d * 4, d * 2, 4, 4))
    p['bn3_g'], p['bn3_b'], p['bn3_m'], p['bn3_v'] = bn_params(d * 4)
    p['fc3_w'] = nrm((128, fc3_in))
    p['fc3_b'] = nrm((128,))
    p['fc4_w'] = nrm((64, 128))
    p['fc4_b'] = nrm((64,))
    p['last_w'] = nrm((n_classes, 64))
    p['last_b'] = nrm((n_classes,))
    return p


if __name__ == "__main__":
    # Small, self-consistent CifarNet config.
    batch, n_channels, n_classes, d, in_size, n_conv = 2, 3, 10, 16, 16, 3

    key = jax.random.PRNGKey(0)
    kx, kp = jax.random.split(key)
    x = jax.random.normal(kx, (batch, n_channels, in_size, in_size), jnp.float32)  # NCHW
    params = make_params(kp, n_channels, n_classes, d, in_size, n_conv)

    # One-time static prep: Toeplitz conv matrices, BN folding, flatten-order alignment.
    fused = build_fused_params(params, in_size, n_classes)

    fwd = jax.jit(functools.partial(cifarnet_fused_forward, n_classes=n_classes))
    logits = jax.block_until_ready(fwd(x, fused))

    ref = jax.block_until_ready(reference_forward(x, params))
    assert logits.shape == (batch, n_classes), logits.shape
    # Tolerance covers MXU/XLA f32-matmul precision differences across TPU generations.
    np.testing.assert_allclose(np.asarray(logits), np.asarray(ref), rtol=1e-2, atol=1e-2)

    print("KERNEL_OK")
</pallas_src>

<mosaic_0001>
module attributes {stable_mosaic.version = 11 : i64} {
  func.func @_cifarnet_kernel(%arg0: memref<8x768xf32, #tpu.memory_space<vmem>>, %arg1: memref<768x1024xf32, #tpu.memory_space<vmem>>, %arg2: memref<1x1024xf32, #tpu.memory_space<vmem>>, %arg3: memref<1024x512xf32, #tpu.memory_space<vmem>>, %arg4: memref<1x512xf32, #tpu.memory_space<vmem>>, %arg5: memref<512x256xf32, #tpu.memory_space<vmem>>, %arg6: memref<1x256xf32, #tpu.memory_space<vmem>>, %arg7: memref<256x128xf32, #tpu.memory_space<vmem>>, %arg8: memref<1x128xf32, #tpu.memory_space<vmem>>, %arg9: memref<128x64xf32, #tpu.memory_space<vmem>>, %arg10: memref<1x64xf32, #tpu.memory_space<vmem>>, %arg11: memref<64x128xf32, #tpu.memory_space<vmem>>, %arg12: memref<1x128xf32, #tpu.memory_space<vmem>>, %arg13: memref<8x128xf32, #tpu.memory_space<vmem>>) attributes {dimension_semantics = [], scalar_prefetch = 0 : i64, scratch_operands = 0 : i64, tpu.core_type = #tpu.core_type<tc>} {
    %c0 = arith.constant 0 : index
    %c0_0 = arith.constant 0 : index
    %0 = vector.load %arg0[%c0, %c0_0] : memref<8x768xf32, #tpu.memory_space<vmem>>, vector<8x768xf32>
    %c0_1 = arith.constant 0 : index
    %c0_2 = arith.constant 0 : index
    %1 = vector.load %arg1[%c0_1, %c0_2] : memref<768x1024xf32, #tpu.memory_space<vmem>>, vector<768x1024xf32>
    %cst = arith.constant dense<0.000000e+00> : vector<8x1024xf32>
    %2 = tpu.matmul %0, %1, %cst {dimension_numbers = #tpu.dot_dimension_numbers<[1], [0], [0], [1], [0, 0, 1, 1], [], []>} : vector<8x768xf32>, vector<768x1024xf32>, vector<8x1024xf32> -> vector<8x1024xf32>
    %c0_3 = arith.constant 0 : index
    %c0_4 = arith.constant 0 : index
    %3 = vector.load %arg2[%c0_3, %c0_4] : memref<1x1024xf32, #tpu.memory_space<vmem>>, vector<1x1024xf32>
    %4 = vector.broadcast %3 : vector<1x1024xf32> to vector<8x1024xf32>
    %5 = arith.addf %2, %4 : vector<8x1024xf32>
    %cst_5 = arith.constant 0.000000e+00 : f32
    %6 = vector.broadcast %cst_5 : f32 to vector<8x1024xf32>
    %7 = arith.cmpf oge, %5, %6 : vector<8x1024xf32>
    %cst_6 = arith.constant 0.00999999977 : f32
    %8 = vector.broadcast %cst_6 : f32 to vector<8x1024xf32>
    %9 = arith.mulf %8, %5 : vector<8x1024xf32>
    %10 = arith.select %7, %5, %9 : vector<8x1024xi1>, vector<8x1024xf32>
    %c0_7 = arith.constant 0 : index
    %c0_8 = arith.constant 0 : index
    %11 = vector.load %arg3[%c0_7, %c0_8] : memref<1024x512xf32, #tpu.memory_space<vmem>>, vector<1024x512xf32>
    %cst_9 = arith.constant dense<0.000000e+00> : vector<8x512xf32>
    %12 = tpu.matmul %10, %11, %cst_9 {dimension_numbers = #tpu.dot_dimension_numbers<[1], [0], [0], [1], [0, 0, 1, 1], [], []>} : vector<8x1024xf32>, vector<1024x512xf32>, vector<8x512xf32> -> vector<8x512xf32>
    %c0_10 = arith.constant 0 : index
    %c0_11 = arith.constant 0 : index
    %13 = vector.load %arg4[%c0_10, %c0_11] : memref<1x512xf32, #tpu.memory_space<vmem>>, vector<1x512xf32>
    %14 = vector.broadcast %13 : vector<1x512xf32> to vector<8x512xf32>
    %15 = arith.addf %12, %14 : vector<8x512xf32>
    %cst_12 = arith.constant 0.000000e+00 : f32
    %16 = vector.broadcast %cst_12 : f32 to vector<8x512xf32>
    %17 = arith.cmpf oge, %15, %16 : vector<8x512xf32>
    %cst_13 = arith.constant 0.00999999977 : f32
    %18 = vector.broadcast %cst_13 : f32 to vector<8x512xf32>
    %19 = arith.mulf %18, %15 : vector<8x512xf32>
    %20 = arith.select %17, %15, %19 : vector<8x512xi1>, vector<8x512xf32>
    %c0_14 = arith.constant 0 : index
    %c0_15 = arith.constant 0 : index
    %21 = vector.load %arg5[%c0_14, %c0_15] : memref<512x256xf32, #tpu.memory_space<vmem>>, vector<512x256xf32>
    %cst_16 = arith.constant dense<0.000000e+00> : vector<8x256xf32>
    %22 = tpu.matmul %20, %21, %cst_16 {dimension_numbers = #tpu.dot_dimension_numbers<[1], [0], [0], [1], [0, 0, 1, 1], [], []>} : vector<8x512xf32>, vector<512x256xf32>, vector<8x256xf32> -> vector<8x256xf32>
    %c0_17 = arith.constant 0 : index
    %c0_18 = arith.constant 0 : index
    %23 = vector.load %arg6[%c0_17, %c0_18] : memref<1x256xf32, #tpu.memory_space<vmem>>, vector<1x256xf32>
    %24 = vector.broadcast %23 : vector<1x256xf32> to vector<8x256xf32>
    %25 = arith.addf %22, %24 : vector<8x256xf32>
    %cst_19 = arith.constant 0.000000e+00 : f32
    %26 = vector.broadcast %cst_19 : f32 to vector<8x256xf32>
    %27 = arith.cmpf oge, %25, %26 : vector<8x256xf32>
    %cst_20 = arith.constant 0.00999999977 : f32
    %28 = vector.broadcast %cst_20 : f32 to vector<8x256xf32>
    %29 = arith.mulf %28, %25 : vector<8x256xf32>
    %30 = arith.select %27, %25, %29 : vector<8x256xi1>, vector<8x256xf32>
    %c0_21 = arith.constant 0 : index
    %c0_22 = arith.constant 0 : index
    %31 = vector.load %arg7[%c0_21, %c0_22] : memref<256x128xf32, #tpu.memory_space<vmem>>, vector<256x128xf32>
    %cst_23 = arith.constant dense<0.000000e+00> : vector<8x128xf32>
    %32 = tpu.matmul %30, %31, %cst_23 {dimension_numbers = #tpu.dot_dimension_numbers<[1], [0], [0], [1], [0, 0, 1, 1], [], []>} : vector<8x256xf32>, vector<256x128xf32>, vector<8x128xf32> -> vector<8x128xf32>
    %c0_24 = arith.constant 0 : index
    %c0_25 = arith.constant 0 : index
    %33 = vector.load %arg8[%c0_24, %c0_25] : memref<1x128xf32, #tpu.memory_space<vmem>>, vector<1x128xf32>
    %34 = vector.broadcast %33 : vector<1x128xf32> to vector<8x128xf32>
    %35 = arith.addf %32, %34 : vector<8x128xf32>
    %cst_26 = arith.constant 0.000000e+00 : f32
    %36 = vector.broadcast %cst_26 : f32 to vector<8x128xf32>
    %37 = arith.cmpf oge, %35, %36 : vector<8x128xf32>
    %cst_27 = arith.constant 0.00999999977 : f32
    %38 = vector.broadcast %cst_27 : f32 to vector<8x128xf32>
    %39 = arith.mulf %38, %35 : vector<8x128xf32>
    %40 = arith.select %37, %35, %39 : vector<8x128xi1>, vector<8x128xf32>
    %c0_28 = arith.constant 0 : index
    %c0_29 = arith.constant 0 : index
    %41 = vector.load %arg9[%c0_28, %c0_29] : memref<128x64xf32, #tpu.memory_space<vmem>>, vector<128x64xf32>
    %cst_30 = arith.constant dense<0.000000e+00> : vector<8x64xf32>
    %42 = tpu.matmul %40, %41, %cst_30 {dimension_numbers = #tpu.dot_dimension_numbers<[1], [0], [0], [1], [0, 0, 1, 1], [], []>} : vector<8x128xf32>, vector<128x64xf32>, vector<8x64xf32> -> vector<8x64xf32>
    %c0_31 = arith.constant 0 : index
    %c0_32 = arith.constant 0 : index
    %43 = vector.load %arg10[%c0_31, %c0_32] : memref<1x64xf32, #tpu.memory_space<vmem>>, vector<1x64xf32>
    %44 = vector.broadcast %43 : vector<1x64xf32> to vector<8x64xf32>
    %45 = arith.addf %42, %44 : vector<8x64xf32>
    %cst_33 = arith.constant 0.000000e+00 : f32
    %46 = vector.broadcast %cst_33 : f32 to vector<8x64xf32>
    %47 = arith.cmpf oge, %45, %46 : vector<8x64xf32>
    %cst_34 = arith.constant 0.00999999977 : f32
    %48 = vector.broadcast %cst_34 : f32 to vector<8x64xf32>
    %49 = arith.mulf %48, %45 : vector<8x64xf32>
    %50 = arith.select %47, %45, %49 : vector<8x64xi1>, vector<8x64xf32>
    %c0_35 = arith.constant 0 : index
    %c0_36 = arith.constant 0 : index
    %51 = vector.load %arg11[%c0_35, %c0_36] : memref<64x128xf32, #tpu.memory_space<vmem>>, vector<64x128xf32>
    %cst_37 = arith.constant dense<0.000000e+00> : vector<8x128xf32>
    %52 = tpu.matmul %50, %51, %cst_37 {dimension_numbers = #tpu.dot_dimension_numbers<[1], [0], [0], [1], [0, 0, 1, 1], [], []>} : vector<8x64xf32>, vector<64x128xf32>, vector<8x128xf32> -> vector<8x128xf32>
    %c0_38 = arith.constant 0 : index
    %c0_39 = arith.constant 0 : index
    %53 = vector.load %arg12[%c0_38, %c0_39] : memref<1x128xf32, #tpu.memory_space<vmem>>, vector<1x128xf32>
    %54 = vector.broadcast %53 : vector<1x128xf32> to vector<8x128xf32>
    %55 = arith.addf %52, %54 : vector<8x128xf32>
    %c0_40 = arith.constant 0 : index
    %c0_41 = arith.constant 0 : index
    %56 = vector.load %arg13[%c0_40, %c0_41] : memref<8x128xf32, #tpu.memory_space<vmem>>, vector<8x128xf32>
    tpu.vector_store %arg13[%c0_40, %c0_41], %55 {strides = array<i32>} : memref<8x128xf32, #tpu.memory_space<vmem>>, vector<8x128xf32>,
    return
  }
}

</mosaic_0001>

<llo_original>
// kernel: cifarnet_fused_forward.1
$region0: #{cifarnet_fused_forward.1}
  #allocation0 [shape = 'u32[]', space=smem, size = 0x4, offset = 0x4, fixed_abs, tag = 'smem constant byte address 0x4 - core index']
  #allocation1 [shape = 'u32[144,128]{1,0:T(1,128)}', space=vmem, size = 0x12000, scoped, tag = 'internal scratch']
  %s0 = inlined_call_operand.vmem [shape: f32[8,768], index: 0, kind: input, shape index: {}]
  %s1 = inlined_call_operand.hbm [shape: f32[768,1024], index: 1, kind: input, shape index: {}]
  %s2 = inlined_call_operand.hbm [shape: f32[1,1024], index: 2, kind: input, shape index: {}]
  %s3 = inlined_call_operand.hbm [shape: f32[1024,512], index: 3, kind: input, shape index: {}]
  %s4 = inlined_call_operand.hbm [shape: f32[1,512], index: 4, kind: input, shape index: {}]
  %s5 = inlined_call_operand.hbm [shape: f32[512,256], index: 5, kind: input, shape index: {}]
  %s6 = inlined_call_operand.hbm [shape: f32[1,256], index: 6, kind: input, shape index: {}]
  %s7 = inlined_call_operand.hbm [shape: f32[256,128], index: 7, kind: input, shape index: {}]
  %s8 = inlined_call_operand.hbm [shape: f32[1,128], index: 8, kind: input, shape index: {}]
  %s9 = inlined_call_operand.vmem [shape: f32[128,64], index: 9, kind: input, shape index: {}]
  %s10 = inlined_call_operand.hbm [shape: f32[1,64], index: 10, kind: input, shape index: {}]
  %s11 = inlined_call_operand.hbm [shape: f32[64,128], index: 11, kind: input, shape index: {}]
  %s12 = inlined_call_operand.hbm [shape: f32[1,128], index: 12, kind: input, shape index: {}]
  %s13 = inlined_call_operand.vmem [shape: f32[8,128], index: 13, kind: output, shape index: {}]
  %s14 = sld [smem:[#allocation0]]
  $region106: #{cifarnet_fused_forward.1} parent=0
    _
  %s16 = ssub.s32 1, %s14
  %s17 = scalar_select 0, %s16, %s14
  $region1: #{cifarnet_fused_forward.1} parent=0
    #allocation2 [shape = 'u8[3145728]{0}', space=vmem, size = 0x300000, scoped, tag = 'input window, operand 1, single buffered']
    #allocation3 [shape = 's32[1]{0}', space=sflag, size = 0x4, scoped, tag = 'scoped memory for cifarnet_fused_forward.1']
    #allocation4 [shape = 'u8[4096]{0}', space=vmem, size = 0x1000, scoped, tag = 'input window, operand 2, single buffered']
    #allocation5 [shape = 's32[1]{0}', space=sflag, size = 0x4, scoped, tag = 'scoped memory for cifarnet_fused_forward.1']
    #allocation6 [shape = 'u8[2097152]{0}', space=vmem, size = 0x200000, scoped, tag = 'input window, operand 3, single buffered']
    #allocation7 [shape = 'u8[2048]{0}', space=vmem, size = 0x800, scoped, tag = 'input window, operand 4, single buffered']
    #allocation8 [shape = 's32[1]{0}', space=sflag, size = 0x4, scoped, tag = 'scoped memory for cifarnet_fused_forward.1']
    #allocation9 [shape = 'u8[524288]{0}', space=vmem, size = 0x80000, scoped, tag = 'input window, operand 5, single buffered']
    #allocation10 [shape = 'u8[1024]{0}', space=vmem, size = 0x400, scoped, tag = 'input window, operand 6, single buffered']
    #allocation11 [shape = 's32[1]{0}', space=sflag, size = 0x4, scoped, tag = 'scoped memory for cifarnet_fused_forward.1']
    #allocation12 [shape = 'u8[131072]{0}', space=vmem, size = 0x20000, scoped, tag = 'input window, operand 7, single buffered']
    #allocation13 [shape = 'u8[512]{0}', space=vmem, size = 0x400, scoped, tag = 'input window, operand 8, single buffered']
    #allocation14 [shape = 's32[1]{0}', space=sflag, size = 0x4, scoped, tag = 'scoped memory for cifarnet_fused_forward.1']
    #allocation15 [shape = 'u8[512]{0}', space=vmem, size = 0x400, scoped, tag = 'input window, operand 10, single buffered']
    #allocation16 [shape = 'u8[32768]{0}', space=vmem, size = 0x8000, scoped, tag = 'input window, operand 11, single buffered']
    #allocation17 [shape = 's32[1]{0}', space=sflag, size = 0x4, scoped, tag = 'scoped memory for cifarnet_fused_forward.1']
    #allocation18 [shape = 'u8[512]{0}', space=vmem, size = 0x400, scoped, tag = 'input window, operand 12, single buffered']
    %18 = vsyncpa [#allocation3], 0
    %19 = vsyncpa [#allocation5], 0
    %20 = vsyncpa [#allocation8], 0
    %21 = vsyncpa [#allocation11], 0
    %22 = vsyncpa [#allocation14], 0
    %23 = vsyncpa [#allocation17], 0
    // Predicated region
    $region2: #{cifarnet_fused_forward.1} parent=1 // pred_check
      _
    $region3: #{cifarnet_fused_forward.1} parent=1 // pred_check_branch
      %25 = sbr.rel (0) target = $region5
    $region4: #{cifarnet_fused_forward.1} parent=1 // pred_region
      _
    $region5: #{cifarnet_fused_forward.1} parent=1 // pred_fallthru
      _
    // Predicated region
    $region6: #{cifarnet_fused_forward.1} parent=1 // pred_check
      _
    $region7: #{cifarnet_fused_forward.1} parent=1 // pred_check_branch
      %27 = sbr.rel (0) target = $region9
    $region8: #{cifarnet_fused_forward.1} parent=1 // pred_region
      %s29 = ssub.s32 98304, 98304
      %30 = vsyncadd [#allocation3], %s29
      %s31 = sshll.u32 [#allocation2], 4
      %s32 = int_to_ptr.vmem [resolvable:$true] %s31
      %37 = dma.hbm_to_vmem [thread:$0]  %s1, 98304, %s32, [#allocation3], 1024, 1024, 64
    $region9: #{cifarnet_fused_forward.1} parent=1 // pred_fallthru
      _
    // Predicated region
    $region10: #{cifarnet_fused_forward.1} parent=1 // pred_check
      _
    $region11: #{cifarnet_fused_forward.1} parent=1 // pred_check_branch
      %39 = sbr.rel (0) target = $region13
    $region12: #{cifarnet_fused_forward.1} parent=1 // pred_region
      %s41 = ssub.s32 128, 128
      %42 = vsyncadd [#allocation5], %s41
      %s44 = sshll.u32 [#allocation4], 4
      %s45 = int_to_ptr.vmem [resolvable:$true] %s44
      %47 = dma.hbm_to_vmem [thread:$0]  %s2, 128, %s45, [#allocation5]
    $region13: #{cifarnet_fused_forward.1} parent=1 // pred_fallthru
      _
    // Predicated region
    $region14: #{cifarnet_fused_forward.1} parent=1 // pred_check
      _
    $region15: #{cifarnet_fused_forward.1} parent=1 // pred_check_branch
      %49 = sbr.rel (0) target = $region17
    $region16: #{cifarnet_fused_forward.1} parent=1 // pred_region
      %s51 = ssub.s32 65536, 65536
      %52 = vsyncadd [#allocation5], %s51
      %s53 = sshll.u32 [#allocation6], 4
      %s54 = int_to_ptr.vmem [resolvable:$true] %s53
      %59 = dma.hbm_to_vmem [thread:$0]  %s3, 65536, %s54, [#allocation5], 512, 512, 32
    $region17: #{cifarnet_fused_forward.1} parent=1 // pred_fallthru
      _
    // Predicated region
    $region18: #{cifarnet_fused_forward.1} parent=1 // pred_check
      _
    $region19: #{cifarnet_fused_forward.1} parent=1 // pred_check_branch
      %61 = sbr.rel (0) target = $region21
    $region20: #{cifarnet_fused_forward.1} parent=1 // pred_region
      %s63 = ssub.s32 64, 64
      %64 = vsyncadd [#allocation8], %s63
      %s66 = sshll.u32 [#allocation7], 4
      %s67 = int_to_ptr.vmem [resolvable:$true] %s66
      %69 = dma.hbm_to_vmem [thread:$0]  %s4, 64, %s67, [#allocation8]
    $region21: #{cifarnet_fused_forward.1} parent=1 // pred_fallthru
      _
    // Predicated region
    $region22: #{cifarnet_fused_forward.1} parent=1 // pred_check
      _
    $region23: #{cifarnet_fused_forward.1} parent=1 // pred_check_branch
      %71 = sbr.rel (0) target = $region25
    $region24: #{cifarnet_fused_forward.1} parent=1 // pred_region
      %s73 = ssub.s32 16384, 16384
      %74 = vsyncadd [#allocation8], %s73
      %s75 = sshll.u32 [#allocation9], 4
      %s76 = int_to_ptr.vmem [resolvable:$true] %s75
      %81 = dma.hbm_to_vmem [thread:$0]  %s5, 16384, %s76, [#allocation8], 256, 256, 16
    $region25: #{cifarnet_fused_forward.1} parent=1 // pred_fallthru
      _
    // Predicated region
    $region26: #{cifarnet_fused_forward.1} parent=1 // pred_check
      _
    $region27: #{cifarnet_fused_forward.1} parent=1 // pred_check_branch
      %83 = sbr.rel (0) target = $region29
    $region28: #{cifarnet_fused_forward.1} parent=1 // pred_region
      %s85 = ssub.s32 32, 32
      %86 = vsyncadd [#allocation11], %s85
      %s88 = sshll.u32 [#allocation10], 4
      %s89 = int_to_ptr.vmem [resolvable:$true] %s88
      %91 = dma.hbm_to_vmem [thread:$0]  %s6, 32, %s89, [#allocation11]
    $region29: #{cifarnet_fused_forward.1} parent=1 // pred_fallthru
      _
    // Predicated region
    $region30: #{cifarnet_fused_forward.1} parent=1 // pred_check
      _
    $region31: #{cifarnet_fused_forward.1} parent=1 // pred_check_branch
      %93 = sbr.rel (0) target = $region33
    $region32: #{cifarnet_fused_forward.1} parent=1 // pred_region
      %s95 = ssub.s32 4096, 4096
      %96 = vsyncadd [#allocation11], %s95
      %s97 = sshll.u32 [#allocation12], 4
      %s98 = int_to_ptr.vmem [resolvable:$true] %s97
      %103 = dma.hbm_to_vmem [thread:$0]  %s7, 4096, %s98, [#allocation11], 128, 128, 8
    $region33: #{cifarnet_fused_forward.1} parent=1 // pred_fallthru
      _
    // Predicated region
    $region34: #{cifarnet_fused_forward.1} parent=1 // pred_check
      _
    $region35: #{cifarnet_fused_forward.1} parent=1 // pred_check_branch
      %105 = sbr.rel (0) target = $region37
    $region36: #{cifarnet_fused_forward.1} parent=1 // pred_region
      %s107 = ssub.s32 16, 16
      %108 = vsyncadd [#allocation14], %s107
      %s110 = sshll.u32 [#allocation13], 4
      %s111 = int_to_ptr.vmem [resolvable:$true] %s110
      %113 = dma.hbm_to_vmem [thread:$0]  %s8, 16, %s111, [#allocation14]
    $region37: #{cifarnet_fused_forward.1} parent=1 // pred_fallthru
      _
    // Predicated region
    $region38: #{cifarnet_fused_forward.1} parent=1 // pred_check
      _
    $region39: #{cifarnet_fused_forward.1} parent=1 // pred_check_branch
      %115 = sbr.rel (0) target = $region41
    $region40: #{cifarnet_fused_forward.1} parent=1 // pred_region
      _
    $region41: #{cifarnet_fused_forward.1} parent=1 // pred_fallthru
      _
    // Predicated region
    $region42: #{cifarnet_fused_forward.1} parent=1 // pred_check
      _
    $region43: #{cifarnet_fused_forward.1} parent=1 // pred_check_branch
      %117 = sbr.rel (0) target = $region45
    $region44: #{cifarnet_fused_forward.1} parent=1 // pred_region
      %s119 = ssub.s32 16, 16
      %120 = vsyncadd [#allocation14], %s119
      %s122 = sshll.u32 [#allocation15], 4
      %s123 = int_to_ptr.vmem [resolvable:$true] %s122
      %125 = dma.hbm_to_vmem [thread:$0]  %s10, 16, %s123, [#allocation14]
    $region45: #{cifarnet_fused_forward.1} parent=1 // pred_fallthru
      _
    // Predicated region
    $region46: #{cifarnet_fused_forward.1} parent=1 // pred_check
      _
    $region47: #{cifarnet_fused_forward.1} parent=1 // pred_check_branch
      %127 = sbr.rel (0) target = $region49
    $region48: #{cifarnet_fused_forward.1} parent=1 // pred_region
      %s129 = ssub.s32 1024, 1024
      %130 = vsyncadd [#allocation17], %s129
      %s131 = sshll.u32 [#allocation16], 4
      %s132 = int_to_ptr.vmem [resolvable:$true] %s131
      %137 = dma.hbm_to_vmem [thread:$0]  %s11, 1024, %s132, [#allocation17], 128, 128, 8
    $region49: #{cifarnet_fused_forward.1} parent=1 // pred_fallthru
      _
    // Predicated region
    $region50: #{cifarnet_fused_forward.1} parent=1 // pred_check
      _
    $region51: #{cifarnet_fused_forward.1} parent=1 // pred_check_branch
      %139 = sbr.rel (0) target = $region53
    $region52: #{cifarnet_fused_forward.1} parent=1 // pred_region
      %s141 = ssub.s32 16, 16
      %142 = vsyncadd [#allocation17], %s141
      %s144 = sshll.u32 [#allocation18], 4
      %s145 = int_to_ptr.vmem [resolvable:$true] %s144
      %147 = dma.hbm_to_vmem [thread:$0]  %s12, 16, %s145, [#allocation17]
    $region53: #{cifarnet_fused_forward.1} parent=1 // pred_fallthru
      _
    // Predicated region
    $region54: #{cifarnet_fused_forward.1} parent=1 // pred_check
      _
    $region55: #{cifarnet_fused_forward.1} parent=1 // pred_check_branch
      %149 = sbr.rel (0) target = $region57
    $region56: #{cifarnet_fused_forward.1} parent=1 // pred_region
      %150 = dma.done [#allocation3], 98304
    $region57: #{cifarnet_fused_forward.1} parent=1 // pred_fallthru
      _
    // Predicated region
    $region58: #{cifarnet_fused_forward.1} parent=1 // pred_check
      _
    $region59: #{cifarnet_fused_forward.1} parent=1 // pred_check_branch
      %152 = sbr.rel (0) target = $region61
    $region60: #{cifarnet_fused_forward.1} parent=1 // pred_region
      %153 = dma.done [#allocation5], 128
    $region61: #{cifarnet_fused_forward.1} parent=1 // pred_fallthru
      _
    // Predicated region
    $region62: #{cifarnet_fused_forward.1} parent=1 // pred_check
      _
    $region63: #{cifarnet_fused_forward.1} parent=1 // pred_check_branch
      %155 = sbr.rel (0) target = $region65
    $region64: #{cifarnet_fused_forward.1} parent=1 // pred_region
      %156 = dma.done [#allocation5], 65536
    $region65: #{cifarnet_fused_forward.1} parent=1 // pred_fallthru
      _
    // Predicated region
    $region66: #{cifarnet_fused_forward.1} parent=1 // pred_check
      _
    $region67: #{cifarnet_fused_forward.1} parent=1 // pred_check_branch
      %158 = sbr.rel (0) target = $region69
    $region68: #{cifarnet_fused_forward.1} parent=1 // pred_region
      %159 = dma.done [#allocation8], 64
    $region69: #{cifarnet_fused_forward.1} parent=1 // pred_fallthru
      _
    // Predicated region
    $region70: #{cifarnet_fused_forward.1} parent=1 // pred_check
      _
    $region71: #{cifarnet_fused_forward.1} parent=1 // pred_check_branch
      %161 = sbr.rel (0) target = $region73
    $region72: #{cifarnet_fused_forward.1} parent=1 // pred_region
      %162 = dma.done [#allocation8], 16384
    $region73: #{cifarnet_fused_forward.1} parent=1 // pred_fallthru
      _
    // Predicated region
    $region74: #{cifarnet_fused_forward.1} parent=1 // pred_check
      _
    $region75: #{cifarnet_fused_forward.1} parent=1 // pred_check_branch
      %164 = sbr.rel (0) target = $region77
    $region76: #{cifarnet_fused_forward.1} parent=1 // pred_region
      %165 = dma.done [#allocation11], 32
    $region77: #{cifarnet_fused_forward.1} parent=1 // pred_fallthru
      _
    // Predicated region
    $region78: #{cifarnet_fused_forward.1} parent=1 // pred_check
      _
    $region79: #{cifarnet_fused_forward.1} parent=1 // pred_check_branch
      %167 = sbr.rel (0) target = $region81
    $region80: #{cifarnet_fused_forward.1} parent=1 // pred_region
      %168 = dma.done [#allocation11], 4096
    $region81: #{cifarnet_fused_forward.1} parent=1 // pred_fallthru
      _
    // Predicated region
    $region82: #{cifarnet_fused_forward.1} parent=1 // pred_check
      _
    $region83: #{cifarnet_fused_forward.1} parent=1 // pred_check_branch
      %170 = sbr.rel (0) target = $region85
    $region84: #{cifarnet_fused_forward.1} parent=1 // pred_region
      %171 = dma.done [#allocation14], 16
    $region85: #{cifarnet_fused_forward.1} parent=1 // pred_fallthru
      _
    // Predicated region
    $region86: #{cifarnet_fused_forward.1} parent=1 // pred_check
      _
    $region87: #{cifarnet_fused_forward.1} parent=1 // pred_check_branch
      %173 = sbr.rel (0) target = $region89
    $region88: #{cifarnet_fused_forward.1} parent=1 // pred_region
      %174 = dma.done [#allocation14], 16
    $region89: #{cifarnet_fused_forward.1} parent=1 // pred_fallthru
      _
    // Predicated region
    $region90: #{cifarnet_fused_forward.1} parent=1 // pred_check
      _
    $region91: #{cifarnet_fused_forward.1} parent=1 // pred_check_branch
      %176 = sbr.rel (0) target = $region93
    $region92: #{cifarnet_fused_forward.1} parent=1 // pred_region
      %177 = dma.done [#allocation17], 1024
    $region93: #{cifarnet_fused_forward.1} parent=1 // pred_fallthru
      _
    // Predicated region
    $region94: #{cifarnet_fused_forward.1} parent=1 // pred_check
      _
    $region95: #{cifarnet_fused_forward.1} parent=1 // pred_check_branch
      %179 = sbr.rel (0) target = $region97
    $region96: #{cifarnet_fused_forward.1} parent=1 // pred_region
      %180 = dma.done [#allocation17], 16
    $region97: #{cifarnet_fused_forward.1} parent=1 // pred_fallthru
      _
    %v181 = vld [vmem:[%s0] sm:$0xff]
    %v182 = vld [vmem:[%s0 + $0x8] sm:$0xff]
    %v183 = vld [vmem:[%s0 + $0x10] sm:$0xff]
    %v184 = vld [vmem:[%s0 + $0x18] sm:$0xff]
    %v185 = vld [vmem:[%s0 + $0x20] sm:$0xff]
    %v186 = vld [vmem:[%s0 + $0x28] sm:$0xff]
    %v187 = vld [vmem:[#allocation2] sm:$0xff]
    %v188 = vld [vmem:[#allocation2 + $0x8] sm:$0xff]
    %v189 = vld [vmem:[#allocation2 + $0x10] sm:$0xff]
    %v190 = vld [vmem:[#allocation2 + $0x18] sm:$0xff]
    %v191 = vld [vmem:[#allocation2 + $0x20] sm:$0xff]
    %v192 = vld [vmem:[#allocation2 + $0x28] sm:$0xff]
    %v193 = vld [vmem:[#allocation2 + $0x30] sm:$0xff]
    %v194 = vld [vmem:[#allocation2 + $0x38] sm:$0xff]
    %v195 = vld [vmem:[#allocation2 + $0x40] sm:$0xff]
    %v196 = vld [vmem:[#allocation2 + $0x48] sm:$0xff]
    %v197 = vld [vmem:[#allocation2 + $0x50] sm:$0xff]
    %v198 = vld [vmem:[#allocation2 + $0x58] sm:$0xff]
    %v199 = vld [vmem:[#allocation2 + $0x60] sm:$0xff]
    %v200 = vld [vmem:[#allocation2 + $0x68] sm:$0xff]
    %v201 = vld [vmem:[#allocation2 + $0x70] sm:$0xff]
    %v202 = vld [vmem:[#allocation2 + $0x78] sm:$0xff]
    %v203 = vld [vmem:[#allocation2 + $0x80] sm:$0xff]
    %v204 = vld [vmem:[#allocation2 + $0x88] sm:$0xff]
    %v205 = vld [vmem:[#allocation2 + $0x90] sm:$0xff]
    %v206 = vld [vmem:[#allocation2 + $0x98] sm:$0xff]
    %v207 = vld [vmem:[#allocation2 + $0xa0] sm:$0xff]
    %v208 = vld [vmem:[#allocation2 + $0xa8] sm:$0xff]
    %v209 = vld [vmem:[#allocation2 + $0xb0] sm:$0xff]
    %v210 = vld [vmem:[#allocation2 + $0xb8] sm:$0xff]
    %v211 = vld [vmem:[#allocation2 + $0xc0] sm:$0xff]
    %v212 = vld [vmem:[#allocation2 + $0xc8] sm:$0xff]
    %v213 = vld [vmem:[#allocation2 + $0xd0] sm:$0xff]
    %v214 = vld [vmem:[#allocation2 + $0xd8] sm:$0xff]
    %v215 = vld [vmem:[#allocation2 + $0xe0] sm:$0xff]
    %v216 = vld [vmem:[#allocation2 + $0xe8] sm:$0xff]
    %v217 = vld [vmem:[#allocation2 + $0xf0] sm:$0xff]
    %v218 = vld [vmem:[#allocation2 + $0xf8] sm:$0xff]
    %v219 = vld [vmem:[#allocation2 + $0x100] sm:$0xff]
    %v220 = vld [vmem:[#allocation2 + $0x108] sm:$0xff]
    %v221 = vld [vmem:[#allocation2 + $0x110] sm:$0xff]
    %v222 = vld [vmem:[#allocation2 + $0x118] sm:$0xff]
    %v223 = vld [vmem:[#allocation2 + $0x120] sm:$0xff]
    %v224 = vld [vmem:[#allocation2 + $0x128] sm:$0xff]
    %v225 = vld [vmem:[#allocation2 + $0x130] sm:$0xff]
    %v226 = vld [vmem:[#allocation2 + $0x138] sm:$0xff]
    %v227 = vld [vmem:[#allocation2 + $0x140] sm:$0xff]
    %v228 = vld [vmem:[#allocation2 + $0x148] sm:$0xff]
    %v229 = vld [vmem:[#allocation2 + $0x150] sm:$0xff]
    %v230 = vld [vmem:[#allocation2 + $0x158] sm:$0xff]
    %v231 = vld [vmem:[#allocation2 + $0x160] sm:$0xff]
    %v232 = vld [vmem:[#allocation2 + $0x168] sm:$0xff]
    %v233 = vld [vmem:[#allocation2 + $0x170] sm:$0xff]
    %v234 = vld [vmem:[#allocation2 + $0x178] sm:$0xff]
    %v235 = vld [vmem:[#allocation2 + $0x180] sm:$0xff]
    %v236 = vld [vmem:[#allocation2 + $0x188] sm:$0xff]
    %v237 = vld [vmem:[#allocation2 + $0x190] sm:$0xff]
    %v238 = vld [vmem:[#allocation2 + $0x198] sm:$0xff]
    %v239 = vld [vmem:[#allocation2 + $0x1a0] sm:$0xff]
    %v240 = vld [vmem:[#allocation2 + $0x1a8] sm:$0xff]
    %v241 = vld [vmem:[#allocation2 + $0x1b0] sm:$0xff]
    %v242 = vld [vmem:[#allocation2 + $0x1b8] sm:$0xff]
    %v243 = vld [vmem:[#allocation2 + $0x1c0] sm:$0xff]
    %v244 = vld [vmem:[#allocation2 + $0x1c8] sm:$0xff]
    %v245 = vld [vmem:[#allocation2 + $0x1d0] sm:$0xff]
    %v246 = vld [vmem:[#allocation2 + $0x1d8] sm:$0xff]
    %v247 = vld [vmem:[#allocation2 + $0x1e0] sm:$0xff]
    %v248 = vld [vmem:[#allocation2 + $0x1e8] sm:$0xff]
    %v249 = vld [vmem:[#allocation2 + $0x1f0] sm:$0xff]
    %v250 = vld [vmem:[#allocation2 + $0x1f8] sm:$0xff]
    %v251 = vld [vmem:[#allocation2 + $0x200] sm:$0xff]
    %v252 = vld [vmem:[#allocation2 + $0x208] sm:$0xff]
    %v253 = vld [vmem:[#allocation2 + $0x210] sm:$0xff]
    %v254 = vld [vmem:[#allocation2 + $0x218] sm:$0xff]
    %v255 = vld [vmem:[#allocation2 + $0x220] sm:$0xff]
    %v256 = vld [vmem:[#allocation2 + $0x228] sm:$0xff]
    %v257 = vld [vmem:[#allocation2 + $0x230] sm:$0xff]
    %v258 = vld [vmem:[#allocation2 + $0x238] sm:$0xff]
    %v259 = vld [vmem:[#allocation2 + $0x240] sm:$0xff]
    %v260 = vld [vmem:[#allocation2 + $0x248] sm:$0xff]
    %v261 = vld [vmem:[#allocation2 + $0x250] sm:$0xff]
    %v262 = vld [vmem:[#allocation2 + $0x258] sm:$0xff]
    %v263 = vld [vmem:[#allocation2 + $0x260] sm:$0xff]
    %v264 = vld [vmem:[#allocation2 + $0x268] sm:$0xff]
    %v265 = vld [vmem:[#allocation2 + $0x270] sm:$0xff]
    %v266 = vld [vmem:[#allocation2 + $0x278] sm:$0xff]
    %v267 = vld [vmem:[#allocation2 + $0x280] sm:$0xff]
    %v268 = vld [vmem:[#allocation2 + $0x288] sm:$0xff]
    %v269 = vld [vmem:[#allocation2 + $0x290] sm:$0xff]
    %v270 = vld [vmem:[#allocation2 + $0x298] sm:$0xff]
    %v271 = vld [vmem:[#allocation2 + $0x2a0] sm:$0xff]
    %v272 = vld [vmem:[#allocation2 + $0x2a8] sm:$0xff]
    %v273 = vld [vmem:[#allocation2 + $0x2b0] sm:$0xff]
    %v274 = vld [vmem:[#allocation2 + $0x2b8] sm:$0xff]
    %v275 = vld [vmem:[#allocation2 + $0x2c0] sm:$0xff]
    %v276 = vld [vmem:[#allocation2 + $0x2c8] sm:$0xff]
    %v277 = vld [vmem:[#allocation2 + $0x2d0] sm:$0xff]
    %v278 = vld [vmem:[#allocation2 + $0x2d8] sm:$0xff]
    %v279 = vld [vmem:[#allocation2 + $0x2e0] sm:$0xff]
    %v280 = vld [vmem:[#allocation2 + $0x2e8] sm:$0xff]
    %v281 = vld [vmem:[#allocation2 + $0x2f0] sm:$0xff]
    %v282 = vld [vmem:[#allocation2 + $0x2f8] sm:$0xff]
    %v283 = vld [vmem:[#allocation2 + $0x300] sm:$0xff]
    %v284 = vld [vmem:[#allocation2 + $0x308] sm:$0xff]
    %v285 = vld [vmem:[#allocation2 + $0x310] sm:$0xff]
    %v286 = vld [vmem:[#allocation2 + $0x318] sm:$0xff]
    %v287 = vld [vmem:[#allocation2 + $0x320] sm:$0xff]
    %v288 = vld [vmem:[#allocation2 + $0x328] sm:$0xff]
    %v289 = vld [vmem:[#allocation2 + $0x330] sm:$0xff]
    %v290 = vld [vmem:[#allocation2 + $0x338] sm:$0xff]
    %v291 = vld [vmem:[#allocation2 + $0x340] sm:$0xff]
    %v292 = vld [vmem:[#allocation2 + $0x348] sm:$0xff]
    %v293 = vld [vmem:[#allocation2 + $0x350] sm:$0xff]
    %v294 = vld [vmem:[#allocation2 + $0x358] sm:$0xff]
    %v295 = vld [vmem:[#allocation2 + $0x360] sm:$0xff]
    %v296 = vld [vmem:[#allocation2 + $0x368] sm:$0xff]
    %v297 = vld [vmem:[#allocation2 + $0x370] sm:$0xff]
    %v298 = vld [vmem:[#allocation2 + $0x378] sm:$0xff]
    %v299 = vld [vmem:[#allocation2 + $0x380] sm:$0xff]
    %v300 = vld [vmem:[#allocation2 + $0x388] sm:$0xff]
    %v301 = vld [vmem:[#allocation2 + $0x390] sm:$0xff]
    %v302 = vld [vmem:[#allocation2 + $0x398] sm:$0xff]
    %v303 = vld [vmem:[#allocation2 + $0x3a0] sm:$0xff]
    %v304 = vld [vmem:[#allocation2 + $0x3a8] sm:$0xff]
    %v305 = vld [vmem:[#allocation2 + $0x3b0] sm:$0xff]
    %v306 = vld [vmem:[#allocation2 + $0x3b8] sm:$0xff]
    %v307 = vld [vmem:[#allocation2 + $0x3c0] sm:$0xff]
    %v308 = vld [vmem:[#allocation2 + $0x3c8] sm:$0xff]
    %v309 = vld [vmem:[#allocation2 + $0x3d0] sm:$0xff]
    %v310 = vld [vmem:[#allocation2 + $0x3d8] sm:$0xff]
    %v311 = vld [vmem:[#allocation2 + $0x3e0] sm:$0xff]
    %v312 = vld [vmem:[#allocation2 + $0x3e8] sm:$0xff]
    %v313 = vld [vmem:[#allocation2 + $0x3f0] sm:$0xff]
    %v314 = vld [vmem:[#allocation2 + $0x3f8] sm:$0xff]
    %v315 = vld [vmem:[#allocation2 + $0x400] sm:$0xff]
    %v316 = vld [vmem:[#allocation2 + $0x408] sm:$0xff]
    %v317 = vld [vmem:[#allocation2 + $0x410] sm:$0xff]
    %v318 = vld [vmem:[#allocation2 + $0x418] sm:$0xff]
    %v319 = vld [vmem:[#allocation2 + $0x420] sm:$0xff]
    %v320 = vld [vmem:[#allocation2 + $0x428] sm:$0xff]
    %v321 = vld [vmem:[#allocation2 + $0x430] sm:$0xff]
    %v322 = vld [vmem:[#allocation2 + $0x438] sm:$0xff]
    %v323 = vld [vmem:[#allocation2 + $0x440] sm:$0xff]
    %v324 = vld [vmem:[#allocation2 + $0x448] sm:$0xff]
    %v325 = vld [vmem:[#allocation2 + $0x450] sm:$0xff]
    %v326 = vld [vmem:[#allocation2 + $0x458] sm:$0xff]
    %v327 = vld [vmem:[#allocation2 + $0x460] sm:$0xff]
    %v328 = vld [vmem:[#allocation2 + $0x468] sm:$0xff]
    %v329 = vld [vmem:[#allocation2 + $0x470] sm:$0xff]
    %v330 = vld [vmem:[#allocation2 + $0x478] sm:$0xff]
    %v331 = vld [vmem:[#allocation2 + $0x480] sm:$0xff]
    %v332 = vld [vmem:[#allocation2 + $0x488] sm:$0xff]
    %v333 = vld [vmem:[#allocation2 + $0x490] sm:$0xff]
    %v334 = vld [vmem:[#allocation2 + $0x498] sm:$0xff]
    %v335 = vld [vmem:[#allocation2 + $0x4a0] sm:$0xff]
    %v336 = vld [vmem:[#allocation2 + $0x4a8] sm:$0xff]
    %v337 = vld [vmem:[#allocation2 + $0x4b0] sm:$0xff]
    %v338 = vld [vmem:[#allocation2 + $0x4b8] sm:$0xff]
    %v339 = vld [vmem:[#allocation2 + $0x4c0] sm:$0xff]
    %v340 = vld [vmem:[#allocation2 + $0x4c8] sm:$0xff]
    %v341 = vld [vmem:[#allocation2 + $0x4d0] sm:$0xff]
    %v342 = vld [vmem:[#allocation2 + $0x4d8] sm:$0xff]
    %v343 = vld [vmem:[#allocation2 + $0x4e0] sm:$0xff]
    %v344 = vld [vmem:[#allocation2 + $0x4e8] sm:$0xff]
    %v345 = vld [vmem:[#allocation2 + $0x4f0] sm:$0xff]
    %v346 = vld [vmem:[#allocation2 + $0x4f8] sm:$0xff]
    %v347 = vld [vmem:[#allocation2 + $0x500] sm:$0xff]
    %v348 = vld [vmem:[#allocation2 + $0x508] sm:$0xff]
    %v349 = vld [vmem:[#allocation2 + $0x510] sm:$0xff]
    %v350 = vld [vmem:[#allocation2 + $0x518] sm:$0xff]
    %v351 = vld [vmem:[#allocation2 + $0x520] sm:$0xff]
    %v352 = vld [vmem:[#allocation2 + $0x528] sm:$0xff]
    %v353 = vld [vmem:[#allocation2 + $0x530] sm:$0xff]
    %v354 = vld [vmem:[#allocation2 + $0x538] sm:$0xff]
    %v355 = vld [vmem:[#allocation2 + $0x540] sm:$0xff]
    %v356 = vld [vmem:[#allocation2 + $0x548] sm:$0xff]
    %v357 = vld [vmem:[#allocation2 + $0x550] sm:$0xff]
    %v358 = vld [vmem:[#allocation2 + $0x558] sm:$0xff]
    %v359 = vld [vmem:[#allocation2 + $0x560] sm:$0xff]
    %v360 = vld [vmem:[#allocation2 + $0x568] sm:$0xff]
    %v361 = vld [vmem:[#allocation2 + $0x570] sm:$0xff]
    %v362 = vld [vmem:[#allocation2 + $0x578] sm:$0xff]
    %v363 = vld [vmem:[#allocation2 + $0x580] sm:$0xff]
    %v364 = vld [vmem:[#allocation2 + $0x588] sm:$0xff]
    %v365 = vld [vmem:[#allocation2 + $0x590] sm:$0xff]
    %v366 = vld [vmem:[#allocation2 + $0x598] sm:$0xff]
    %v367 = vld [vmem:[#allocation2 + $0x5a0] sm:$0xff]
    %v368 = vld [vmem:[#allocation2 + $0x5a8] sm:$0xff]
    %v369 = vld [vmem:[#allocation2 + $0x5b0] sm:$0xff]
    %v370 = vld [vmem:[#allocation2 + $0x5b8] sm:$0xff]
    %v371 = vld [vmem:[#allocation2 + $0x5c0] sm:$0xff]
    %v372 = vld [vmem:[#allocation2 + $0x5c8] sm:$0xff]
    %v373 = vld [vmem:[#allocation2 + $0x5d0] sm:$0xff]
    %v374 = vld [vmem:[#allocation2 + $0x5d8] sm:$0xff]
    %v375 = vld [vmem:[#allocation2 + $0x5e0] sm:$0xff]
    %v376 = vld [vmem:[#allocation2 + $0x5e8] sm:$0xff]
    %v377 = vld [vmem:[#allocation2 + $0x5f0] sm:$0xff]
    %v378 = vld [vmem:[#allocation2 + $0x5f8] sm:$0xff]
    %v379 = vld [vmem:[#allocation2 + $0x600] sm:$0xff]
    %v380 = vld [vmem:[#allocation2 + $0x608] sm:$0xff]
    %v381 = vld [vmem:[#allocation2 + $0x610] sm:$0xff]
    %v382 = vld [vmem:[#allocation2 + $0x618] sm:$0xff]
    %v383 = vld [vmem:[#allocation2 + $0x620] sm:$0xff]
    %v384 = vld [vmem:[#allocation2 + $0x628] sm:$0xff]
    %v385 = vld [vmem:[#allocation2 + $0x630] sm:$0xff]
    %v386 = vld [vmem:[#allocation2 + $0x638] sm:$0xff]
    %v387 = vld [vmem:[#allocation2 + $0x640] sm:$0xff]
    %v388 = vld [vmem:[#allocation2 + $0x648] sm:$0xff]
    %v389 = vld [vmem:[#allocation2 + $0x650] sm:$0xff]
    %v390 = vld [vmem:[#allocation2 + $0x658] sm:$0xff]
    %v391 = vld [vmem:[#allocation2 + $0x660] sm:$0xff]
    %v392 = vld [vmem:[#allocation2 + $0x668] sm:$0xff]
    %v393 = vld [vmem:[#allocation2 + $0x670] sm:$0xff]
    %v394 = vld [vmem:[#allocation2 + $0x678] sm:$0xff]
    %v395 = vld [vmem:[#allocation2 + $0x680] sm:$0xff]
    %v396 = vld [vmem:[#allocation2 + $0x688] sm:$0xff]
    %v397 = vld [vmem:[#allocation2 + $0x690] sm:$0xff]
    %v398 = vld [vmem:[#allocation2 + $0x698] sm:$0xff]
    %v399 = vld [vmem:[#allocation2 + $0x6a0] sm:$0xff]
    %v400 = vld [vmem:[#allocation2 + $0x6a8] sm:$0xff]
    %v401 = vld [vmem:[#allocation2 + $0x6b0] sm:$0xff]
    %v402 = vld [vmem:[#allocation2 + $0x6b8] sm:$0xff]
    %v403 = vld [vmem:[#allocation2 + $0x6c0] sm:$0xff]
    %v404 = vld [vmem:[#allocation2 + $0x6c8] sm:$0xff]
    %v405 = vld [vmem:[#allocation2 + $0x6d0] sm:$0xff]
    %v406 = vld [vmem:[#allocation2 + $0x6d8] sm:$0xff]
    %v407 = vld [vmem:[#allocation2 + $0x6e0] sm:$0xff]
    %v408 = vld [vmem:[#allocation2 + $0x6e8] sm:$0xff]
    %v409 = vld [vmem:[#allocation2 + $0x6f0] sm:$0xff]
    %v410 = vld [vmem:[#allocation2 + $0x6f8] sm:$0xff]
    %v411 = vld [vmem:[#allocation2 + $0x700] sm:$0xff]
    %v412 = vld [vmem:[#allocation2 + $0x708] sm:$0xff]
    %v413 = vld [vmem:[#allocation2 + $0x710] sm:$0xff]
    %v414 = vld [vmem:[#allocation2 + $0x718] sm:$0xff]
    %v415 = vld [vmem:[#allocation2 + $0x720] sm:$0xff]
    %v416 = vld [vmem:[#allocation2 + $0x728] sm:$0xff]
    %v417 = vld [vmem:[#allocation2 + $0x730] sm:$0xff]
    %v418 = vld [vmem:[#allocation2 + $0x738] sm:$0xff]
    %v419 = vld [vmem:[#allocation2 + $0x740] sm:$0xff]
    %v420 = vld [vmem:[#allocation2 + $0x748] sm:$0xff]
    %v421 = vld [vmem:[#allocation2 + $0x750] sm:$0xff]
    %v422 = vld [vmem:[#allocation2 + $0x758] sm:$0xff]
    %v423 = vld [vmem:[#allocation2 + $0x760] sm:$0xff]
    %v424 = vld [vmem:[#allocation2 + $0x768] sm:$0xff]
    %v425 = vld [vmem:[#allocation2 + $0x770] sm:$0xff]
    %v426 = vld [vmem:[#allocation2 + $0x778] sm:$0xff]
    %v427 = vld [vmem:[#allocation2 + $0x780] sm:$0xff]
    %v428 = vld [vmem:[#allocation2 + $0x788] sm:$0xff]
    %v429 = vld [vmem:[#allocation2 + $0x790] sm:$0xff]
    %v430 = vld [vmem:[#allocation2 + $0x798] sm:$0xff]
    %v431 = vld [vmem:[#allocation2 + $0x7a0] sm:$0xff]
    %v432 = vld [vmem:[#allocation2 + $0x7a8] sm:$0xff]
    %v433 = vld [vmem:[#allocation2 + $0x7b0] sm:$0xff]
    %v434 = vld [vmem:[#allocation2 + $0x7b8] sm:$0xff]
    %v435 = vld [vmem:[#allocation2 + $0x7c0] sm:$0xff]
    %v436 = vld [vmem:[#allocation2 + $0x7c8] sm:$0xff]
    %v437 = vld [vmem:[#allocation2 + $0x7d0] sm:$0xff]
    %v438 = vld [vmem:[#allocation2 + $0x7d8] sm:$0xff]
    %v439 = vld [vmem:[#allocation2 + $0x7e0] sm:$0xff]
    %v440 = vld [vmem:[#allocation2 + $0x7e8] sm:$0xff]
    %v441 = vld [vmem:[#allocation2 + $0x7f0] sm:$0xff]
    %v442 = vld [vmem:[#allocation2 + $0x7f8] sm:$0xff]
    %v443 = vld [vmem:[#allocation2 + $0x800] sm:$0xff]
    %v444 = vld [vmem:[#allocation2 + $0x808] sm:$0xff]
    %v445 = vld [vmem:[#allocation2 + $0x810] sm:$0xff]
    %v446 = vld [vmem:[#allocation2 + $0x818] sm:$0xff]
    %v447 = vld [vmem:[#allocation2 + $0x820] sm:$0xff]
    %v448 = vld [vmem:[#allocation2 + $0x828] sm:$0xff]
    %v449 = vld [vmem:[#allocation2 + $0x830] sm:$0xff]
    %v450 = vld [vmem:[#allocation2 + $0x838] sm:$0xff]
    %v451 = vld [vmem:[#allocation2 + $0x840] sm:$0xff]
    %v452 = vld [vmem:[#allocation2 + $0x848] sm:$0xff]
    %v453 = vld [vmem:[#allocation2 + $0x850] sm:$0xff]
    %v454 = vld [vmem:[#allocation2 + $0x858] sm:$0xff]
    %v455 = vld [vmem:[#allocation2 + $0x860] sm:$0xff]
    %v456 = vld [vmem:[#allocation2 + $0x868] sm:$0xff]
    %v457 = vld [vmem:[#allocation2 + $0x870] sm:$0xff]
    %v458 = vld [vmem:[#allocation2 + $0x878] sm:$0xff]
    %v459 = vld [vmem:[#allocation2 + $0x880] sm:$0xff]
    %v460 = vld [vmem:[#allocation2 + $0x888] sm:$0xff]
    %v461 = vld [vmem:[#allocation2 + $0x890] sm:$0xff]
    %v462 = vld [vmem:[#allocation2 + $0x898] sm:$0xff]
    %v463 = vld [vmem:[#allocation2 + $0x8a0] sm:$0xff]
    %v464 = vld [vmem:[#allocation2 + $0x8a8] sm:$0xff]
    %v465 = vld [vmem:[#allocation2 + $0x8b0] sm:$0xff]
    %v466 = vld [vmem:[#allocation2 + $0x8b8] sm:$0xff]
    %v467 = vld [vmem:[#allocation2 + $0x8c0] sm:$0xff]
    %v468 = vld [vmem:[#allocation2 + $0x8c8] sm:$0xff]
    %v469 = vld [vmem:[#allocation2 + $0x8d0] sm:$0xff]
    %v470 = vld [vmem:[#allocation2 + $0x8d8] sm:$0xff]
    %v471 = vld [vmem:[#allocation2 + $0x8e0] sm:$0xff]
    %v472 = vld [vmem:[#allocation2 + $0x8e8] sm:$0xff]
    %v473 = vld [vmem:[#allocation2 + $0x8f0] sm:$0xff]
    %v474 = vld [vmem:[#allocation2 + $0x8f8] sm:$0xff]
    %v475 = vld [vmem:[#allocation2 + $0x900] sm:$0xff]
    %v476 = vld [vmem:[#allocation2 + $0x908] sm:$0xff]
    %v477 = vld [vmem:[#allocation2 + $0x910] sm:$0xff]
    %v478 = vld [vmem:[#allocation2 + $0x918] sm:$0xff]
    %v479 = vld [vmem:[#allocation2 + $0x920] sm:$0xff]
    %v480 = vld [vmem:[#allocation2 + $0x928] sm:$0xff]
    %v481 = vld [vmem:[#allocation2 + $0x930] sm:$0xff]
    %v482 = vld [vmem:[#allocation2 + $0x938] sm:$0xff]
    %v483 = vld [vmem:[#allocation2 + $0x940] sm:$0xff]
    %v484 = vld [vmem:[#allocation2 + $0x948] sm:$0xff]
    %v485 = vld [vmem:[#allocation2 + $0x950] sm:$0xff]
    %v486 = vld [vmem:[#allocation2 + $0x958] sm:$0xff]
    %v487 = vld [vmem:[#allocation2 + $0x960] sm:$0xff]
    %v488 = vld [vmem:[#allocation2 + $0x968] sm:$0xff]
    %v489 = vld [vmem:[#allocation2 + $0x970] sm:$0xff]
    %v490 = vld [vmem:[#allocation2 + $0x978] sm:$0xff]
    %v491 = vld [vmem:[#allocation2 + $0x980] sm:$0xff]
    %v492 = vld [vmem:[#allocation2 + $0x988] sm:$0xff]
    %v493 = vld [vmem:[#allocation2 + $0x990] sm:$0xff]
    %v494 = vld [vmem:[#allocation2 + $0x998] sm:$0xff]
    %v495 = vld [vmem:[#allocation2 + $0x9a0] sm:$0xff]
    %v496 = vld [vmem:[#allocation2 + $0x9a8] sm:$0xff]
    %v497 = vld [vmem:[#allocation2 + $0x9b0] sm:$0xff]
    %v498 = vld [vmem:[#allocation2 + $0x9b8] sm:$0xff]
    %v499 = vld [vmem:[#allocation2 + $0x9c0] sm:$0xff]
    %v500 = vld [vmem:[#allocation2 + $0x9c8] sm:$0xff]
    %v501 = vld [vmem:[#allocation2 + $0x9d0] sm:$0xff]
    %v502 = vld [vmem:[#allocation2 + $0x9d8] sm:$0xff]
    %v503 = vld [vmem:[#allocation2 + $0x9e0] sm:$0xff]
    %v504 = vld [vmem:[#allocation2 + $0x9e8] sm:$0xff]
    %v505 = vld [vmem:[#allocation2 + $0x9f0] sm:$0xff]
    %v506 = vld [vmem:[#allocation2 + $0x9f8] sm:$0xff]
    %v507 = vld [vmem:[#allocation2 + $0xa00] sm:$0xff]
    %v508 = vld [vmem:[#allocation2 + $0xa08] sm:$0xff]
    %v509 = vld [vmem:[#allocation2 + $0xa10] sm:$0xff]
    %v510 = vld [vmem:[#allocation2 + $0xa18] sm:$0xff]
    %v511 = vld [vmem:[#allocation2 + $0xa20] sm:$0xff]
    %v512 = vld [vmem:[#allocation2 + $0xa28] sm:$0xff]
    %v513 = vld [vmem:[#allocation2 + $0xa30] sm:$0xff]
    %v514 = vld [vmem:[#allocation2 + $0xa38] sm:$0xff]
    %v515 = vld [vmem:[#allocation2 + $0xa40] sm:$0xff]
    %v516 = vld [vmem:[#allocation2 + $0xa48] sm:$0xff]
    %v517 = vld [vmem:[#allocation2 + $0xa50] sm:$0xff]
    %v518 = vld [vmem:[#allocation2 + $0xa58] sm:$0xff]
    %v519 = vld [vmem:[#allocation2 + $0xa60] sm:$0xff]
    %v520 = vld [vmem:[#allocation2 + $0xa68] sm:$0xff]
    %v521 = vld [vmem:[#allocation2 + $0xa70] sm:$0xff]
    %v522 = vld [vmem:[#allocation2 + $0xa78] sm:$0xff]
    %v523 = vld [vmem:[#allocation2 + $0xa80] sm:$0xff]
    %v524 = vld [vmem:[#allocation2 + $0xa88] sm:$0xff]
    %v525 = vld [vmem:[#allocation2 + $0xa90] sm:$0xff]
    %v526 = vld [vmem:[#allocation2 + $0xa98] sm:$0xff]
    %v527 = vld [vmem:[#allocation2 + $0xaa0] sm:$0xff]
    %v528 = vld [vmem:[#allocation2 + $0xaa8] sm:$0xff]
    %v529 = vld [vmem:[#allocation2 + $0xab0] sm:$0xff]
    %v530 = vld [vmem:[#allocation2 + $0xab8] sm:$0xff]
    %v531 = vld [vmem:[#allocation2 + $0xac0] sm:$0xff]
    %v532 = vld [vmem:[#allocation2 + $0xac8] sm:$0xff]
    %v533 = vld [vmem:[#allocation2 + $0xad0] sm:$0xff]
    %v534 = vld [vmem:[#allocation2 + $0xad8] sm:$0xff]
    %v535 = vld [vmem:[#allocation2 + $0xae0] sm:$0xff]
    %v536 = vld [vmem:[#allocation2 + $0xae8] sm:$0xff]
    %v537 = vld [vmem:[#allocation2 + $0xaf0] sm:$0xff]
    %v538 = vld [vmem:[#allocation2 + $0xaf8] sm:$0xff]
    %v539 = vld [vmem:[#allocation2 + $0xb00] sm:$0xff]
    %v540 = vld [vmem:[#allocation2 + $0xb08] sm:$0xff]
    %v541 = vld [vmem:[#allocation2 + $0xb10] sm:$0xff]
    %v542 = vld [vmem:[#allocation2 + $0xb18] sm:$0xff]
    %v543 = vld [vmem:[#allocation2 + $0xb20] sm:$0xff]
    %v544 = vld [vmem:[#allocation2 + $0xb28] sm:$0xff]
    %v545 = vld [vmem:[#allocation2 + $0xb30] sm:$0xff]
    %v546 = vld [vmem:[#allocation2 + $0xb38] sm:$0xff]
    %v547 = vld [vmem:[#allocation2 + $0xb40] sm:$0xff]
    %v548 = vld [vmem:[#allocation2 + $0xb48] sm:$0xff]
    %v549 = vld [vmem:[#allocation2 + $0xb50] sm:$0xff]
    %v550 = vld [vmem:[#allocation2 + $0xb58] sm:$0xff]
    %v551 = vld [vmem:[#allocation2 + $0xb60] sm:$0xff]
    %v552 = vld [vmem:[#allocation2 + $0xb68] sm:$0xff]
    %v553 = vld [vmem:[#allocation2 + $0xb70] sm:$0xff]
    %v554 = vld [vmem:[#allocation2 + $0xb78] sm:$0xff]
    %v555 = vld [vmem:[#allocation2 + $0xb80] sm:$0xff]
    %v556 = vld [vmem:[#allocation2 + $0xb88] sm:$0xff]
    %v557 = vld [vmem:[#allocation2 + $0xb90] sm:$0xff]
    %v558 = vld [vmem:[#allocation2 + $0xb98] sm:$0xff]
    %v559 = vld [vmem:[#allocation2 + $0xba0] sm:$0xff]
    %v560 = vld [vmem:[#allocation2 + $0xba8] sm:$0xff]
    %v561 = vld [vmem:[#allocation2 + $0xbb0] sm:$0xff]
    %v562 = vld [vmem:[#allocation2 + $0xbb8] sm:$0xff]
    %v563 = vld [vmem:[#allocation2 + $0xbc0] sm:$0xff]
    %v564 = vld [vmem:[#allocation2 + $0xbc8] sm:$0xff]
    %v565 = vld [vmem:[#allocation2 + $0xbd0] sm:$0xff]
    %v566 = vld [vmem:[#allocation2 + $0xbd8] sm:$0xff]
    %v567 = vld [vmem:[#allocation2 + $0xbe0] sm:$0xff]
    %v568 = vld [vmem:[#allocation2 + $0xbe8] sm:$0xff]
    %v569 = vld [vmem:[#allocation2 + $0xbf0] sm:$0xff]
    %v570 = vld [vmem:[#allocation2 + $0xbf8] sm:$0xff]
    %v571 = vld [vmem:[#allocation2 + $0xc00] sm:$0xff]
    %v572 = vld [vmem:[#allocation2 + $0xc08] sm:$0xff]
    %v573 = vld [vmem:[#allocation2 + $0xc10] sm:$0xff]
    %v574 = vld [vmem:[#allocation2 + $0xc18] sm:$0xff]
    %v575 = vld [vmem:[#allocation2 + $0xc20] sm:$0xff]
    %v576 = vld [vmem:[#allocation2 + $0xc28] sm:$0xff]
    %v577 = vld [vmem:[#allocation2 + $0xc30] sm:$0xff]
    %v578 = vld [vmem:[#allocation2 + $0xc38] sm:$0xff]
    %v579 = vld [vmem:[#allocation2 + $0xc40] sm:$0xff]
    %v580 = vld [vmem:[#allocation2 + $0xc48] sm:$0xff]
    %v581 = vld [vmem:[#allocation2 + $0xc50] sm:$0xff]
    %v582 = vld [vmem:[#allocation2 + $0xc58] sm:$0xff]
    %v583 = vld [vmem:[#allocation2 + $0xc60] sm:$0xff]
    %v584 = vld [vmem:[#allocation2 + $0xc68] sm:$0xff]
    %v585 = vld [vmem:[#allocation2 + $0xc70] sm:$0xff]
    %v586 = vld [vmem:[#allocation2 + $0xc78] sm:$0xff]
    %v587 = vld [vmem:[#allocation2 + $0xc80] sm:$0xff]
    %v588 = vld [vmem:[#allocation2 + $0xc88] sm:$0xff]
    %v589 = vld [vmem:[#allocation2 + $0xc90] sm:$0xff]
    %v590 = vld [vmem:[#allocation2 + $0xc98] sm:$0xff]
    %v591 = vld [vmem:[#allocation2 + $0xca0] sm:$0xff]
    %v592 = vld [vmem:[#allocation2 + $0xca8] sm:$0xff]
    %v593 = vld [vmem:[#allocation2 + $0xcb0] sm:$0xff]
    %v594 = vld [vmem:[#allocation2 + $0xcb8] sm:$0xff]
    %v595 = vld [vmem:[#allocation2 + $0xcc0] sm:$0xff]
    %v596 = vld [vmem:[#allocation2 + $0xcc8] sm:$0xff]
    %v597 = vld [vmem:[#allocation2 + $0xcd0] sm:$0xff]
    %v598 = vld [vmem:[#allocation2 + $0xcd8] sm:$0xff]
    %v599 = vld [vmem:[#allocation2 + $0xce0] sm:$0xff]
    %v600 = vld [vmem:[#allocation2 + $0xce8] sm:$0xff]
    %v601 = vld [vmem:[#allocation2 + $0xcf0] sm:$0xff]
    %v602 = vld [vmem:[#allocation2 + $0xcf8] sm:$0xff]
    %v603 = vld [vmem:[#allocation2 + $0xd00] sm:$0xff]
    %v604 = vld [vmem:[#allocation2 + $0xd08] sm:$0xff]
    %v605 = vld [vmem:[#allocation2 + $0xd10] sm:$0xff]
    %v606 = vld [vmem:[#allocation2 + $0xd18] sm:$0xff]
    %v607 = vld [vmem:[#allocation2 + $0xd20] sm:$0xff]
    %v608 = vld [vmem:[#allocation2 + $0xd28] sm:$0xff]
    %v609 = vld [vmem:[#allocation2 + $0xd30] sm:$0xff]
    %v610 = vld [vmem:[#allocation2 + $0xd38] sm:$0xff]
    %v611 = vld [vmem:[#allocation2 + $0xd40] sm:$0xff]
    %v612 = vld [vmem:[#allocation2 + $0xd48] sm:$0xff]
    %v613 = vld [vmem:[#allocation2 + $0xd50] sm:$0xff]
    %v614 = vld [vmem:[#allocation2 + $0xd58] sm:$0xff]
    %v615 = vld [vmem:[#allocation2 + $0xd60] sm:$0xff]
    %v616 = vld [vmem:[#allocation2 + $0xd68] sm:$0xff]
    %v617 = vld [vmem:[#allocation2 + $0xd70] sm:$0xff]
    %v618 = vld [vmem:[#allocation2 + $0xd78] sm:$0xff]
    %v619 = vld [vmem:[#allocation2 + $0xd80] sm:$0xff]
    %v620 = vld [vmem:[#allocation2 + $0xd88] sm:$0xff]
    %v621 = vld [vmem:[#allocation2 + $0xd90] sm:$0xff]
    %v622 = vld [vmem:[#allocation2 + $0xd98] sm:$0xff]
    %v623 = vld [vmem:[#allocation2 + $0xda0] sm:$0xff]
    %v624 = vld [vmem:[#allocation2 + $0xda8] sm:$0xff]
    %v625 = vld [vmem:[#allocation2 + $0xdb0] sm:$0xff]
    %v626 = vld [vmem:[#allocation2 + $0xdb8] sm:$0xff]
    %v627 = vld [vmem:[#allocation2 + $0xdc0] sm:$0xff]
    %v628 = vld [vmem:[#allocation2 + $0xdc8] sm:$0xff]
    %v629 = vld [vmem:[#allocation2 + $0xdd0] sm:$0xff]
    %v630 = vld [vmem:[#allocation2 + $0xdd8] sm:$0xff]
    %v631 = vld [vmem:[#allocation2 + $0xde0] sm:$0xff]
    %v632 = vld [vmem:[#allocation2 + $0xde8] sm:$0xff]
    %v633 = vld [vmem:[#allocation2 + $0xdf0] sm:$0xff]
    %v634 = vld [vmem:[#allocation2 + $0xdf8] sm:$0xff]
    %v635 = vld [vmem:[#allocation2 + $0xe00] sm:$0xff]
    %v636 = vld [vmem:[#allocation2 + $0xe08] sm:$0xff]
    %v637 = vld [vmem:[#allocation2 + $0xe10] sm:$0xff]
    %v638 = vld [vmem:[#allocation2 + $0xe18] sm:$0xff]
    %v639 = vld [vmem:[#allocation2 + $0xe20] sm:$0xff]
    %v640 = vld [vmem:[#allocation2 + $0xe28] sm:$0xff]
    %v641 = vld [vmem:[#allocation2 + $0xe30] sm:$0xff]
    %v642 = vld [vmem:[#allocation2 + $0xe38] sm:$0xff]
    %v643 = vld [vmem:[#allocation2 + $0xe40] sm:$0xff]
    %v644 = vld [vmem:[#allocation2 + $0xe48] sm:$0xff]
    %v645 = vld [vmem:[#allocation2 + $0xe50] sm:$0xff]
    %v646 = vld [vmem:[#allocation2 + $0xe58] sm:$0xff]
    %v647 = vld [vmem:[#allocation2 + $0xe60] sm:$0xff]
    %v648 = vld [vmem:[#allocation2 + $0xe68] sm:$0xff]
    %v649 = vld [vmem:[#allocation2 + $0xe70] sm:$0xff]
    %v650 = vld [vmem:[#allocation2 + $0xe78] sm:$0xff]
    %v651 = vld [vmem:[#allocation2 + $0xe80] sm:$0xff]
    %v652 = vld [vmem:[#allocation2 + $0xe88] sm:$0xff]
    %v653 = vld [vmem:[#allocation2 + $0xe90] sm:$0xff]
    %v654 = vld [vmem:[#allocation2 + $0xe98] sm:$0xff]
    %v655 = vld [vmem:[#allocation2 + $0xea0] sm:$0xff]
    %v656 = vld [vmem:[#allocation2 + $0xea8] sm:$0xff]
    %v657 = vld [vmem:[#allocation2 + $0xeb0] sm:$0xff]
    %v658 = vld [vmem:[#allocation2 + $0xeb8] sm:$0xff]
    %v659 = vld [vmem:[#allocation2 + $0xec0] sm:$0xff]
    %v660 = vld [vmem:[#allocation2 + $0xec8] sm:$0xff]
    %v661 = vld [vmem:[#allocation2 + $0xed0] sm:$0xff]
    %v662 = vld [vmem:[#allocation2 + $0xed8] sm:$0xff]
    %v663 = vld [vmem:[#allocation2 + $0xee0] sm:$0xff]
    %v664 = vld [vmem:[#allocation2 + $0xee8] sm:$0xff]
    %v665 = vld [vmem:[#allocation2 + $0xef0] sm:$0xff]
    %v666 = vld [vmem:[#allocation2 + $0xef8] sm:$0xff]
    %v667 = vld [vmem:[#allocation2 + $0xf00] sm:$0xff]
    %v668 = vld [vmem:[#allocation2 + $0xf08] sm:$0xff]
    %v669 = vld [vmem:[#allocation2 + $0xf10] sm:$0xff]
    %v670 = vld [vmem:[#allocation2 + $0xf18] sm:$0xff]
    %v671 = vld [vmem:[#allocation2 + $0xf20] sm:$0xff]
    %v672 = vld [vmem:[#allocation2 + $0xf28] sm:$0xff]
    %v673 = vld [vmem:[#allocation2 + $0xf30] sm:$0xff]
    %v674 = vld [vmem:[#allocation2 + $0xf38] sm:$0xff]
    %v675 = vld [vmem:[#allocation2 + $0xf40] sm:$0xff]
    %v676 = vld [vmem:[#allocation2 + $0xf48] sm:$0xff]
    %v677 = vld [vmem:[#allocation2 + $0xf50] sm:$0xff]
    %v678 = vld [vmem:[#allocation2 + $0xf58] sm:$0xff]
    %v679 = vld [vmem:[#allocation2 + $0xf60] sm:$0xff]
    %v680 = vld [vmem:[#allocation2 + $0xf68] sm:$0xff]
    %v681 = vld [vmem:[#allocation2 + $0xf70] sm:$0xff]
    %v682 = vld [vmem:[#allocation2 + $0xf78] sm:$0xff]
    %v683 = vld [vmem:[#allocation2 + $0xf80] sm:$0xff]
    %v684 = vld [vmem:[#allocation2 + $0xf88] sm:$0xff]
    %v685 = vld [vmem:[#allocation2 + $0xf90] sm:$0xff]
    %v686 = vld [vmem:[#allocation2 + $0xf98] sm:$0xff]
    %v687 = vld [vmem:[#allocation2 + $0xfa0] sm:$0xff]
    %v688 = vld [vmem:[#allocation2 + $0xfa8] sm:$0xff]
    %v689 = vld [vmem:[#allocation2 + $0xfb0] sm:$0xff]
    %v690 = vld [vmem:[#allocation2 + $0xfb8] sm:$0xff]
    %v691 = vld [vmem:[#allocation2 + $0xfc0] sm:$0xff]
    %v692 = vld [vmem:[#allocation2 + $0xfc8] sm:$0xff]
    %v693 = vld [vmem:[#allocation2 + $0xfd0] sm:$0xff]
    %v694 = vld [vmem:[#allocation2 + $0xfd8] sm:$0xff]
    %v695 = vld [vmem:[#allocation2 + $0xfe0] sm:$0xff]
    %v696 = vld [vmem:[#allocation2 + $0xfe8] sm:$0xff]
    %v697 = vld [vmem:[#allocation2 + $0xff0] sm:$0xff]
    %v698 = vld [vmem:[#allocation2 + $0xff8] sm:$0xff]
    %v699 = vld [vmem:[#allocation2 + $0x1000] sm:$0xff]
    %v700 = vld [vmem:[#allocation2 + $0x1008] sm:$0xff]
    %v701 = vld [vmem:[#allocation2 + $0x1010] sm:$0xff]
    %v702 = vld [vmem:[#allocation2 + $0x1018] sm:$0xff]
    %v703 = vld [vmem:[#allocation2 + $0x1020] sm:$0xff]
    %v704 = vld [vmem:[#allocation2 + $0x1028] sm:$0xff]
    %v705 = vld [vmem:[#allocation2 + $0x1030] sm:$0xff]
    %v706 = vld [vmem:[#allocation2 + $0x1038] sm:$0xff]
    %v707 = vld [vmem:[#allocation2 + $0x1040] sm:$0xff]
    %v708 = vld [vmem:[#allocation2 + $0x1048] sm:$0xff]
    %v709 = vld [vmem:[#allocation2 + $0x1050] sm:$0xff]
    %v710 = vld [vmem:[#allocation2 + $0x1058] sm:$0xff]
    %v711 = vld [vmem:[#allocation2 + $0x1060] sm:$0xff]
    %v712 = vld [vmem:[#allocation2 + $0x1068] sm:$0xff]
    %v713 = vld [vmem:[#allocation2 + $0x1070] sm:$0xff]
    %v714 = vld [vmem:[#allocation2 + $0x1078] sm:$0xff]
    %v715 = vld [vmem:[#allocation2 + $0x1080] sm:$0xff]
    %v716 = vld [vmem:[#allocation2 + $0x1088] sm:$0xff]
    %v717 = vld [vmem:[#allocation2 + $0x1090] sm:$0xff]
    %v718 = vld [vmem:[#allocation2 + $0x1098] sm:$0xff]
    %v719 = vld [vmem:[#allocation2 + $0x10a0] sm:$0xff]
    %v720 = vld [vmem:[#allocation2 + $0x10a8] sm:$0xff]
    %v721 = vld [vmem:[#allocation2 + $0x10b0] sm:$0xff]
    %v722 = vld [vmem:[#allocation2 + $0x10b8] sm:$0xff]
    %v723 = vld [vmem:[#allocation2 + $0x10c0] sm:$0xff]
    %v724 = vld [vmem:[#allocation2 + $0x10c8] sm:$0xff]
    %v725 = vld [vmem:[#allocation2 + $0x10d0] sm:$0xff]
    %v726 = vld [vmem:[#allocation2 + $0x10d8] sm:$0xff]
    %v727 = vld [vmem:[#allocation2 + $0x10e0] sm:$0xff]
    %v728 = vld [vmem:[#allocation2 + $0x10e8] sm:$0xff]
    %v729 = vld [vmem:[#allocation2 + $0x10f0] sm:$0xff]
    %v730 = vld [vmem:[#allocation2 + $0x10f8] sm:$0xff]
    %v731 = vld [vmem:[#allocation2 + $0x1100] sm:$0xff]
    %v732 = vld [vmem:[#allocation2 + $0x1108] sm:$0xff]
    %v733 = vld [vmem:[#allocation2 + $0x1110] sm:$0xff]
    %v734 = vld [vmem:[#allocation2 + $0x1118] sm:$0xff]
    %v735 = vld [vmem:[#allocation2 + $0x1120] sm:$0xff]
    %v736 = vld [vmem:[#allocation2 + $0x1128] sm:$0xff]
    %v737 = vld [vmem:[#allocation2 + $0x1130] sm:$0xff]
    %v738 = vld [vmem:[#allocation2 + $0x1138] sm:$0xff]
    %v739 = vld [vmem:[#allocation2 + $0x1140] sm:$0xff]
    %v740 = vld [vmem:[#allocation2 + $0x1148] sm:$0xff]
    %v741 = vld [vmem:[#allocation2 + $0x1150] sm:$0xff]
    %v742 = vld [vmem:[#allocation2 + $0x1158] sm:$0xff]
    %v743 = vld [vmem:[#allocation2 + $0x1160] sm:$0xff]
    %v744 = vld [vmem:[#allocation2 + $0x1168] sm:$0xff]
    %v745 = vld [vmem:[#allocation2 + $0x1170] sm:$0xff]
    %v746 = vld [vmem:[#allocation2 + $0x1178] sm:$0xff]
    %v747 = vld [vmem:[#allocation2 + $0x1180] sm:$0xff]
    %v748 = vld [vmem:[#allocation2 + $0x1188] sm:$0xff]
    %v749 = vld [vmem:[#allocation2 + $0x1190] sm:$0xff]
    %v750 = vld [vmem:[#allocation2 + $0x1198] sm:$0xff]
    %v751 = vld [vmem:[#allocation2 + $0x11a0] sm:$0xff]
    %v752 = vld [vmem:[#allocation2 + $0x11a8] sm:$0xff]
    %v753 = vld [vmem:[#allocation2 + $0x11b0] sm:$0xff]
    %v754 = vld [vmem:[#allocation2 + $0x11b8] sm:$0xff]
    %v755 = vld [vmem:[#allocation2 + $0x11c0] sm:$0xff]
    %v756 = vld [vmem:[#allocation2 + $0x11c8] sm:$0xff]
    %v757 = vld [vmem:[#allocation2 + $0x11d0] sm:$0xff]
    %v758 = vld [vmem:[#allocation2 + $0x11d8] sm:$0xff]
    %v759 = vld [vmem:[#allocation2 + $0x11e0] sm:$0xff]
    %v760 = vld [vmem:[#allocation2 + $0x11e8] sm:$0xff]
    %v761 = vld [vmem:[#allocation2 + $0x11f0] sm:$0xff]
    %v762 = vld [vmem:[#allocation2 + $0x11f8] sm:$0xff]
    %v763 = vld [vmem:[#allocation2 + $0x1200] sm:$0xff]
    %v764 = vld [vmem:[#allocation2 + $0x1208] sm:$0xff]
    %v765 = vld [vmem:[#allocation2 + $0x1210] sm:$0xff]
    %v766 = vld [vmem:[#allocation2 + $0x1218] sm:$0xff]
    %v767 = vld [vmem:[#allocation2 + $0x1220] sm:$0xff]
    %v768 = vld [vmem:[#allocation2 + $0x1228] sm:$0xff]
    %v769 = vld [vmem:[#allocation2 + $0x1230] sm:$0xff]
    %v770 = vld [vmem:[#allocation2 + $0x1238] sm:$0xff]
    %v771 = vld [vmem:[#allocation2 + $0x1240] sm:$0xff]
    %v772 = vld [vmem:[#allocation2 + $0x1248] sm:$0xff]
    %v773 = vld [vmem:[#allocation2 + $0x1250] sm:$0xff]
    %v774 = vld [vmem:[#allocation2 + $0x1258] sm:$0xff]
    %v775 = vld [vmem:[#allocation2 + $0x1260] sm:$0xff]
    %v776 = vld [vmem:[#allocation2 + $0x1268] sm:$0xff]
    %v777 = vld [vmem:[#allocation2 + $0x1270] sm:$0xff]
    %v778 = vld [vmem:[#allocation2 + $0x1278] sm:$0xff]
    %v779 = vld [vmem:[#allocation2 + $0x1280] sm:$0xff]
    %v780 = vld [vmem:[#allocation2 + $0x1288] sm:$0xff]
    %v781 = vld [vmem:[#allocation2 + $0x1290] sm:$0xff]
    %v782 = vld [vmem:[#allocation2 + $0x1298] sm:$0xff]
    %v783 = vld [vmem:[#allocation2 + $0x12a0] sm:$0xff]
    %v784 = vld [vmem:[#allocation2 + $0x12a8] sm:$0xff]
    %v785 = vld [vmem:[#allocation2 + $0x12b0] sm:$0xff]
    %v786 = vld [vmem:[#allocation2 + $0x12b8] sm:$0xff]
    %v787 = vld [vmem:[#allocation2 + $0x12c0] sm:$0xff]
    %v788 = vld [vmem:[#allocation2 + $0x12c8] sm:$0xff]
    %v789 = vld [vmem:[#allocation2 + $0x12d0] sm:$0xff]
    %v790 = vld [vmem:[#allocation2 + $0x12d8] sm:$0xff]
    %v791 = vld [vmem:[#allocation2 + $0x12e0] sm:$0xff]
    %v792 = vld [vmem:[#allocation2 + $0x12e8] sm:$0xff]
    %v793 = vld [vmem:[#allocation2 + $0x12f0] sm:$0xff]
    %v794 = vld [vmem:[#allocation2 + $0x12f8] sm:$0xff]
    %v795 = vld [vmem:[#allocation2 + $0x1300] sm:$0xff]
    %v796 = vld [vmem:[#allocation2 + $0x1308] sm:$0xff]
    %v797 = vld [vmem:[#allocation2 + $0x1310] sm:$0xff]
    %v798 = vld [vmem:[#allocation2 + $0x1318] sm:$0xff]
    %v799 = vld [vmem:[#allocation2 + $0x1320] sm:$0xff]
    %v800 = vld [vmem:[#allocation2 + $0x1328] sm:$0xff]
    %v801 = vld [vmem:[#allocation2 + $0x1330] sm:$0xff]
    %v802 = vld [vmem:[#allocation2 + $0x1338] sm:$0xff]
    %v803 = vld [vmem:[#allocation2 + $0x1340] sm:$0xff]
    %v804 = vld [vmem:[#allocation2 + $0x1348] sm:$0xff]
    %v805 = vld [vmem:[#allocation2 + $0x1350] sm:$0xff]
    %v806 = vld [vmem:[#allocation2 + $0x1358] sm:$0xff]
    %v807 = vld [vmem:[#allocation2 + $0x1360] sm:$0xff]
    %v808 = vld [vmem:[#allocation2 + $0x1368] sm:$0xff]
    %v809 = vld [vmem:[#allocation2 + $0x1370] sm:$0xff]
    %v810 = vld [vmem:[#allocation2 + $0x1378] sm:$0xff]
    %v811 = vld [vmem:[#allocation2 + $0x1380] sm:$0xff]
    %v812 = vld [vmem:[#allocation2 + $0x1388] sm:$0xff]
    %v813 = vld [vmem:[#allocation2 + $0x1390] sm:$0xff]
    %v814 = vld [vmem:[#allocation2 + $0x1398] sm:$0xff]
    %v815 = vld [vmem:[#allocation2 + $0x13a0] sm:$0xff]
    %v816 = vld [vmem:[#allocation2 + $0x13a8] sm:$0xff]
    %v817 = vld [vmem:[#allocation2 + $0x13b0] sm:$0xff]
    %v818 = vld [vmem:[#allocation2 + $0x13b8] sm:$0xff]
    %v819 = vld [vmem:[#allocation2 + $0x13c0] sm:$0xff]
    %v820 = vld [vmem:[#allocation2 + $0x13c8] sm:$0xff]
    %v821 = vld [vmem:[#allocation2 + $0x13d0] sm:$0xff]
    %v822 = vld [vmem:[#allocation2 + $0x13d8] sm:$0xff]
    %v823 = vld [vmem:[#allocation2 + $0x13e0] sm:$0xff]
    %v824 = vld [vmem:[#allocation2 + $0x13e8] sm:$0xff]
    %v825 = vld [vmem:[#allocation2 + $0x13f0] sm:$0xff]
    %v826 = vld [vmem:[#allocation2 + $0x13f8] sm:$0xff]
    %v827 = vld [vmem:[#allocation2 + $0x1400] sm:$0xff]
    %v828 = vld [vmem:[#allocation2 + $0x1408] sm:$0xff]
    %v829 = vld [vmem:[#allocation2 + $0x1410] sm:$0xff]
    %v830 = vld [vmem:[#allocation2 + $0x1418] sm:$0xff]
    %v831 = vld [vmem:[#allocation2 + $0x1420] sm:$0xff]
    %v832 = vld [vmem:[#allocation2 + $0x1428] sm:$0xff]
    %v833 = vld [vmem:[#allocation2 + $0x1430] sm:$0xff]
    %v834 = vld [vmem:[#allocation2 + $0x1438] sm:$0xff]
    %v835 = vld [vmem:[#allocation2 + $0x1440] sm:$0xff]
    %v836 = vld [vmem:[#allocation2 + $0x1448] sm:$0xff]
    %v837 = vld [vmem:[#allocation2 + $0x1450] sm:$0xff]
    %v838 = vld [vmem:[#allocation2 + $0x1458] sm:$0xff]
    %v839 = vld [vmem:[#allocation2 + $0x1460] sm:$0xff]
    %v840 = vld [vmem:[#allocation2 + $0x1468] sm:$0xff]
    %v841 = vld [vmem:[#allocation2 + $0x1470] sm:$0xff]
    %v842 = vld [vmem:[#allocation2 + $0x1478] sm:$0xff]
    %v843 = vld [vmem:[#allocation2 + $0x1480] sm:$0xff]
    %v844 = vld [vmem:[#allocation2 + $0x1488] sm:$0xff]
    %v845 = vld [vmem:[#allocation2 + $0x1490] sm:$0xff]
    %v846 = vld [vmem:[#allocation2 + $0x1498] sm:$0xff]
    %v847 = vld [vmem:[#allocation2 + $0x14a0] sm:$0xff]
    %v848 = vld [vmem:[#allocation2 + $0x14a8] sm:$0xff]
    %v849 = vld [vmem:[#allocation2 + $0x14b0] sm:$0xff]
    %v850 = vld [vmem:[#allocation2 + $0x14b8] sm:$0xff]
    %v851 = vld [vmem:[#allocation2 + $0x14c0] sm:$0xff]
    %v852 = vld [vmem:[#allocation2 + $0x14c8] sm:$0xff]
    %v853 = vld [vmem:[#allocation2 + $0x14d0] sm:$0xff]
    %v854 = vld [vmem:[#allocation2 + $0x14d8] sm:$0xff]
    %v855 = vld [vmem:[#allocation2 + $0x14e0] sm:$0xff]
    %v856 = vld [vmem:[#allocation2 + $0x14e8] sm:$0xff]
    %v857 = vld [vmem:[#allocation2 + $0x14f0] sm:$0xff]
    %v858 = vld [vmem:[#allocation2 + $0x14f8] sm:$0xff]
    %v859 = vld [vmem:[#allocation2 + $0x1500] sm:$0xff]
    %v860 = vld [vmem:[#allocation2 + $0x1508] sm:$0xff]
    %v861 = vld [vmem:[#allocation2 + $0x1510] sm:$0xff]
    %v862 = vld [vmem:[#allocation2 + $0x1518] sm:$0xff]
    %v863 = vld [vmem:[#allocation2 + $0x1520] sm:$0xff]
    %v864 = vld [vmem:[#allocation2 + $0x1528] sm:$0xff]
    %v865 = vld [vmem:[#allocation2 + $0x1530] sm:$0xff]
    %v866 = vld [vmem:[#allocation2 + $0x1538] sm:$0xff]
    %v867 = vld [vmem:[#allocation2 + $0x1540] sm:$0xff]
    %v868 = vld [vmem:[#allocation2 + $0x1548] sm:$0xff]
    %v869 = vld [vmem:[#allocation2 + $0x1550] sm:$0xff]
    %v870 = vld [vmem:[#allocation2 + $0x1558] sm:$0xff]
    %v871 = vld [vmem:[#allocation2 + $0x1560] sm:$0xff]
    %v872 = vld [vmem:[#allocation2 + $0x1568] sm:$0xff]
    %v873 = vld [vmem:[#allocation2 + $0x1570] sm:$0xff]
    %v874 = vld [vmem:[#allocation2 + $0x1578] sm:$0xff]
    %v875 = vld [vmem:[#allocation2 + $0x1580] sm:$0xff]
    %v876 = vld [vmem:[#allocation2 + $0x1588] sm:$0xff]
    %v877 = vld [vmem:[#allocation2 + $0x1590] sm:$0xff]
    %v878 = vld [vmem:[#allocation2 + $0x1598] sm:$0xff]
    %v879 = vld [vmem:[#allocation2 + $0x15a0] sm:$0xff]
    %v880 = vld [vmem:[#allocation2 + $0x15a8] sm:$0xff]
    %v881 = vld [vmem:[#allocation2 + $0x15b0] sm:$0xff]
    %v882 = vld [vmem:[#allocation2 + $0x15b8] sm:$0xff]
    %v883 = vld [vmem:[#allocation2 + $0x15c0] sm:$0xff]
    %v884 = vld [vmem:[#allocation2 + $0x15c8] sm:$0xff]
    %v885 = vld [vmem:[#allocation2 + $0x15d0] sm:$0xff]
    %v886 = vld [vmem:[#allocation2 + $0x15d8] sm:$0xff]
    %v887 = vld [vmem:[#allocation2 + $0x15e0] sm:$0xff]
    %v888 = vld [vmem:[#allocation2 + $0x15e8] sm:$0xff]
    %v889 = vld [vmem:[#allocation2 + $0x15f0] sm:$0xff]
    %v890 = vld [vmem:[#allocation2 + $0x15f8] sm:$0xff]
    %v891 = vld [vmem:[#allocation2 + $0x1600] sm:$0xff]
    %v892 = vld [vmem:[#allocation2 + $0x1608] sm:$0xff]
    %v893 = vld [vmem:[#allocation2 + $0x1610] sm:$0xff]
    %v894 = vld [vmem:[#allocation2 + $0x1618] sm:$0xff]
    %v895 = vld [vmem:[#allocation2 + $0x1620] sm:$0xff]
    %v896 = vld [vmem:[#allocation2 + $0x1628] sm:$0xff]
    %v897 = vld [vmem:[#allocation2 + $0x1630] sm:$0xff]
    %v898 = vld [vmem:[#allocation2 + $0x1638] sm:$0xff]
    %v899 = vld [vmem:[#allocation2 + $0x1640] sm:$0xff]
    %v900 = vld [vmem:[#allocation2 + $0x1648] sm:$0xff]
    %v901 = vld [vmem:[#allocation2 + $0x1650] sm:$0xff]
    %v902 = vld [vmem:[#allocation2 + $0x1658] sm:$0xff]
    %v903 = vld [vmem:[#allocation2 + $0x1660] sm:$0xff]
    %v904 = vld [vmem:[#allocation2 + $0x1668] sm:$0xff]
    %v905 = vld [vmem:[#allocation2 + $0x1670] sm:$0xff]
    %v906 = vld [vmem:[#allocation2 + $0x1678] sm:$0xff]
    %v907 = vld [vmem:[#allocation2 + $0x1680] sm:$0xff]
    %v908 = vld [vmem:[#allocation2 + $0x1688] sm:$0xff]
    %v909 = vld [vmem:[#allocation2 + $0x1690] sm:$0xff]
    %v910 = vld [vmem:[#allocation2 + $0x1698] sm:$0xff]
    %v911 = vld [vmem:[#allocation2 + $0x16a0] sm:$0xff]
    %v912 = vld [vmem:[#allocation2 + $0x16a8] sm:$0xff]
    %v913 = vld [vmem:[#allocation2 + $0x16b0] sm:$0xff]
    %v914 = vld [vmem:[#allocation2 + $0x16b8] sm:$0xff]
    %v915 = vld [vmem:[#allocation2 + $0x16c0] sm:$0xff]
    %v916 = vld [vmem:[#allocation2 + $0x16c8] sm:$0xff]
    %v917 = vld [vmem:[#allocation2 + $0x16d0] sm:$0xff]
    %v918 = vld [vmem:[#allocation2 + $0x16d8] sm:$0xff]
    %v919 = vld [vmem:[#allocation2 + $0x16e0] sm:$0xff]
    %v920 = vld [vmem:[#allocation2 + $0x16e8] sm:$0xff]
    %v921 = vld [vmem:[#allocation2 + $0x16f0] sm:$0xff]
    %v922 = vld [vmem:[#allocation2 + $0x16f8] sm:$0xff]
    %v923 = vld [vmem:[#allocation2 + $0x1700] sm:$0xff]
    %v924 = vld [vmem:[#allocation2 + $0x1708] sm:$0xff]
    %v925 = vld [vmem:[#allocation2 + $0x1710] sm:$0xff]
    %v926 = vld [vmem:[#allocation2 + $0x1718] sm:$0xff]
    %v927 = vld [vmem:[#allocation2 + $0x1720] sm:$0xff]
    %v928 = vld [vmem:[#allocation2 + $0x1728] sm:$0xff]
    %v929 = vld [vmem:[#allocation2 + $0x1730] sm:$0xff]
    %v930 = vld [vmem:[#allocation2 + $0x1738] sm:$0xff]
    %v931 = vld [vmem:[#allocation2 + $0x1740] sm:$0xff]
    %v932 = vld [vmem:[#allocation2 + $0x1748] sm:$0xff]
    %v933 = vld [vmem:[#allocation2 + $0x1750] sm:$0xff]
    %v934 = vld [vmem:[#allocation2 + $0x1758] sm:$0xff]
    %v935 = vld [vmem:[#allocation2 + $0x1760] sm:$0xff]
    %v936 = vld [vmem:[#allocation2 + $0x1768] sm:$0xff]
    %v937 = vld [vmem:[#allocation2 + $0x1770] sm:$0xff]
    %v938 = vld [vmem:[#allocation2 + $0x1778] sm:$0xff]
    %v939 = vld [vmem:[#allocation2 + $0x1780] sm:$0xff]
    %v940 = vld [vmem:[#allocation2 + $0x1788] sm:$0xff]
    %v941 = vld [vmem:[#allocation2 + $0x1790] sm:$0xff]
    %v942 = vld [vmem:[#allocation2 + $0x1798] sm:$0xff]
    %v943 = vld [vmem:[#allocation2 + $0x17a0] sm:$0xff]
    %v944 = vld [vmem:[#allocation2 + $0x17a8] sm:$0xff]
    %v945 = vld [vmem:[#allocation2 + $0x17b0] sm:$0xff]
    %v946 = vld [vmem:[#allocation2 + $0x17b8] sm:$0xff]
    %v947 = vld [vmem:[#allocation2 + $0x17c0] sm:$0xff]
    %v948 = vld [vmem:[#allocation2 + $0x17c8] sm:$0xff]
    %v949 = vld [vmem:[#allocation2 + $0x17d0] sm:$0xff]
    %v950 = vld [vmem:[#allocation2 + $0x17d8] sm:$0xff]
    %v951 = vld [vmem:[#allocation2 + $0x17e0] sm:$0xff]
    %v952 = vld [vmem:[#allocation2 + $0x17e8] sm:$0xff]
    %v953 = vld [vmem:[#allocation2 + $0x17f0] sm:$0xff]
    %v954 = vld [vmem:[#allocation2 + $0x17f8] sm:$0xff]
    %v955 = vld [vmem:[#allocation4] sm:$0xff]
    %v957 = vlaneseq
    %v958 = vshrl.u32 %v957, 7
    %v959 = vsub.s32 0, %v958
    %v960 = vrot.slane %v955, %v959
    %v961 = vlaneseq
    %v962 = vshrl.u32 %v961, 7
    %v963 = vsub.s32 1, %v962
    %v964 = vrot.slane %v955, %v963
    %v965 = vlaneseq
    %v966 = vshrl.u32 %v965, 7
    %v967 = vsub.s32 2, %v966
    %v968 = vrot.slane %v955, %v967
    %v969 = vlaneseq
    %v970 = vshrl.u32 %v969, 7
    %v971 = vsub.s32 3, %v970
    %v972 = vrot.slane %v955, %v971
    %v973 = vlaneseq
    %v974 = vshrl.u32 %v973, 7
    %v975 = vsub.s32 4, %v974
    %v976 = vrot.slane %v955, %v975
    %v977 = vlaneseq
    %v978 = vshrl.u32 %v977, 7
    %v979 = vsub.s32 5, %v978
    %v980 = vrot.slane %v955, %v979
    %v981 = vlaneseq
    %v982 = vshrl.u32 %v981, 7
    %v983 = vsub.s32 6, %v982
    %v984 = vrot.slane %v955, %v983
    %v985 = vlaneseq
    %v986 = vshrl.u32 %v985, 7
    %v987 = vsub.s32 7, %v986
    %v988 = vrot.slane %v955, %v987
    %997 = vmatprep.subr.mxu0 %v188
    %998 = vmatpush1.msra.mxu0 %v187
    %999 = vmatprep.subr.mxu0 %v196
    %1000 = vmatpush1.msra.mxu0 %v195
    %1001 = vmatprep.subr.mxu0 %v204
    %1002 = vmatpush1.msra.mxu0 %v203
    %1003 = vmatprep.subr.mxu0 %v212
    %1004 = vmatpush1.msra.mxu0 %v211
    %1005 = vmatprep.subr.mxu0 %v220
    %1006 = vmatpush1.msra.mxu0 %v219
    %1007 = vmatprep.subr.mxu0 %v228
    %1008 = vmatpush1.msra.mxu0 %v227
    %1009 = vmatprep.subr.mxu0 %v236
    %1010 = vmatpush1.msra.mxu0 %v235
    %1011 = vmatprep.subr.mxu0 %v244
    %1012 = vmatpush1.msra.mxu0 %v243
    %1013 = vmatprep.subr.mxu0 %v252
    %1014 = vmatpush1.msra.mxu0 %v251
    %1015 = vmatprep.subr.mxu0 %v260
    %1016 = vmatpush1.msra.mxu0 %v259
    %1017 = vmatprep.subr.mxu0 %v268
    %1018 = vmatpush1.msra.mxu0 %v267
    %1019 = vmatprep.subr.mxu0 %v276
    %1020 = vmatpush1.msra.mxu0 %v275
    %1021 = vmatprep.subr.mxu0 %v284
    %1022 = vmatpush1.msra.mxu0 %v283
    %1023 = vmatprep.subr.mxu0 %v292
    %1024 = vmatpush1.msra.mxu0 %v291
    %1025 = vmatprep.subr.mxu0 %v300
    %1026 = vmatpush1.msra.mxu0 %v299
    %1027 = vmatprep.subr.mxu0 %v308
    %1028 = vmatpush1.msra.mxu0 %v307
    %1029 = vmatprep.subr.mxu0 %v316
    %1030 = vmatpush1.msra.mxu0 %v315
    %1031 = vmatprep.subr.mxu0 %v324
    %1032 = vmatpush1.msra.mxu0 %v323
    %1033 = vmatprep.subr.mxu0 %v332
    %1034 = vmatpush1.msra.mxu0 %v331
    %1035 = vmatprep.subr.mxu0 %v340
    %1036 = vmatpush1.msra.mxu0 %v339
    %1037 = vmatprep.subr.mxu0 %v348
    %1038 = vmatpush1.msra.mxu0 %v347
    %1039 = vmatprep.subr.mxu0 %v356
    %1040 = vmatpush1.msra.mxu0 %v355
    %1041 = vmatprep.subr.mxu0 %v364
    %1042 = vmatpush1.msra.mxu0 %v363
    %1043 = vmatprep.subr.mxu0 %v372
    %1044 = vmatpush1.msra.mxu0 %v371
    %1045 = vmatprep.subr.mxu0 %v380
    %1046 = vmatpush1.msra.mxu0 %v379
    %1047 = vmatprep.subr.mxu0 %v388
    %1048 = vmatpush1.msra.mxu0 %v387
    %1049 = vmatprep.subr.mxu0 %v396
    %1050 = vmatpush1.msra.mxu0 %v395
    %1051 = vmatprep.subr.mxu0 %v404
    %1052 = vmatpush1.msra.mxu0 %v403
    %1053 = vmatprep.subr.mxu0 %v412
    %1054 = vmatpush1.msra.mxu0 %v411
    %1055 = vmatprep.subr.mxu0 %v420
    %1056 = vmatpush1.msra.mxu0 %v419
    %1057 = vmatprep.subr.mxu0 %v428
    %1058 = vmatpush1.msra.mxu0 %v427
    %1059 = vmatprep.subr.mxu0 %v436
    %1060 = vmatpush1.msra.mxu0 %v435
    %1061 = vmatprep.mubr.f32.mxu0 %v182
    %1062 = vmatmul.mubr.f32.gmra.mrb[0].mxu0 %v181
    %v1063 = vpop.f32.mrb[0].mxu0
    %v1064 = vadd.f32 %v960, %v1063
    %v1065 = vpop.f32.mrb[0].mxu0
    %v1066 = vadd.f32 %v964, %v1065
    %1067 = vdwg.mxu0
    %1068 = vmatprep.subr.mxu0 %v444
    %1069 = vmatpush1.msra.mxu0 %v443
    %1070 = vmatprep.subr.mxu0 %v452
    %1071 = vmatpush1.msra.mxu0 %v451
    %1072 = vmatprep.subr.mxu0 %v460
    %1073 = vmatpush1.msra.mxu0 %v459
    %1074 = vmatprep.subr.mxu0 %v468
    %1075 = vmatpush1.msra.mxu0 %v467
    %1076 = vmatprep.subr.mxu0 %v476
    %1077 = vmatpush1.msra.mxu0 %v475
    %1078 = vmatprep.subr.mxu0 %v484
    %1079 = vmatpush1.msra.mxu0 %v483
    %1080 = vmatprep.subr.mxu0 %v492
    %1081 = vmatpush1.msra.mxu0 %v491
    %1082 = vmatprep.subr.mxu0 %v500
    %1083 = vmatpush1.msra.mxu0 %v499
    %1084 = vmatprep.subr.mxu0 %v508
    %1085 = vmatpush1.msra.mxu0 %v507
    %1086 = vmatprep.subr.mxu0 %v516
    %1087 = vmatpush1.msra.mxu0 %v515
    %1088 = vmatprep.subr.mxu0 %v524
    %1089 = vmatpush1.msra.mxu0 %v523
    %1090 = vmatprep.subr.mxu0 %v532
    %1091 = vmatpush1.msra.mxu0 %v531
    %1092 = vmatprep.subr.mxu0 %v540
    %1093 = vmatpush1.msra.mxu0 %v539
    %1094 = vmatprep.subr.mxu0 %v548
    %1095 = vmatpush1.msra.mxu0 %v547
    %1096 = vmatprep.subr.mxu0 %v556
    %1097 = vmatpush1.msra.mxu0 %v555
    %1098 = vmatprep.subr.mxu0 %v564
    %1099 = vmatpush1.msra.mxu0 %v563
    %1100 = vmatprep.subr.mxu0 %v572
    %1101 = vmatpush1.msra.mxu0 %v571
    %1102 = vmatprep.subr.mxu0 %v580
    %1103 = vmatpush1.msra.mxu0 %v579
    %1104 = vmatprep.subr.mxu0 %v588
    %1105 = vmatpush1.msra.mxu0 %v587
    %1106 = vmatprep.subr.mxu0 %v596
    %1107 = vmatpush1.msra.mxu0 %v595
    %1108 = vmatprep.subr.mxu0 %v604
    %1109 = vmatpush1.msra.mxu0 %v603
    %1110 = vmatprep.subr.mxu0 %v612
    %1111 = vmatpush1.msra.mxu0 %v611
    %1112 = vmatprep.subr.mxu0 %v620
    %1113 = vmatpush1.msra.mxu0 %v619
    %1114 = vmatprep.subr.mxu0 %v628
    %1115 = vmatpush1.msra.mxu0 %v627
    %1116 = vmatprep.subr.mxu0 %v636
    %1117 = vmatpush1.msra.mxu0 %v635
    %1118 = vmatprep.subr.mxu0 %v644
    %1119 = vmatpush1.msra.mxu0 %v643
    %1120 = vmatprep.subr.mxu0 %v652
    %1121 = vmatpush1.msra.mxu0 %v651
    %1122 = vmatprep.subr.mxu0 %v660
    %1123 = vmatpush1.msra.mxu0 %v659
    %1124 = vmatprep.subr.mxu0 %v668
    %1125 = vmatpush1.msra.mxu0 %v667
    %1126 = vmatprep.subr.mxu0 %v676
    %1127 = vmatpush1.msra.mxu0 %v675
    %1128 = vmatprep.subr.mxu0 %v684
    %1129 = vmatpush1.msra.mxu0 %v683
    %1130 = vmatprep.subr.mxu0 %v692
    %1131 = vmatpush1.msra.mxu0 %v691
    %1132 = vmatprep.mubr.f32.mxu0 %v184
    %1133 = vmatmul.mubr.f32.gmra.mrb[0].mxu0 %v183
    %v1134 = vpop.f32.mrb[0].mxu0
    %v1135 = vadd.f32 %v1064, %v1134
    %v1136 = vpop.f32.mrb[0].mxu0
    %v1137 = vadd.f32 %v1066, %v1136
    %1138 = vdwg.mxu0
    %1139 = vmatprep.subr.mxu0 %v700
    %1140 = vmatpush1.msra.mxu0 %v699
    %1141 = vmatprep.subr.mxu0 %v708
    %1142 = vmatpush1.msra.mxu0 %v707
    %1143 = vmatprep.subr.mxu0 %v716
    %1144 = vmatpush1.msra.mxu0 %v715
    %1145 = vmatprep.subr.mxu0 %v724
    %1146 = vmatpush1.msra.mxu0 %v723
    %1147 = vmatprep.subr.mxu0 %v732
    %1148 = vmatpush1.msra.mxu0 %v731
    %1149 = vmatprep.subr.mxu0 %v740
    %1150 = vmatpush1.msra.mxu0 %v739
    %1151 = vmatprep.subr.mxu0 %v748
    %1152 = vmatpush1.msra.mxu0 %v747
    %1153 = vmatprep.subr.mxu0 %v756
    %1154 = vmatpush1.msra.mxu0 %v755
    %1155 = vmatprep.subr.mxu0 %v764
    %1156 = vmatpush1.msra.mxu0 %v763
    %1157 = vmatprep.subr.mxu0 %v772
    %1158 = vmatpush1.msra.mxu0 %v771
    %1159 = vmatprep.subr.mxu0 %v780
    %1160 = vmatpush1.msra.mxu0 %v779
    %1161 = vmatprep.subr.mxu0 %v788
    %1162 = vmatpush1.msra.mxu0 %v787
    %1163 = vmatprep.subr.mxu0 %v796
    %1164 = vmatpush1.msra.mxu0 %v795
    %1165 = vmatprep.subr.mxu0 %v804
    %1166 = vmatpush1.msra.mxu0 %v803
    %1167 = vmatprep.subr.mxu0 %v812
    %1168 = vmatpush1.msra.mxu0 %v811
    %1169 = vmatprep.subr.mxu0 %v820
    %1170 = vmatpush1.msra.mxu0 %v819
    %1171 = vmatprep.subr.mxu0 %v828
    %1172 = vmatpush1.msra.mxu0 %v827
    %1173 = vmatprep.subr.mxu0 %v836
    %1174 = vmatpush1.msra.mxu0 %v835
    %1175 = vmatprep.subr.mxu0 %v844
    %1176 = vmatpush1.msra.mxu0 %v843
    %1177 = vmatprep.subr.mxu0 %v852
    %1178 = vmatpush1.msra.mxu0 %v851
    %1179 = vmatprep.subr.mxu0 %v860
    %1180 = vmatpush1.msra.mxu0 %v859
    %1181 = vmatprep.subr.mxu0 %v868
    %1182 = vmatpush1.msra.mxu0 %v867
    %1183 = vmatprep.subr.mxu0 %v876
    %1184 = vmatpush1.msra.mxu0 %v875
    %1185 = vmatprep.subr.mxu0 %v884
    %1186 = vmatpush1.msra.mxu0 %v883
    %1187 = vmatprep.subr.mxu0 %v892
    %1188 = vmatpush1.msra.mxu0 %v891
    %1189 = vmatprep.subr.mxu0 %v900
    %1190 = vmatpush1.msra.mxu0 %v899
    %1191 = vmatprep.subr.mxu0 %v908
    %1192 = vmatpush1.msra.mxu0 %v907
    %1193 = vmatprep.subr.mxu0 %v916
    %1194 = vmatpush1.msra.mxu0 %v915
    %1195 = vmatprep.subr.mxu0 %v924
    %1196 = vmatpush1.msra.mxu0 %v923
    %1197 = vmatprep.subr.mxu0 %v932
    %1198 = vmatpush1.msra.mxu0 %v931
    %1199 = vmatprep.subr.mxu0 %v940
    %1200 = vmatpush1.msra.mxu0 %v939
    %1201 = vmatprep.subr.mxu0 %v948
    %1202 = vmatpush1.msra.mxu0 %v947
    %1203 = vmatprep.mubr.f32.mxu0 %v186
    %1204 = vmatmul.mubr.f32.gmra.mrb[0].mxu0 %v185
    %v1205 = vpop.f32.mrb[0].mxu0
    %v1206 = vadd.f32 %v1135, %v1205
    %v1207 = vpop.f32.mrb[0].mxu0
    %v1208 = vadd.f32 %v1137, %v1207
    %1209 = vdwg.mxu0
    %1210 = vmatprep.subr.mxu0 %v190
    %1211 = vmatpush1.msra.mxu0 %v189
    %1212 = vmatprep.subr.mxu0 %v198
    %1213 = vmatpush1.msra.mxu0 %v197
    %1214 = vmatprep.subr.mxu0 %v206
    %1215 = vmatpush1.msra.mxu0 %v205
    %1216 = vmatprep.subr.mxu0 %v214
    %1217 = vmatpush1.msra.mxu0 %v213
    %1218 = vmatprep.subr.mxu0 %v222
    %1219 = vmatpush1.msra.mxu0 %v221
    %1220 = vmatprep.subr.mxu0 %v230
    %1221 = vmatpush1.msra.mxu0 %v229
    %1222 = vmatprep.subr.mxu0 %v238
    %1223 = vmatpush1.msra.mxu0 %v237
    %1224 = vmatprep.subr.mxu0 %v246
    %1225 = vmatpush1.msra.mxu0 %v245
    %1226 = vmatprep.subr.mxu0 %v254
    %1227 = vmatpush1.msra.mxu0 %v253
    %1228 = vmatprep.subr.mxu0 %v262
    %1229 = vmatpush1.msra.mxu0 %v261
    %1230 = vmatprep.subr.mxu0 %v270
    %1231 = vmatpush1.msra.mxu0 %v269
    %1232 = vmatprep.subr.mxu0 %v278
    %1233 = vmatpush1.msra.mxu0 %v277
    %1234 = vmatprep.subr.mxu0 %v286
    %1235 = vmatpush1.msra.mxu0 %v285
    %1236 = vmatprep.subr.mxu0 %v294
    %1237 = vmatpush1.msra.mxu0 %v293
    %1238 = vmatprep.subr.mxu0 %v302
    %1239 = vmatpush1.msra.mxu0 %v301
    %1240 = vmatprep.subr.mxu0 %v310
    %1241 = vmatpush1.msra.mxu0 %v309
    %1242 = vmatprep.subr.mxu0 %v318
    %1243 = vmatpush1.msra.mxu0 %v317
    %1244 = vmatprep.subr.mxu0 %v326
    %1245 = vmatpush1.msra.mxu0 %v325
    %1246 = vmatprep.subr.mxu0 %v334
    %1247 = vmatpush1.msra.mxu0 %v333
    %1248 = vmatprep.subr.mxu0 %v342
    %1249 = vmatpush1.msra.mxu0 %v341
    %1250 = vmatprep.subr.mxu0 %v350
    %1251 = vmatpush1.msra.mxu0 %v349
    %1252 = vmatprep.subr.mxu0 %v358
    %1253 = vmatpush1.msra.mxu0 %v357
    %1254 = vmatprep.subr.mxu0 %v366
    %1255 = vmatpush1.msra.mxu0 %v365
    %1256 = vmatprep.subr.mxu0 %v374
    %1257 = vmatpush1.msra.mxu0 %v373
    %1258 = vmatprep.subr.mxu0 %v382
    %1259 = vmatpush1.msra.mxu0 %v381
    %1260 = vmatprep.subr.mxu0 %v390
    %1261 = vmatpush1.msra.mxu0 %v389
    %1262 = vmatprep.subr.mxu0 %v398
    %1263 = vmatpush1.msra.mxu0 %v397
    %1264 = vmatprep.subr.mxu0 %v406
    %1265 = vmatpush1.msra.mxu0 %v405
    %1266 = vmatprep.subr.mxu0 %v414
    %1267 = vmatpush1.msra.mxu0 %v413
    %1268 = vmatprep.subr.mxu0 %v422
    %1269 = vmatpush1.msra.mxu0 %v421
    %1270 = vmatprep.subr.mxu0 %v430
    %1271 = vmatpush1.msra.mxu0 %v429
    %1272 = vmatprep.subr.mxu0 %v438
    %1273 = vmatpush1.msra.mxu0 %v437
    %1274 = vmatprep.mubr.f32.mxu0 %v182
    %1275 = vmatmul.mubr.f32.gmra.mrb[0].mxu0 %v181
    %v1276 = vpop.f32.mrb[0].mxu0
    %v1277 = vadd.f32 %v968, %v1276
    %v1278 = vpop.f32.mrb[0].mxu0
    %v1279 = vadd.f32 %v972, %v1278
    %1280 = vdwg.mxu0
    %1281 = vmatprep.subr.mxu0 %v446
    %1282 = vmatpush1.msra.mxu0 %v445
    %1283 = vmatprep.subr.mxu0 %v454
    %1284 = vmatpush1.msra.mxu0 %v453
    %1285 = vmatprep.subr.mxu0 %v462
    %1286 = vmatpush1.msra.mxu0 %v461
    %1287 = vmatprep.subr.mxu0 %v470
    %1288 = vmatpush1.msra.mxu0 %v469
    %1289 = vmatprep.subr.mxu0 %v478
    %1290 = vmatpush1.msra.mxu0 %v477
    %1291 = vmatprep.subr.mxu0 %v486
    %1292 = vmatpush1.msra.mxu0 %v485
    %1293 = vmatprep.subr.mxu0 %v494
    %1294 = vmatpush1.msra.mxu0 %v493
    %1295 = vmatprep.subr.mxu0 %v502
    %1296 = vmatpush1.msra.mxu0 %v501
    %1297 = vmatprep.subr.mxu0 %v510
    %1298 = vmatpush1.msra.mxu0 %v509
    %1299 = vmatprep.subr.mxu0 %v518
    %1300 = vmatpush1.msra.mxu0 %v517
    %1301 = vmatprep.subr.mxu0 %v526
    %1302 = vmatpush1.msra.mxu0 %v525
    %1303 = vmatprep.subr.mxu0 %v534
    %1304 = vmatpush1.msra.mxu0 %v533
    %1305 = vmatprep.subr.mxu0 %v542
    %1306 = vmatpush1.msra.mxu0 %v541
    %1307 = vmatprep.subr.mxu0 %v550
    %1308 = vmatpush1.msra.mxu0 %v549
    %1309 = vmatprep.subr.mxu0 %v558
    %1310 = vmatpush1.msra.mxu0 %v557
    %1311 = vmatprep.subr.mxu0 %v566
    %1312 = vmatpush1.msra.mxu0 %v565
    %1313 = vmatprep.subr.mxu0 %v574
    %1314 = vmatpush1.msra.mxu0 %v573
    %1315 = vmatprep.subr.mxu0 %v582
    %1316 = vmatpush1.msra.mxu0 %v581
    %1317 = vmatprep.subr.mxu0 %v590
    %1318 = vmatpush1.msra.mxu0 %v589
    %1319 = vmatprep.subr.mxu0 %v598
    %1320 = vmatpush1.msra.mxu0 %v597
    %1321 = vmatprep.subr.mxu0 %v606
    %1322 = vmatpush1.msra.mxu0 %v605
    %1323 = vmatprep.subr.mxu0 %v614
    %1324 = vmatpush1.msra.mxu0 %v613
    %1325 = vmatprep.subr.mxu0 %v622
    %1326 = vmatpush1.msra.mxu0 %v621
    %1327 = vmatprep.subr.mxu0 %v630
    %1328 = vmatpush1.msra.mxu0 %v629
    %1329 = vmatprep.subr.mxu0 %v638
    %1330 = vmatpush1.msra.mxu0 %v637
    %1331 = vmatprep.subr.mxu0 %v646
    %1332 = vmatpush1.msra.mxu0 %v645
    %1333 = vmatprep.subr.mxu0 %v654
    %1334 = vmatpush1.msra.mxu0 %v653
    %1335 = vmatprep.subr.mxu0 %v662
    %1336 = vmatpush1.msra.mxu0 %v661
    %1337 = vmatprep.subr.mxu0 %v670
    %1338 = vmatpush1.msra.mxu0 %v669
    %1339 = vmatprep.subr.mxu0 %v678
    %1340 = vmatpush1.msra.mxu0 %v677
    %1341 = vmatprep.subr.mxu0 %v686
    %1342 = vmatpush1.msra.mxu0 %v685
    %1343 = vmatprep.subr.mxu0 %v694
    %1344 = vmatpush1.msra.mxu0 %v693
    %1345 = vmatprep.mubr.f32.mxu0 %v184
    %1346 = vmatmul.mubr.f32.gmra.mrb[0].mxu0 %v183
    %v1347 = vpop.f32.mrb[0].mxu0
    %v1348 = vadd.f32 %v1277, %v1347
    %v1349 = vpop.f32.mrb[0].mxu0
    %v1350 = vadd.f32 %v1279, %v1349
    %1351 = vdwg.mxu0
    %1352 = vmatprep.subr.mxu0 %v702
    %1353 = vmatpush1.msra.mxu0 %v701
    %1354 = vmatprep.subr.mxu0 %v710
    %1355 = vmatpush1.msra.mxu0 %v709
    %1356 = vmatprep.subr.mxu0 %v718
    %1357 = vmatpush1.msra.mxu0 %v717
    %1358 = vmatprep.subr.mxu0 %v726
    %1359 = vmatpush1.msra.mxu0 %v725
    %1360 = vmatprep.subr.mxu0 %v734
    %1361 = vmatpush1.msra.mxu0 %v733
    %1362 = vmatprep.subr.mxu0 %v742
    %1363 = vmatpush1.msra.mxu0 %v741
    %1364 = vmatprep.subr.mxu0 %v750
    %1365 = vmatpush1.msra.mxu0 %v749
    %1366 = vmatprep.subr.mxu0 %v758
    %1367 = vmatpush1.msra.mxu0 %v757
    %1368 = vmatprep.subr.mxu0 %v766
    %1369 = vmatpush1.msra.mxu0 %v765
    %1370 = vmatprep.subr.mxu0 %v774
    %1371 = vmatpush1.msra.mxu0 %v773
    %1372 = vmatprep.subr.mxu0 %v782
    %1373 = vmatpush1.msra.mxu0 %v781
    %1374 = vmatprep.subr.mxu0 %v790
    %1375 = vmatpush1.msra.mxu0 %v789
    %1376 = vmatprep.subr.mxu0 %v798
    %1377 = vmatpush1.msra.mxu0 %v797
    %1378 = vmatprep.subr.mxu0 %v806
    %1379 = vmatpush1.msra.mxu0 %v805
    %1380 = vmatprep.subr.mxu0 %v814
    %1381 = vmatpush1.msra.mxu0 %v813
    %1382 = vmatprep.subr.mxu0 %v822
    %1383 = vmatpush1.msra.mxu0 %v821
    %1384 = vmatprep.subr.mxu0 %v830
    %1385 = vmatpush1.msra.mxu0 %v829
    %1386 = vmatprep.subr.mxu0 %v838
    %1387 = vmatpush1.msra.mxu0 %v837
    %1388 = vmatprep.subr.mxu0 %v846
    %1389 = vmatpush1.msra.mxu0 %v845
    %1390 = vmatprep.subr.mxu0 %v854
    %1391 = vmatpush1.msra.mxu0 %v853
    %1392 = vmatprep.subr.mxu0 %v862
    %1393 = vmatpush1.msra.mxu0 %v861
    %1394 = vmatprep.subr.mxu0 %v870
    %1395 = vmatpush1.msra.mxu0 %v869
    %1396 = vmatprep.subr.mxu0 %v878
    %1397 = vmatpush1.msra.mxu0 %v877
    %1398 = vmatprep.subr.mxu0 %v886
    %1399 = vmatpush1.msra.mxu0 %v885
    %1400 = vmatprep.subr.mxu0 %v894
    %1401 = vmatpush1.msra.mxu0 %v893
    %1402 = vmatprep.subr.mxu0 %v902
    %1403 = vmatpush1.msra.mxu0 %v901
    %1404 = vmatprep.subr.mxu0 %v910
    %1405 = vmatpush1.msra.mxu0 %v909
    %1406 = vmatprep.subr.mxu0 %v918
    %1407 = vmatpush1.msra.mxu0 %v917
    %1408 = vmatprep.subr.mxu0 %v926
    %1409 = vmatpush1.msra.mxu0 %v925
    %1410 = vmatprep.subr.mxu0 %v934
    %1411 = vmatpush1.msra.mxu0 %v933
    %1412 = vmatprep.subr.mxu0 %v942
    %1413 = vmatpush1.msra.mxu0 %v941
    %1414 = vmatprep.subr.mxu0 %v950
    %1415 = vmatpush1.msra.mxu0 %v949
    %1416 = vmatprep.mubr.f32.mxu0 %v186
    %1417 = vmatmul.mubr.f32.gmra.mrb[0].mxu0 %v185
    %v1418 = vpop.f32.mrb[0].mxu0
    %v1419 = vadd.f32 %v1348, %v1418
    %v1420 = vpop.f32.mrb[0].mxu0
    %v1421 = vadd.f32 %v1350, %v1420
    %1422 = vdwg.mxu0
    %1423 = vmatprep.subr.mxu0 %v192
    %1424 = vmatpush1.msra.mxu0 %v191
    %1425 = vmatprep.subr.mxu0 %v200
    %1426 = vmatpush1.msra.mxu0 %v199
    %1427 = vmatprep.subr.mxu0 %v208
    %1428 = vmatpush1.msra.mxu0 %v207
    %1429 = vmatprep.subr.mxu0 %v216
    %1430 = vmatpush1.msra.mxu0 %v215
    %1431 = vmatprep.subr.mxu0 %v224
    %1432 = vmatpush1.msra.mxu0 %v223
    %1433 = vmatprep.subr.mxu0 %v232
    %1434 = vmatpush1.msra.mxu0 %v231
    %1435 = vmatprep.subr.mxu0 %v240
    %1436 = vmatpush1.msra.mxu0 %v239
    %1437 = vmatprep.subr.mxu0 %v248
    %1438 = vmatpush1.msra.mxu0 %v247
    %1439 = vmatprep.subr.mxu0 %v256
    %1440 = vmatpush1.msra.mxu0 %v255
    %1441 = vmatprep.subr.mxu0 %v264
    %1442 = vmatpush1.msra.mxu0 %v263
    %1443 = vmatprep.subr.mxu0 %v272
    %1444 = vmatpush1.msra.mxu0 %v271
    %1445 = vmatprep.subr.mxu0 %v280
    %1446 = vmatpush1.msra.mxu0 %v279
    %1447 = vmatprep.subr.mxu0 %v288
    %1448 = vmatpush1.msra.mxu0 %v287
    %1449 = vmatprep.subr.mxu0 %v296
    %1450 = vmatpush1.msra.mxu0 %v295
    %1451 = vmatprep.subr.mxu0 %v304
    %1452 = vmatpush1.msra.mxu0 %v303
    %1453 = vmatprep.subr.mxu0 %v312
    %1454 = vmatpush1.msra.mxu0 %v311
    %1455 = vmatprep.subr.mxu0 %v320
    %1456 = vmatpush1.msra.mxu0 %v319
    %1457 = vmatprep.subr.mxu0 %v328
    %1458 = vmatpush1.msra.mxu0 %v327
    %1459 = vmatprep.subr.mxu0 %v336
    %1460 = vmatpush1.msra.mxu0 %v335
    %1461 = vmatprep.subr.mxu0 %v344
    %1462 = vmatpush1.msra.mxu0 %v343
    %1463 = vmatprep.subr.mxu0 %v352
    %1464 = vmatpush1.msra.mxu0 %v351
    %1465 = vmatprep.subr.mxu0 %v360
    %1466 = vmatpush1.msra.mxu0 %v359
    %1467 = vmatprep.subr.mxu0 %v368
    %1468 = vmatpush1.msra.mxu0 %v367
    %1469 = vmatprep.subr.mxu0 %v376
    %1470 = vmatpush1.msra.mxu0 %v375
    %1471 = vmatprep.subr.mxu0 %v384
    %1472 = vmatpush1.msra.mxu0 %v383
    %1473 = vmatprep.subr.mxu0 %v392
    %1474 = vmatpush1.msra.mxu0 %v391
    %1475 = vmatprep.subr.mxu0 %v400
    %1476 = vmatpush1.msra.mxu0 %v399
    %1477 = vmatprep.subr.mxu0 %v408
    %1478 = vmatpush1.msra.mxu0 %v407
    %1479 = vmatprep.subr.mxu0 %v416
    %1480 = vmatpush1.msra.mxu0 %v415
    %1481 = vmatprep.subr.mxu0 %v424
    %1482 = vmatpush1.msra.mxu0 %v423
    %1483 = vmatprep.subr.mxu0 %v432
    %1484 = vmatpush1.msra.mxu0 %v431
    %1485 = vmatprep.subr.mxu0 %v440
    %1486 = vmatpush1.msra.mxu0 %v439
    %1487 = vmatprep.mubr.f32.mxu0 %v182
    %1488 = vmatmul.mubr.f32.gmra.mrb[0].mxu0 %v181
    %v1489 = vpop.f32.mrb[0].mxu0
    %v1490 = vadd.f32 %v976, %v1489
    %v1491 = vpop.f32.mrb[0].mxu0
    %v1492 = vadd.f32 %v980, %v1491
    %1493 = vdwg.mxu0
    %1494 = vmatprep.subr.mxu0 %v448
    %1495 = vmatpush1.msra.mxu0 %v447
    %1496 = vmatprep.subr.mxu0 %v456
    %1497 = vmatpush1.msra.mxu0 %v455
    %1498 = vmatprep.subr.mxu0 %v464
    %1499 = vmatpush1.msra.mxu0 %v463
    %1500 = vmatprep.subr.mxu0 %v472
    %1501 = vmatpush1.msra.mxu0 %v471
    %1502 = vmatprep.subr.mxu0 %v480
    %1503 = vmatpush1.msra.mxu0 %v479
    %1504 = vmatprep.subr.mxu0 %v488
    %1505 = vmatpush1.msra.mxu0 %v487
    %1506 = vmatprep.subr.mxu0 %v496
    %1507 = vmatpush1.msra.mxu0 %v495
    %1508 = vmatprep.subr.mxu0 %v504
    %1509 = vmatpush1.msra.mxu0 %v503
    %1510 = vmatprep.subr.mxu0 %v512
    %1511 = vmatpush1.msra.mxu0 %v511
    %1512 = vmatprep.subr.mxu0 %v520
    %1513 = vmatpush1.msra.mxu0 %v519
    %1514 = vmatprep.subr.mxu0 %v528
    %1515 = vmatpush1.msra.mxu0 %v527
    %1516 = vmatprep.subr.mxu0 %v536
    %1517 = vmatpush1.msra.mxu0 %v535
    %1518 = vmatprep.subr.mxu0 %v544
    %1519 = vmatpush1.msra.mxu0 %v543
    %1520 = vmatprep.subr.mxu0 %v552
    %1521 = vmatpush1.msra.mxu0 %v551
    %1522 = vmatprep.subr.mxu0 %v560
    %1523 = vmatpush1.msra.mxu0 %v559
    %1524 = vmatprep.subr.mxu0 %v568
    %1525 = vmatpush1.msra.mxu0 %v567
    %1526 = vmatprep.subr.mxu0 %v576
    %1527 = vmatpush1.msra.mxu0 %v575
    %1528 = vmatprep.subr.mxu0 %v584
    %1529 = vmatpush1.msra.mxu0 %v583
    %1530 = vmatprep.subr.mxu0 %v592
    %1531 = vmatpush1.msra.mxu0 %v591
    %1532 = vmatprep.subr.mxu0 %v600
    %1533 = vmatpush1.msra.mxu0 %v599
    %1534 = vmatprep.subr.mxu0 %v608
    %1535 = vmatpush1.msra.mxu0 %v607
    %1536 = vmatprep.subr.mxu0 %v616
    %1537 = vmatpush1.msra.mxu0 %v615
    %1538 = vmatprep.subr.mxu0 %v624
    %1539 = vmatpush1.msra.mxu0 %v623
    %1540 = vmatprep.subr.mxu0 %v632
    %1541 = vmatpush1.msra.mxu0 %v631
    %1542 = vmatprep.subr.mxu0 %v640
    %1543 = vmatpush1.msra.mxu0 %v639
    %1544 = vmatprep.subr.mxu0 %v648
    %1545 = vmatpush1.msra.mxu0 %v647
    %1546 = vmatprep.subr.mxu0 %v656
    %1547 = vmatpush1.msra.mxu0 %v655
    %1548 = vmatprep.subr.mxu0 %v664
    %1549 = vmatpush1.msra.mxu0 %v663
    %1550 = vmatprep.subr.mxu0 %v672
    %1551 = vmatpush1.msra.mxu0 %v671
    %1552 = vmatprep.subr.mxu0 %v680
    %1553 = vmatpush1.msra.mxu0 %v679
    %1554 = vmatprep.subr.mxu0 %v688
    %1555 = vmatpush1.msra.mxu0 %v687
    %1556 = vmatprep.subr.mxu0 %v696
    %1557 = vmatpush1.msra.mxu0 %v695
    %1558 = vmatprep.mubr.f32.mxu0 %v184
    %1559 = vmatmul.mubr.f32.gmra.mrb[0].mxu0 %v183
    %v1560 = vpop.f32.mrb[0].mxu0
    %v1561 = vadd.f32 %v1490, %v1560
    %v1562 = vpop.f32.mrb[0].mxu0
    %v1563 = vadd.f32 %v1492, %v1562
    %1564 = vdwg.mxu0
    %1565 = vmatprep.subr.mxu0 %v704
    %1566 = vmatpush1.msra.mxu0 %v703
    %1567 = vmatprep.subr.mxu0 %v712
    %1568 = vmatpush1.msra.mxu0 %v711
    %1569 = vmatprep.subr.mxu0 %v720
    %1570 = vmatpush1.msra.mxu0 %v719
    %1571 = vmatprep.subr.mxu0 %v728
    %1572 = vmatpush1.msra.mxu0 %v727
    %1573 = vmatprep.subr.mxu0 %v736
    %1574 = vmatpush1.msra.mxu0 %v735
    %1575 = vmatprep.subr.mxu0 %v744
    %1576 = vmatpush1.msra.mxu0 %v743
    %1577 = vmatprep.subr.mxu0 %v752
    %1578 = vmatpush1.msra.mxu0 %v751
    %1579 = vmatprep.subr.mxu0 %v760
    %1580 = vmatpush1.msra.mxu0 %v759
    %1581 = vmatprep.subr.mxu0 %v768
    %1582 = vmatpush1.msra.mxu0 %v767
    %1583 = vmatprep.subr.mxu0 %v776
    %1584 = vmatpush1.msra.mxu0 %v775
    %1585 = vmatprep.subr.mxu0 %v784
    %1586 = vmatpush1.msra.mxu0 %v783
    %1587 = vmatprep.subr.mxu0 %v792
    %1588 = vmatpush1.msra.mxu0 %v791
    %1589 = vmatprep.subr.mxu0 %v800
    %1590 = vmatpush1.msra.mxu0 %v799
    %1591 = vmatprep.subr.mxu0 %v808
    %1592 = vmatpush1.msra.mxu0 %v807
    %1593 = vmatprep.subr.mxu0 %v816
    %1594 = vmatpush1.msra.mxu0 %v815
    %1595 = vmatprep.subr.mxu0 %v824
    %1596 = vmatpush1.msra.mxu0 %v823
    %1597 = vmatprep.subr.mxu0 %v832
    %1598 = vmatpush1.msra.mxu0 %v831
    %1599 = vmatprep.subr.mxu0 %v840
    %1600 = vmatpush1.msra.mxu0 %v839
    %1601 = vmatprep.subr.mxu0 %v848
    %1602 = vmatpush1.msra.mxu0 %v847
    %1603 = vmatprep.subr.mxu0 %v856
    %1604 = vmatpush1.msra.mxu0 %v855
    %1605 = vmatprep.subr.mxu0 %v864
    %1606 = vmatpush1.msra.mxu0 %v863
    %1607 = vmatprep.subr.mxu0 %v872
    %1608 = vmatpush1.msra.mxu0 %v871
    %1609 = vmatprep.subr.mxu0 %v880
    %1610 = vmatpush1.msra.mxu0 %v879
    %1611 = vmatprep.subr.mxu0 %v888
    %1612 = vmatpush1.msra.mxu0 %v887
    %1613 = vmatprep.subr.mxu0 %v896
    %1614 = vmatpush1.msra.mxu0 %v895
    %1615 = vmatprep.subr.mxu0 %v904
    %1616 = vmatpush1.msra.mxu0 %v903
    %1617 = vmatprep.subr.mxu0 %v912
    %1618 = vmatpush1.msra.mxu0 %v911
    %1619 = vmatprep.subr.mxu0 %v920
    %1620 = vmatpush1.msra.mxu0 %v919
    %1621 = vmatprep.subr.mxu0 %v928
    %1622 = vmatpush1.msra.mxu0 %v927
    %1623 = vmatprep.subr.mxu0 %v936
    %1624 = vmatpush1.msra.mxu0 %v935
    %1625 = vmatprep.subr.mxu0 %v944
    %1626 = vmatpush1.msra.mxu0 %v943
    %1627 = vmatprep.subr.mxu0 %v952
    %1628 = vmatpush1.msra.mxu0 %v951
    %1629 = vmatprep.mubr.f32.mxu0 %v186
    %1630 = vmatmul.mubr.f32.gmra.mrb[0].mxu0 %v185
    %v1631 = vpop.f32.mrb[0].mxu0
    %v1632 = vadd.f32 %v1561, %v1631
    %v1633 = vpop.f32.mrb[0].mxu0
    %v1634 = vadd.f32 %v1563, %v1633
    %1635 = vdwg.mxu0
    %1636 = vmatprep.subr.mxu0 %v194
    %1637 = vmatpush1.msra.mxu0 %v193
    %1638 = vmatprep.subr.mxu0 %v202
    %1639 = vmatpush1.msra.mxu0 %v201
    %1640 = vmatprep.subr.mxu0 %v210
    %1641 = vmatpush1.msra.mxu0 %v209
    %1642 = vmatprep.subr.mxu0 %v218
    %1643 = vmatpush1.msra.mxu0 %v217
    %1644 = vmatprep.subr.mxu0 %v226
    %1645 = vmatpush1.msra.mxu0 %v225
    %1646 = vmatprep.subr.mxu0 %v234
    %1647 = vmatpush1.msra.mxu0 %v233
    %1648 = vmatprep.subr.mxu0 %v242
    %1649 = vmatpush1.msra.mxu0 %v241
    %1650 = vmatprep.subr.mxu0 %v250
    %1651 = vmatpush1.msra.mxu0 %v249
    %1652 = vmatprep.subr.mxu0 %v258
    %1653 = vmatpush1.msra.mxu0 %v257
    %1654 = vmatprep.subr.mxu0 %v266
    %1655 = vmatpush1.msra.mxu0 %v265
    %1656 = vmatprep.subr.mxu0 %v274
    %1657 = vmatpush1.msra.mxu0 %v273
    %1658 = vmatprep.subr.mxu0 %v282
    %1659 = vmatpush1.msra.mxu0 %v281
    %1660 = vmatprep.subr.mxu0 %v290
    %1661 = vmatpush1.msra.mxu0 %v289
    %1662 = vmatprep.subr.mxu0 %v298
    %1663 = vmatpush1.msra.mxu0 %v297
    %1664 = vmatprep.subr.mxu0 %v306
    %1665 = vmatpush1.msra.mxu0 %v305
    %1666 = vmatprep.subr.mxu0 %v314
    %1667 = vmatpush1.msra.mxu0 %v313
    %1668 = vmatprep.subr.mxu0 %v322
    %1669 = vmatpush1.msra.mxu0 %v321
    %1670 = vmatprep.subr.mxu0 %v330
    %1671 = vmatpush1.msra.mxu0 %v329
    %1672 = vmatprep.subr.mxu0 %v338
    %1673 = vmatpush1.msra.mxu0 %v337
    %1674 = vmatprep.subr.mxu0 %v346
    %1675 = vmatpush1.msra.mxu0 %v345
    %1676 = vmatprep.subr.mxu0 %v354
    %1677 = vmatpush1.msra.mxu0 %v353
    %1678 = vmatprep.subr.mxu0 %v362
    %1679 = vmatpush1.msra.mxu0 %v361
    %1680 = vmatprep.subr.mxu0 %v370
    %1681 = vmatpush1.msra.mxu0 %v369
    %1682 = vmatprep.subr.mxu0 %v378
    %1683 = vmatpush1.msra.mxu0 %v377
    %1684 = vmatprep.subr.mxu0 %v386
    %1685 = vmatpush1.msra.mxu0 %v385
    %1686 = vmatprep.subr.mxu0 %v394
    %1687 = vmatpush1.msra.mxu0 %v393
    %1688 = vmatprep.subr.mxu0 %v402
    %1689 = vmatpush1.msra.mxu0 %v401
    %1690 = vmatprep.subr.mxu0 %v410
    %1691 = vmatpush1.msra.mxu0 %v409
    %1692 = vmatprep.subr.mxu0 %v418
    %1693 = vmatpush1.msra.mxu0 %v417
    %1694 = vmatprep.subr.mxu0 %v426
    %1695 = vmatpush1.msra.mxu0 %v425
    %1696 = vmatprep.subr.mxu0 %v434
    %1697 = vmatpush1.msra.mxu0 %v433
    %1698 = vmatprep.subr.mxu0 %v442
    %1699 = vmatpush1.msra.mxu0 %v441
    %1700 = vmatprep.mubr.f32.mxu0 %v182
    %1701 = vmatmul.mubr.f32.gmra.mrb[0].mxu0 %v181
    %v1702 = vpop.f32.mrb[0].mxu0
    %v1703 = vadd.f32 %v984, %v1702
    %v1704 = vpop.f32.mrb[0].mxu0
    %v1705 = vadd.f32 %v988, %v1704
    %1706 = vdwg.mxu0
    %1707 = vmatprep.subr.mxu0 %v450
    %1708 = vmatpush1.msra.mxu0 %v449
    %1709 = vmatprep.subr.mxu0 %v458
    %1710 = vmatpush1.msra.mxu0 %v457
    %1711 = vmatprep.subr.mxu0 %v466
    %1712 = vmatpush1.msra.mxu0 %v465
    %1713 = vmatprep.subr.mxu0 %v474
    %1714 = vmatpush1.msra.mxu0 %v473
    %1715 = vmatprep.subr.mxu0 %v482
    %1716 = vmatpush1.msra.mxu0 %v481
    %1717 = vmatprep.subr.mxu0 %v490
    %1718 = vmatpush1.msra.mxu0 %v489
    %1719 = vmatprep.subr.mxu0 %v498
    %1720 = vmatpush1.msra.mxu0 %v497
    %1721 = vmatprep.subr.mxu0 %v506
    %1722 = vmatpush1.msra.mxu0 %v505
    %1723 = vmatprep.subr.mxu0 %v514
    %1724 = vmatpush1.msra.mxu0 %v513
    %1725 = vmatprep.subr.mxu0 %v522
    %1726 = vmatpush1.msra.mxu0 %v521
    %1727 = vmatprep.subr.mxu0 %v530
    %1728 = vmatpush1.msra.mxu0 %v529
    %1729 = vmatprep.subr.mxu0 %v538
    %1730 = vmatpush1.msra.mxu0 %v537
    %1731 = vmatprep.subr.mxu0 %v546
    %1732 = vmatpush1.msra.mxu0 %v545
    %1733 = vmatprep.subr.mxu0 %v554
    %1734 = vmatpush1.msra.mxu0 %v553
    %1735 = vmatprep.subr.mxu0 %v562
    %1736 = vmatpush1.msra.mxu0 %v561
    %1737 = vmatprep.subr.mxu0 %v570
    %1738 = vmatpush1.msra.mxu0 %v569
    %1739 = vmatprep.subr.mxu0 %v578
    %1740 = vmatpush1.msra.mxu0 %v577
    %1741 = vmatprep.subr.mxu0 %v586
    %1742 = vmatpush1.msra.mxu0 %v585
    %1743 = vmatprep.subr.mxu0 %v594
    %1744 = vmatpush1.msra.mxu0 %v593
    %1745 = vmatprep.subr.mxu0 %v602
    %1746 = vmatpush1.msra.mxu0 %v601
    %1747 = vmatprep.subr.mxu0 %v610
    %1748 = vmatpush1.msra.mxu0 %v609
    %1749 = vmatprep.subr.mxu0 %v618
    %1750 = vmatpush1.msra.mxu0 %v617
    %1751 = vmatprep.subr.mxu0 %v626
    %1752 = vmatpush1.msra.mxu0 %v625
    %1753 = vmatprep.subr.mxu0 %v634
    %1754 = vmatpush1.msra.mxu0 %v633
    %1755 = vmatprep.subr.mxu0 %v642
    %1756 = vmatpush1.msra.mxu0 %v641
    %1757 = vmatprep.subr.mxu0 %v650
    %1758 = vmatpush1.msra.mxu0 %v649
    %1759 = vmatprep.subr.mxu0 %v658
    %1760 = vmatpush1.msra.mxu0 %v657
    %1761 = vmatprep.subr.mxu0 %v666
    %1762 = vmatpush1.msra.mxu0 %v665
    %1763 = vmatprep.subr.mxu0 %v674
    %1764 = vmatpush1.msra.mxu0 %v673
    %1765 = vmatprep.subr.mxu0 %v682
    %1766 = vmatpush1.msra.mxu0 %v681
    %1767 = vmatprep.subr.mxu0 %v690
    %1768 = vmatpush1.msra.mxu0 %v689
    %1769 = vmatprep.subr.mxu0 %v698
    %1770 = vmatpush1.msra.mxu0 %v697
    %1771 = vmatprep.mubr.f32.mxu0 %v184
    %1772 = vmatmul.mubr.f32.gmra.mrb[0].mxu0 %v183
    %v1773 = vpop.f32.mrb[0].mxu0
    %v1774 = vadd.f32 %v1703, %v1773
    %v1775 = vpop.f32.mrb[0].mxu0
    %v1776 = vadd.f32 %v1705, %v1775
    %1777 = vdwg.mxu0
    %1778 = vmatprep.subr.mxu0 %v706
    %1779 = vmatpush1.msra.mxu0 %v705
    %1780 = vmatprep.subr.mxu0 %v714
    %1781 = vmatpush1.msra.mxu0 %v713
    %1782 = vmatprep.subr.mxu0 %v722
    %1783 = vmatpush1.msra.mxu0 %v721
    %1784 = vmatprep.subr.mxu0 %v730
    %1785 = vmatpush1.msra.mxu0 %v729
    %1786 = vmatprep.subr.mxu0 %v738
    %1787 = vmatpush1.msra.mxu0 %v737
    %1788 = vmatprep.subr.mxu0 %v746
    %1789 = vmatpush1.msra.mxu0 %v745
    %1790 = vmatprep.subr.mxu0 %v754
    %1791 = vmatpush1.msra.mxu0 %v753
    %1792 = vmatprep.subr.mxu0 %v762
    %1793 = vmatpush1.msra.mxu0 %v761
    %1794 = vmatprep.subr.mxu0 %v770
    %1795 = vmatpush1.msra.mxu0 %v769
    %1796 = vmatprep.subr.mxu0 %v778
    %1797 = vmatpush1.msra.mxu0 %v777
    %1798 = vmatprep.subr.mxu0 %v786
    %1799 = vmatpush1.msra.mxu0 %v785
    %1800 = vmatprep.subr.mxu0 %v794
    %1801 = vmatpush1.msra.mxu0 %v793
    %1802 = vmatprep.subr.mxu0 %v802
    %1803 = vmatpush1.msra.mxu0 %v801
    %1804 = vmatprep.subr.mxu0 %v810
    %1805 = vmatpush1.msra.mxu0 %v809
    %1806 = vmatprep.subr.mxu0 %v818
    %1807 = vmatpush1.msra.mxu0 %v817
    %1808 = vmatprep.subr.mxu0 %v826
    %1809 = vmatpush1.msra.mxu0 %v825
    %1810 = vmatprep.subr.mxu0 %v834
    %1811 = vmatpush1.msra.mxu0 %v833
    %1812 = vmatprep.subr.mxu0 %v842
    %1813 = vmatpush1.msra.mxu0 %v841
    %1814 = vmatprep.subr.mxu0 %v850
    %1815 = vmatpush1.msra.mxu0 %v849
    %1816 = vmatprep.subr.mxu0 %v858
    %1817 = vmatpush1.msra.mxu0 %v857
    %1818 = vmatprep.subr.mxu0 %v866
    %1819 = vmatpush1.msra.mxu0 %v865
    %1820 = vmatprep.subr.mxu0 %v874
    %1821 = vmatpush1.msra.mxu0 %v873
    %1822 = vmatprep.subr.mxu0 %v882
    %1823 = vmatpush1.msra.mxu0 %v881
    %1824 = vmatprep.subr.mxu0 %v890
    %1825 = vmatpush1.msra.mxu0 %v889
    %1826 = vmatprep.subr.mxu0 %v898
    %1827 = vmatpush1.msra.mxu0 %v897
    %1828 = vmatprep.subr.mxu0 %v906
    %1829 = vmatpush1.msra.mxu0 %v905
    %1830 = vmatprep.subr.mxu0 %v914
    %1831 = vmatpush1.msra.mxu0 %v913
    %1832 = vmatprep.subr.mxu0 %v922
    %1833 = vmatpush1.msra.mxu0 %v921
    %1834 = vmatprep.subr.mxu0 %v930
    %1835 = vmatpush1.msra.mxu0 %v929
    %1836 = vmatprep.subr.mxu0 %v938
    %1837 = vmatpush1.msra.mxu0 %v937
    %1838 = vmatprep.subr.mxu0 %v946
    %1839 = vmatpush1.msra.mxu0 %v945
    %1840 = vmatprep.subr.mxu0 %v954
    %1841 = vmatpush1.msra.mxu0 %v953
    %1842 = vmatprep.mubr.f32.mxu0 %v186
    %1843 = vmatmul.mubr.f32.gmra.mrb[0].mxu0 %v185
    %v1844 = vpop.f32.mrb[0].mxu0
    %v1845 = vadd.f32 %v1774, %v1844
    %v1846 = vpop.f32.mrb[0].mxu0
    %v1847 = vadd.f32 %v1776, %v1846
    %1848 = vdwg.mxu0
    %vm1849 = vcmp.ge.f32.partialorder %v1206, 0.0
    %vm1850 = vcmp.ge.f32.partialorder %v1208, 0.0
    %vm1851 = vcmp.ge.f32.partialorder %v1419, 0.0
    %vm1852 = vcmp.ge.f32.partialorder %v1421, 0.0
    %vm1853 = vcmp.ge.f32.partialorder %v1632, 0.0
    %vm1854 = vcmp.ge.f32.partialorder %v1634, 0.0
    %vm1855 = vcmp.ge.f32.partialorder %v1845, 0.0
    %vm1856 = vcmp.ge.f32.partialorder %v1847, 0.0
    %v1857 = vmul.f32 %v1206, 0.01
    %v1858 = vmul.f32 %v1208, 0.01
    %v1859 = vmul.f32 %v1419, 0.01
    %v1860 = vmul.f32 %v1421, 0.01
    %v1861 = vmul.f32 %v1632, 0.01
    %v1862 = vmul.f32 %v1634, 0.01
    %v1863 = vmul.f32 %v1845, 0.01
    %v1864 = vmul.f32 %v1847, 0.01
    %v1865 = vsel %vm1849, %v1206, %v1857
    %v1866 = vsel %vm1850, %v1208, %v1858
    %v1867 = vsel %vm1851, %v1419, %v1859
    %v1868 = vsel %vm1852, %v1421, %v1860
    %v1869 = vsel %vm1853, %v1632, %v1861
    %v1870 = vsel %vm1854, %v1634, %v1862
    %v1871 = vsel %vm1855, %v1845, %v1863
    %v1872 = vsel %vm1856, %v1847, %v1864
    %v1873 = vld [vmem:[#allocation6] sm:$0xff]
    %v1874 = vld [vmem:[#allocation6 + $0x8] sm:$0xff]
    %v1875 = vld [vmem:[#allocation6 + $0x10] sm:$0xff]
    %v1876 = vld [vmem:[#allocation6 + $0x18] sm:$0xff]
    %v1877 = vld [vmem:[#allocation6 + $0x20] sm:$0xff]
    %v1878 = vld [vmem:[#allocation6 + $0x28] sm:$0xff]
    %v1879 = vld [vmem:[#allocation6 + $0x30] sm:$0xff]
    %v1880 = vld [vmem:[#allocation6 + $0x38] sm:$0xff]
    %v1881 = vld [vmem:[#allocation6 + $0x40] sm:$0xff]
    %v1882 = vld [vmem:[#allocation6 + $0x48] sm:$0xff]
    %v1883 = vld [vmem:[#allocation6 + $0x50] sm:$0xff]
    %v1884 = vld [vmem:[#allocation6 + $0x58] sm:$0xff]
    %v1885 = vld [vmem:[#allocation6 + $0x60] sm:$0xff]
    %v1886 = vld [vmem:[#allocation6 + $0x68] sm:$0xff]
    %v1887 = vld [vmem:[#allocation6 + $0x70] sm:$0xff]
    %v1888 = vld [vmem:[#allocation6 + $0x78] sm:$0xff]
    %v1889 = vld [vmem:[#allocation6 + $0x80] sm:$0xff]
    %v1890 = vld [vmem:[#allocation6 + $0x88] sm:$0xff]
    %v1891 = vld [vmem:[#allocation6 + $0x90] sm:$0xff]
    %v1892 = vld [vmem:[#allocation6 + $0x98] sm:$0xff]
    %v1893 = vld [vmem:[#allocation6 + $0xa0] sm:$0xff]
    %v1894 = vld [vmem:[#allocation6 + $0xa8] sm:$0xff]
    %v1895 = vld [vmem:[#allocation6 + $0xb0] sm:$0xff]
    %v1896 = vld [vmem:[#allocation6 + $0xb8] sm:$0xff]
    %v1897 = vld [vmem:[#allocation6 + $0xc0] sm:$0xff]
    %v1898 = vld [vmem:[#allocation6 + $0xc8] sm:$0xff]
    %v1899 = vld [vmem:[#allocation6 + $0xd0] sm:$0xff]
    %v1900 = vld [vmem:[#allocation6 + $0xd8] sm:$0xff]
    %v1901 = vld [vmem:[#allocation6 + $0xe0] sm:$0xff]
    %v1902 = vld [vmem:[#allocation6 + $0xe8] sm:$0xff]
    %v1903 = vld [vmem:[#allocation6 + $0xf0] sm:$0xff]
    %v1904 = vld [vmem:[#allocation6 + $0xf8] sm:$0xff]
    %v1905 = vld [vmem:[#allocation6 + $0x100] sm:$0xff]
    %v1906 = vld [vmem:[#allocation6 + $0x108] sm:$0xff]
    %v1907 = vld [vmem:[#allocation6 + $0x110] sm:$0xff]
    %v1908 = vld [vmem:[#allocation6 + $0x118] sm:$0xff]
    %v1909 = vld [vmem:[#allocation6 + $0x120] sm:$0xff]
    %v1910 = vld [vmem:[#allocation6 + $0x128] sm:$0xff]
    %v1911 = vld [vmem:[#allocation6 + $0x130] sm:$0xff]
    %v1912 = vld [vmem:[#allocation6 + $0x138] sm:$0xff]
    %v1913 = vld [vmem:[#allocation6 + $0x140] sm:$0xff]
    %v1914 = vld [vmem:[#allocation6 + $0x148] sm:$0xff]
    %v1915 = vld [vmem:[#allocation6 + $0x150] sm:$0xff]
    %v1916 = vld [vmem:[#allocation6 + $0x158] sm:$0xff]
    %v1917 = vld [vmem:[#allocation6 + $0x160] sm:$0xff]
    %v1918 = vld [vmem:[#allocation6 + $0x168] sm:$0xff]
    %v1919 = vld [vmem:[#allocation6 + $0x170] sm:$0xff]
    %v1920 = vld [vmem:[#allocation6 + $0x178] sm:$0xff]
    %v1921 = vld [vmem:[#allocation6 + $0x180] sm:$0xff]
    %v1922 = vld [vmem:[#allocation6 + $0x188] sm:$0xff]
    %v1923 = vld [vmem:[#allocation6 + $0x190] sm:$0xff]
    %v1924 = vld [vmem:[#allocation6 + $0x198] sm:$0xff]
    %v1925 = vld [vmem:[#allocation6 + $0x1a0] sm:$0xff]
    %v1926 = vld [vmem:[#allocation6 + $0x1a8] sm:$0xff]
    %v1927 = vld [vmem:[#allocation6 + $0x1b0] sm:$0xff]
    %v1928 = vld [vmem:[#allocation6 + $0x1b8] sm:$0xff]
    %v1929 = vld [vmem:[#allocation6 + $0x1c0] sm:$0xff]
    %v1930 = vld [vmem:[#allocation6 + $0x1c8] sm:$0xff]
    %v1931 = vld [vmem:[#allocation6 + $0x1d0] sm:$0xff]
    %v1932 = vld [vmem:[#allocation6 + $0x1d8] sm:$0xff]
    %v1933 = vld [vmem:[#allocation6 + $0x1e0] sm:$0xff]
    %v1934 = vld [vmem:[#allocation6 + $0x1e8] sm:$0xff]
    %v1935 = vld [vmem:[#allocation6 + $0x1f0] sm:$0xff]
    %v1936 = vld [vmem:[#allocation6 + $0x1f8] sm:$0xff]
    %v1937 = vld [vmem:[#allocation6 + $0x200] sm:$0xff]
    %v1938 = vld [vmem:[#allocation6 + $0x208] sm:$0xff]
    %v1939 = vld [vmem:[#allocation6 + $0x210] sm:$0xff]
    %v1940 = vld [vmem:[#allocation6 + $0x218] sm:$0xff]
    %v1941 = vld [vmem:[#allocation6 + $0x220] sm:$0xff]
    %v1942 = vld [vmem:[#allocation6 + $0x228] sm:$0xff]
    %v1943 = vld [vmem:[#allocation6 + $0x230] sm:$0xff]
    %v1944 = vld [vmem:[#allocation6 + $0x238] sm:$0xff]
    %v1945 = vld [vmem:[#allocation6 + $0x240] sm:$0xff]
    %v1946 = vld [vmem:[#allocation6 + $0x248] sm:$0xff]
    %v1947 = vld [vmem:[#allocation6 + $0x250] sm:$0xff]
    %v1948 = vld [vmem:[#allocation6 + $0x258] sm:$0xff]
    %v1949 = vld [vmem:[#allocation6 + $0x260] sm:$0xff]
    %v1950 = vld [vmem:[#allocation6 + $0x268] sm:$0xff]
    %v1951 = vld [vmem:[#allocation6 + $0x270] sm:$0xff]
    %v1952 = vld [vmem:[#allocation6 + $0x278] sm:$0xff]
    %v1953 = vld [vmem:[#allocation6 + $0x280] sm:$0xff]
    %v1954 = vld [vmem:[#allocation6 + $0x288] sm:$0xff]
    %v1955 = vld [vmem:[#allocation6 + $0x290] sm:$0xff]
    %v1956 = vld [vmem:[#allocation6 + $0x298] sm:$0xff]
    %v1957 = vld [vmem:[#allocation6 + $0x2a0] sm:$0xff]
    %v1958 = vld [vmem:[#allocation6 + $0x2a8] sm:$0xff]
    %v1959 = vld [vmem:[#allocation6 + $0x2b0] sm:$0xff]
    %v1960 = vld [vmem:[#allocation6 + $0x2b8] sm:$0xff]
    %v1961 = vld [vmem:[#allocation6 + $0x2c0] sm:$0xff]
    %v1962 = vld [vmem:[#allocation6 + $0x2c8] sm:$0xff]
    %v1963 = vld [vmem:[#allocation6 + $0x2d0] sm:$0xff]
    %v1964 = vld [vmem:[#allocation6 + $0x2d8] sm:$0xff]
    %v1965 = vld [vmem:[#allocation6 + $0x2e0] sm:$0xff]
    %v1966 = vld [vmem:[#allocation6 + $0x2e8] sm:$0xff]
    %v1967 = vld [vmem:[#allocation6 + $0x2f0] sm:$0xff]
    %v1968 = vld [vmem:[#allocation6 + $0x2f8] sm:$0xff]
    %v1969 = vld [vmem:[#allocation6 + $0x300] sm:$0xff]
    %v1970 = vld [vmem:[#allocation6 + $0x308] sm:$0xff]
    %v1971 = vld [vmem:[#allocation6 + $0x310] sm:$0xff]
    %v1972 = vld [vmem:[#allocation6 + $0x318] sm:$0xff]
    %v1973 = vld [vmem:[#allocation6 + $0x320] sm:$0xff]
    %v1974 = vld [vmem:[#allocation6 + $0x328] sm:$0xff]
    %v1975 = vld [vmem:[#allocation6 + $0x330] sm:$0xff]
    %v1976 = vld [vmem:[#allocation6 + $0x338] sm:$0xff]
    %v1977 = vld [vmem:[#allocation6 + $0x340] sm:$0xff]
    %v1978 = vld [vmem:[#allocation6 + $0x348] sm:$0xff]
    %v1979 = vld [vmem:[#allocation6 + $0x350] sm:$0xff]
    %v1980 = vld [vmem:[#allocation6 + $0x358] sm:$0xff]
    %v1981 = vld [vmem:[#allocation6 + $0x360] sm:$0xff]
    %v1982 = vld [vmem:[#allocation6 + $0x368] sm:$0xff]
    %v1983 = vld [vmem:[#allocation6 + $0x370] sm:$0xff]
    %v1984 = vld [vmem:[#allocation6 + $0x378] sm:$0xff]
    %v1985 = vld [vmem:[#allocation6 + $0x380] sm:$0xff]
    %v1986 = vld [vmem:[#allocation6 + $0x388] sm:$0xff]
    %v1987 = vld [vmem:[#allocation6 + $0x390] sm:$0xff]
    %v1988 = vld [vmem:[#allocation6 + $0x398] sm:$0xff]
    %v1989 = vld [vmem:[#allocation6 + $0x3a0] sm:$0xff]
    %v1990 = vld [vmem:[#allocation6 + $0x3a8] sm:$0xff]
    %v1991 = vld [vmem:[#allocation6 + $0x3b0] sm:$0xff]
    %v1992 = vld [vmem:[#allocation6 + $0x3b8] sm:$0xff]
    %v1993 = vld [vmem:[#allocation6 + $0x3c0] sm:$0xff]
    %v1994 = vld [vmem:[#allocation6 + $0x3c8] sm:$0xff]
    %v1995 = vld [vmem:[#allocation6 + $0x3d0] sm:$0xff]
    %v1996 = vld [vmem:[#allocation6 + $0x3d8] sm:$0xff]
    %v1997 = vld [vmem:[#allocation6 + $0x3e0] sm:$0xff]
    %v1998 = vld [vmem:[#allocation6 + $0x3e8] sm:$0xff]
    %v1999 = vld [vmem:[#allocation6 + $0x3f0] sm:$0xff]
    %v2000 = vld [vmem:[#allocation6 + $0x3f8] sm:$0xff]
    %v2001 = vld [vmem:[#allocation6 + $0x400] sm:$0xff]
    %v2002 = vld [vmem:[#allocation6 + $0x408] sm:$0xff]
    %v2003 = vld [vmem:[#allocation6 + $0x410] sm:$0xff]
    %v2004 = vld [vmem:[#allocation6 + $0x418] sm:$0xff]
    %v2005 = vld [vmem:[#allocation6 + $0x420] sm:$0xff]
    %v2006 = vld [vmem:[#allocation6 + $0x428] sm:$0xff]
    %v2007 = vld [vmem:[#allocation6 + $0x430] sm:$0xff]
    %v2008 = vld [vmem:[#allocation6 + $0x438] sm:$0xff]
    %v2009 = vld [vmem:[#allocation6 + $0x440] sm:$0xff]
    %v2010 = vld [vmem:[#allocation6 + $0x448] sm:$0xff]
    %v2011 = vld [vmem:[#allocation6 + $0x450] sm:$0xff]
    %v2012 = vld [vmem:[#allocation6 + $0x458] sm:$0xff]
    %v2013 = vld [vmem:[#allocation6 + $0x460] sm:$0xff]
    %v2014 = vld [vmem:[#allocation6 + $0x468] sm:$0xff]
    %v2015 = vld [vmem:[#allocation6 + $0x470] sm:$0xff]
    %v2016 = vld [vmem:[#allocation6 + $0x478] sm:$0xff]
    %v2017 = vld [vmem:[#allocation6 + $0x480] sm:$0xff]
    %v2018 = vld [vmem:[#allocation6 + $0x488] sm:$0xff]
    %v2019 = vld [vmem:[#allocation6 + $0x490] sm:$0xff]
    %v2020 = vld [vmem:[#allocation6 + $0x498] sm:$0xff]
    %v2021 = vld [vmem:[#allocation6 + $0x4a0] sm:$0xff]
    %v2022 = vld [vmem:[#allocation6 + $0x4a8] sm:$0xff]
    %v2023 = vld [vmem:[#allocation6 + $0x4b0] sm:$0xff]
    %v2024 = vld [vmem:[#allocation6 + $0x4b8] sm:$0xff]
    %v2025 = vld [vmem:[#allocation6 + $0x4c0] sm:$0xff]
    %v2026 = vld [vmem:[#allocation6 + $0x4c8] sm:$0xff]
    %v2027 = vld [vmem:[#allocation6 + $0x4d0] sm:$0xff]
    %v2028 = vld [vmem:[#allocation6 + $0x4d8] sm:$0xff]
    %v2029 = vld [vmem:[#allocation6 + $0x4e0] sm:$0xff]
    %v2030 = vld [vmem:[#allocation6 + $0x4e8] sm:$0xff]
    %v2031 = vld [vmem:[#allocation6 + $0x4f0] sm:$0xff]
    %v2032 = vld [vmem:[#allocation6 + $0x4f8] sm:$0xff]
    %v2033 = vld [vmem:[#allocation6 + $0x500] sm:$0xff]
    %v2034 = vld [vmem:[#allocation6 + $0x508] sm:$0xff]
    %v2035 = vld [vmem:[#allocation6 + $0x510] sm:$0xff]
    %v2036 = vld [vmem:[#allocation6 + $0x518] sm:$0xff]
    %v2037 = vld [vmem:[#allocation6 + $0x520] sm:$0xff]
    %v2038 = vld [vmem:[#allocation6 + $0x528] sm:$0xff]
    %v2039 = vld [vmem:[#allocation6 + $0x530] sm:$0xff]
    %v2040 = vld [vmem:[#allocation6 + $0x538] sm:$0xff]
    %v2041 = vld [vmem:[#allocation6 + $0x540] sm:$0xff]
    %v2042 = vld [vmem:[#allocation6 + $0x548] sm:$0xff]
    %v2043 = vld [vmem:[#allocation6 + $0x550] sm:$0xff]
    %v2044 = vld [vmem:[#allocation6 + $0x558] sm:$0xff]
    %v2045 = vld [vmem:[#allocation6 + $0x560] sm:$0xff]
    %v2046 = vld [vmem:[#allocation6 + $0x568] sm:$0xff]
    %v2047 = vld [vmem:[#allocation6 + $0x570] sm:$0xff]
    %v2048 = vld [vmem:[#allocation6 + $0x578] sm:$0xff]
    %v2049 = vld [vmem:[#allocation6 + $0x580] sm:$0xff]
    %v2050 = vld [vmem:[#allocation6 + $0x588] sm:$0xff]
    %v2051 = vld [vmem:[#allocation6 + $0x590] sm:$0xff]
    %v2052 = vld [vmem:[#allocation6 + $0x598] sm:$0xff]
    %v2053 = vld [vmem:[#allocation6 + $0x5a0] sm:$0xff]
    %v2054 = vld [vmem:[#allocation6 + $0x5a8] sm:$0xff]
    %v2055 = vld [vmem:[#allocation6 + $0x5b0] sm:$0xff]
    %v2056 = vld [vmem:[#allocation6 + $0x5b8] sm:$0xff]
    %v2057 = vld [vmem:[#allocation6 + $0x5c0] sm:$0xff]
    %v2058 = vld [vmem:[#allocation6 + $0x5c8] sm:$0xff]
    %v2059 = vld [vmem:[#allocation6 + $0x5d0] sm:$0xff]
    %v2060 = vld [vmem:[#allocation6 + $0x5d8] sm:$0xff]
    %v2061 = vld [vmem:[#allocation6 + $0x5e0] sm:$0xff]
    %v2062 = vld [vmem:[#allocation6 + $0x5e8] sm:$0xff]
    %v2063 = vld [vmem:[#allocation6 + $0x5f0] sm:$0xff]
    %v2064 = vld [vmem:[#allocation6 + $0x5f8] sm:$0xff]
    %v2065 = vld [vmem:[#allocation6 + $0x600] sm:$0xff]
    %v2066 = vld [vmem:[#allocation6 + $0x608] sm:$0xff]
    %v2067 = vld [vmem:[#allocation6 + $0x610] sm:$0xff]
    %v2068 = vld [vmem:[#allocation6 + $0x618] sm:$0xff]
    %v2069 = vld [vmem:[#allocation6 + $0x620] sm:$0xff]
    %v2070 = vld [vmem:[#allocation6 + $0x628] sm:$0xff]
    %v2071 = vld [vmem:[#allocation6 + $0x630] sm:$0xff]
    %v2072 = vld [vmem:[#allocation6 + $0x638] sm:$0xff]
    %v2073 = vld [vmem:[#allocation6 + $0x640] sm:$0xff]
    %v2074 = vld [vmem:[#allocation6 + $0x648] sm:$0xff]
    %v2075 = vld [vmem:[#allocation6 + $0x650] sm:$0xff]
    %v2076 = vld [vmem:[#allocation6 + $0x658] sm:$0xff]
    %v2077 = vld [vmem:[#allocation6 + $0x660] sm:$0xff]
    %v2078 = vld [vmem:[#allocation6 + $0x668] sm:$0xff]
    %v2079 = vld [vmem:[#allocation6 + $0x670] sm:$0xff]
    %v2080 = vld [vmem:[#allocation6 + $0x678] sm:$0xff]
    %v2081 = vld [vmem:[#allocation6 + $0x680] sm:$0xff]
    %v2082 = vld [vmem:[#allocation6 + $0x688] sm:$0xff]
    %v2083 = vld [vmem:[#allocation6 + $0x690] sm:$0xff]
    %v2084 = vld [vmem:[#allocation6 + $0x698] sm:$0xff]
    %v2085 = vld [vmem:[#allocation6 + $0x6a0] sm:$0xff]
    %v2086 = vld [vmem:[#allocation6 + $0x6a8] sm:$0xff]
    %v2087 = vld [vmem:[#allocation6 + $0x6b0] sm:$0xff]
    %v2088 = vld [vmem:[#allocation6 + $0x6b8] sm:$0xff]
    %v2089 = vld [vmem:[#allocation6 + $0x6c0] sm:$0xff]
    %v2090 = vld [vmem:[#allocation6 + $0x6c8] sm:$0xff]
    %v2091 = vld [vmem:[#allocation6 + $0x6d0] sm:$0xff]
    %v2092 = vld [vmem:[#allocation6 + $0x6d8] sm:$0xff]
    %v2093 = vld [vmem:[#allocation6 + $0x6e0] sm:$0xff]
    %v2094 = vld [vmem:[#allocation6 + $0x6e8] sm:$0xff]
    %v2095 = vld [vmem:[#allocation6 + $0x6f0] sm:$0xff]
    %v2096 = vld [vmem:[#allocation6 + $0x6f8] sm:$0xff]
    %v2097 = vld [vmem:[#allocation6 + $0x700] sm:$0xff]
    %v2098 = vld [vmem:[#allocation6 + $0x708] sm:$0xff]
    %v2099 = vld [vmem:[#allocation6 + $0x710] sm:$0xff]
    %v2100 = vld [vmem:[#allocation6 + $0x718] sm:$0xff]
    %v2101 = vld [vmem:[#allocation6 + $0x720] sm:$0xff]
    %v2102 = vld [vmem:[#allocation6 + $0x728] sm:$0xff]
    %v2103 = vld [vmem:[#allocation6 + $0x730] sm:$0xff]
    %v2104 = vld [vmem:[#allocation6 + $0x738] sm:$0xff]
    %v2105 = vld [vmem:[#allocation6 + $0x740] sm:$0xff]
    %v2106 = vld [vmem:[#allocation6 + $0x748] sm:$0xff]
    %v2107 = vld [vmem:[#allocation6 + $0x750] sm:$0xff]
    %v2108 = vld [vmem:[#allocation6 + $0x758] sm:$0xff]
    %v2109 = vld [vmem:[#allocation6 + $0x760] sm:$0xff]
    %v2110 = vld [vmem:[#allocation6 + $0x768] sm:$0xff]
    %v2111 = vld [vmem:[#allocation6 + $0x770] sm:$0xff]
    %v2112 = vld [vmem:[#allocation6 + $0x778] sm:$0xff]
    %v2113 = vld [vmem:[#allocation6 + $0x780] sm:$0xff]
    %v2114 = vld [vmem:[#allocation6 + $0x788] sm:$0xff]
    %v2115 = vld [vmem:[#allocation6 + $0x790] sm:$0xff]
    %v2116 = vld [vmem:[#allocation6 + $0x798] sm:$0xff]
    %v2117 = vld [vmem:[#allocation6 + $0x7a0] sm:$0xff]
    %v2118 = vld [vmem:[#allocation6 + $0x7a8] sm:$0xff]
    %v2119 = vld [vmem:[#allocation6 + $0x7b0] sm:$0xff]
    %v2120 = vld [vmem:[#allocation6 + $0x7b8] sm:$0xff]
    %v2121 = vld [vmem:[#allocation6 + $0x7c0] sm:$0xff]
    %v2122 = vld [vmem:[#allocation6 + $0x7c8] sm:$0xff]
    %v2123 = vld [vmem:[#allocation6 + $0x7d0] sm:$0xff]
    %v2124 = vld [vmem:[#allocation6 + $0x7d8] sm:$0xff]
    %v2125 = vld [vmem:[#allocation6 + $0x7e0] sm:$0xff]
    %v2126 = vld [vmem:[#allocation6 + $0x7e8] sm:$0xff]
    %v2127 = vld [vmem:[#allocation6 + $0x7f0] sm:$0xff]
    %v2128 = vld [vmem:[#allocation6 + $0x7f8] sm:$0xff]
    %v2129 = vld [vmem:[#allocation6 + $0x800] sm:$0xff]
    %v2130 = vld [vmem:[#allocation6 + $0x808] sm:$0xff]
    %v2131 = vld [vmem:[#allocation6 + $0x810] sm:$0xff]
    %v2132 = vld [vmem:[#allocation6 + $0x818] sm:$0xff]
    %v2133 = vld [vmem:[#allocation6 + $0x820] sm:$0xff]
    %v2134 = vld [vmem:[#allocation6 + $0x828] sm:$0xff]
    %v2135 = vld [vmem:[#allocation6 + $0x830] sm:$0xff]
    %v2136 = vld [vmem:[#allocation6 + $0x838] sm:$0xff]
    %v2137 = vld [vmem:[#allocation6 + $0x840] sm:$0xff]
    %v2138 = vld [vmem:[#allocation6 + $0x848] sm:$0xff]
    %v2139 = vld [vmem:[#allocation6 + $0x850] sm:$0xff]
    %v2140 = vld [vmem:[#allocation6 + $0x858] sm:$0xff]
    %v2141 = vld [vmem:[#allocation6 + $0x860] sm:$0xff]
    %v2142 = vld [vmem:[#allocation6 + $0x868] sm:$0xff]
    %v2143 = vld [vmem:[#allocation6 + $0x870] sm:$0xff]
    %v2144 = vld [vmem:[#allocation6 + $0x878] sm:$0xff]
    %v2145 = vld [vmem:[#allocation6 + $0x880] sm:$0xff]
    %v2146 = vld [vmem:[#allocation6 + $0x888] sm:$0xff]
    %v2147 = vld [vmem:[#allocation6 + $0x890] sm:$0xff]
    %v2148 = vld [vmem:[#allocation6 + $0x898] sm:$0xff]
    %v2149 = vld [vmem:[#allocation6 + $0x8a0] sm:$0xff]
    %v2150 = vld [vmem:[#allocation6 + $0x8a8] sm:$0xff]
    %v2151 = vld [vmem:[#allocation6 + $0x8b0] sm:$0xff]
    %v2152 = vld [vmem:[#allocation6 + $0x8b8] sm:$0xff]
    %v2153 = vld [vmem:[#allocation6 + $0x8c0] sm:$0xff]
    %v2154 = vld [vmem:[#allocation6 + $0x8c8] sm:$0xff]
    %v2155 = vld [vmem:[#allocation6 + $0x8d0] sm:$0xff]
    %v2156 = vld [vmem:[#allocation6 + $0x8d8] sm:$0xff]
    %v2157 = vld [vmem:[#allocation6 + $0x8e0] sm:$0xff]
    %v2158 = vld [vmem:[#allocation6 + $0x8e8] sm:$0xff]
    %v2159 = vld [vmem:[#allocation6 + $0x8f0] sm:$0xff]
    %v2160 = vld [vmem:[#allocation6 + $0x8f8] sm:$0xff]
    %v2161 = vld [vmem:[#allocation6 + $0x900] sm:$0xff]
    %v2162 = vld [vmem:[#allocation6 + $0x908] sm:$0xff]
    %v2163 = vld [vmem:[#allocation6 + $0x910] sm:$0xff]
    %v2164 = vld [vmem:[#allocation6 + $0x918] sm:$0xff]
    %v2165 = vld [vmem:[#allocation6 + $0x920] sm:$0xff]
    %v2166 = vld [vmem:[#allocation6 + $0x928] sm:$0xff]
    %v2167 = vld [vmem:[#allocation6 + $0x930] sm:$0xff]
    %v2168 = vld [vmem:[#allocation6 + $0x938] sm:$0xff]
    %v2169 = vld [vmem:[#allocation6 + $0x940] sm:$0xff]
    %v2170 = vld [vmem:[#allocation6 + $0x948] sm:$0xff]
    %v2171 = vld [vmem:[#allocation6 + $0x950] sm:$0xff]
    %v2172 = vld [vmem:[#allocation6 + $0x958] sm:$0xff]
    %v2173 = vld [vmem:[#allocation6 + $0x960] sm:$0xff]
    %v2174 = vld [vmem:[#allocation6 + $0x968] sm:$0xff]
    %v2175 = vld [vmem:[#allocation6 + $0x970] sm:$0xff]
    %v2176 = vld [vmem:[#allocation6 + $0x978] sm:$0xff]
    %v2177 = vld [vmem:[#allocation6 + $0x980] sm:$0xff]
    %v2178 = vld [vmem:[#allocation6 + $0x988] sm:$0xff]
    %v2179 = vld [vmem:[#allocation6 + $0x990] sm:$0xff]
    %v2180 = vld [vmem:[#allocation6 + $0x998] sm:$0xff]
    %v2181 = vld [vmem:[#allocation6 + $0x9a0] sm:$0xff]
    %v2182 = vld [vmem:[#allocation6 + $0x9a8] sm:$0xff]
    %v2183 = vld [vmem:[#allocation6 + $0x9b0] sm:$0xff]
    %v2184 = vld [vmem:[#allocation6 + $0x9b8] sm:$0xff]
    %v2185 = vld [vmem:[#allocation6 + $0x9c0] sm:$0xff]
    %v2186 = vld [vmem:[#allocation6 + $0x9c8] sm:$0xff]
    %v2187 = vld [vmem:[#allocation6 + $0x9d0] sm:$0xff]
    %v2188 = vld [vmem:[#allocation6 + $0x9d8] sm:$0xff]
    %v2189 = vld [vmem:[#allocation6 + $0x9e0] sm:$0xff]
    %v2190 = vld [vmem:[#allocation6 + $0x9e8] sm:$0xff]
    %v2191 = vld [vmem:[#allocation6 + $0x9f0] sm:$0xff]
    %v2192 = vld [vmem:[#allocation6 + $0x9f8] sm:$0xff]
    %v2193 = vld [vmem:[#allocation6 + $0xa00] sm:$0xff]
    %v2194 = vld [vmem:[#allocation6 + $0xa08] sm:$0xff]
    %v2195 = vld [vmem:[#allocation6 + $0xa10] sm:$0xff]
    %v2196 = vld [vmem:[#allocation6 + $0xa18] sm:$0xff]
    %v2197 = vld [vmem:[#allocation6 + $0xa20] sm:$0xff]
    %v2198 = vld [vmem:[#allocation6 + $0xa28] sm:$0xff]
    %v2199 = vld [vmem:[#allocation6 + $0xa30] sm:$0xff]
    %v2200 = vld [vmem:[#allocation6 + $0xa38] sm:$0xff]
    %v2201 = vld [vmem:[#allocation6 + $0xa40] sm:$0xff]
    %v2202 = vld [vmem:[#allocation6 + $0xa48] sm:$0xff]
    %v2203 = vld [vmem:[#allocation6 + $0xa50] sm:$0xff]
    %v2204 = vld [vmem:[#allocation6 + $0xa58] sm:$0xff]
    %v2205 = vld [vmem:[#allocation6 + $0xa60] sm:$0xff]
    %v2206 = vld [vmem:[#allocation6 + $0xa68] sm:$0xff]
    %v2207 = vld [vmem:[#allocation6 + $0xa70] sm:$0xff]
    %v2208 = vld [vmem:[#allocation6 + $0xa78] sm:$0xff]
    %v2209 = vld [vmem:[#allocation6 + $0xa80] sm:$0xff]
    %v2210 = vld [vmem:[#allocation6 + $0xa88] sm:$0xff]
    %v2211 = vld [vmem:[#allocation6 + $0xa90] sm:$0xff]
    %v2212 = vld [vmem:[#allocation6 + $0xa98] sm:$0xff]
    %v2213 = vld [vmem:[#allocation6 + $0xaa0] sm:$0xff]
    %v2214 = vld [vmem:[#allocation6 + $0xaa8] sm:$0xff]
    %v2215 = vld [vmem:[#allocation6 + $0xab0] sm:$0xff]
    %v2216 = vld [vmem:[#allocation6 + $0xab8] sm:$0xff]
    %v2217 = vld [vmem:[#allocation6 + $0xac0] sm:$0xff]
    %v2218 = vld [vmem:[#allocation6 + $0xac8] sm:$0xff]
    %v2219 = vld [vmem:[#allocation6 + $0xad0] sm:$0xff]
    %v2220 = vld [vmem:[#allocation6 + $0xad8] sm:$0xff]
    %v2221 = vld [vmem:[#allocation6 + $0xae0] sm:$0xff]
    %v2222 = vld [vmem:[#allocation6 + $0xae8] sm:$0xff]
    %v2223 = vld [vmem:[#allocation6 + $0xaf0] sm:$0xff]
    %v2224 = vld [vmem:[#allocation6 + $0xaf8] sm:$0xff]
    %v2225 = vld [vmem:[#allocation6 + $0xb00] sm:$0xff]
    %v2226 = vld [vmem:[#allocation6 + $0xb08] sm:$0xff]
    %v2227 = vld [vmem:[#allocation6 + $0xb10] sm:$0xff]
    %v2228 = vld [vmem:[#allocation6 + $0xb18] sm:$0xff]
    %v2229 = vld [vmem:[#allocation6 + $0xb20] sm:$0xff]
    %v2230 = vld [vmem:[#allocation6 + $0xb28] sm:$0xff]
    %v2231 = vld [vmem:[#allocation6 + $0xb30] sm:$0xff]
    %v2232 = vld [vmem:[#allocation6 + $0xb38] sm:$0xff]
    %v2233 = vld [vmem:[#allocation6 + $0xb40] sm:$0xff]
    %v2234 = vld [vmem:[#allocation6 + $0xb48] sm:$0xff]
    %v2235 = vld [vmem:[#allocation6 + $0xb50] sm:$0xff]
    %v2236 = vld [vmem:[#allocation6 + $0xb58] sm:$0xff]
    %v2237 = vld [vmem:[#allocation6 + $0xb60] sm:$0xff]
    %v2238 = vld [vmem:[#allocation6 + $0xb68] sm:$0xff]
    %v2239 = vld [vmem:[#allocation6 + $0xb70] sm:$0xff]
    %v2240 = vld [vmem:[#allocation6 + $0xb78] sm:$0xff]
    %v2241 = vld [vmem:[#allocation6 + $0xb80] sm:$0xff]
    %v2242 = vld [vmem:[#allocation6 + $0xb88] sm:$0xff]
    %v2243 = vld [vmem:[#allocation6 + $0xb90] sm:$0xff]
    %v2244 = vld [vmem:[#allocation6 + $0xb98] sm:$0xff]
    %v2245 = vld [vmem:[#allocation6 + $0xba0] sm:$0xff]
    %v2246 = vld [vmem:[#allocation6 + $0xba8] sm:$0xff]
    %v2247 = vld [vmem:[#allocation6 + $0xbb0] sm:$0xff]
    %v2248 = vld [vmem:[#allocation6 + $0xbb8] sm:$0xff]
    %v2249 = vld [vmem:[#allocation6 + $0xbc0] sm:$0xff]
    %v2250 = vld [vmem:[#allocation6 + $0xbc8] sm:$0xff]
    %v2251 = vld [vmem:[#allocation6 + $0xbd0] sm:$0xff]
    %v2252 = vld [vmem:[#allocation6 + $0xbd8] sm:$0xff]
    %v2253 = vld [vmem:[#allocation6 + $0xbe0] sm:$0xff]
    %v2254 = vld [vmem:[#allocation6 + $0xbe8] sm:$0xff]
    %v2255 = vld [vmem:[#allocation6 + $0xbf0] sm:$0xff]
    %v2256 = vld [vmem:[#allocation6 + $0xbf8] sm:$0xff]
    %v2257 = vld [vmem:[#allocation6 + $0xc00] sm:$0xff]
    %v2258 = vld [vmem:[#allocation6 + $0xc08] sm:$0xff]
    %v2259 = vld [vmem:[#allocation6 + $0xc10] sm:$0xff]
    %v2260 = vld [vmem:[#allocation6 + $0xc18] sm:$0xff]
    %v2261 = vld [vmem:[#allocation6 + $0xc20] sm:$0xff]
    %v2262 = vld [vmem:[#allocation6 + $0xc28] sm:$0xff]
    %v2263 = vld [vmem:[#allocation6 + $0xc30] sm:$0xff]
    %v2264 = vld [vmem:[#allocation6 + $0xc38] sm:$0xff]
    %v2265 = vld [vmem:[#allocation6 + $0xc40] sm:$0xff]
    %v2266 = vld [vmem:[#allocation6 + $0xc48] sm:$0xff]
    %v2267 = vld [vmem:[#allocation6 + $0xc50] sm:$0xff]
    %v2268 = vld [vmem:[#allocation6 + $0xc58] sm:$0xff]
    %v2269 = vld [vmem:[#allocation6 + $0xc60] sm:$0xff]
    %v2270 = vld [vmem:[#allocation6 + $0xc68] sm:$0xff]
    %v2271 = vld [vmem:[#allocation6 + $0xc70] sm:$0xff]
    %v2272 = vld [vmem:[#allocation6 + $0xc78] sm:$0xff]
    %v2273 = vld [vmem:[#allocation6 + $0xc80] sm:$0xff]
    %v2274 = vld [vmem:[#allocation6 + $0xc88] sm:$0xff]
    %v2275 = vld [vmem:[#allocation6 + $0xc90] sm:$0xff]
    %v2276 = vld [vmem:[#allocation6 + $0xc98] sm:$0xff]
    %v2277 = vld [vmem:[#allocation6 + $0xca0] sm:$0xff]
    %v2278 = vld [vmem:[#allocation6 + $0xca8] sm:$0xff]
    %v2279 = vld [vmem:[#allocation6 + $0xcb0] sm:$0xff]
    %v2280 = vld [vmem:[#allocation6 + $0xcb8] sm:$0xff]
    %v2281 = vld [vmem:[#allocation6 + $0xcc0] sm:$0xff]
    %v2282 = vld [vmem:[#allocation6 + $0xcc8] sm:$0xff]
    %v2283 = vld [vmem:[#allocation6 + $0xcd0] sm:$0xff]
    %v2284 = vld [vmem:[#allocation6 + $0xcd8] sm:$0xff]
    %v2285 = vld [vmem:[#allocation6 + $0xce0] sm:$0xff]
    %v2286 = vld [vmem:[#allocation6 + $0xce8] sm:$0xff]
    %v2287 = vld [vmem:[#allocation6 + $0xcf0] sm:$0xff]
    %v2288 = vld [vmem:[#allocation6 + $0xcf8] sm:$0xff]
    %v2289 = vld [vmem:[#allocation6 + $0xd00] sm:$0xff]
    %v2290 = vld [vmem:[#allocation6 + $0xd08] sm:$0xff]
    %v2291 = vld [vmem:[#allocation6 + $0xd10] sm:$0xff]
    %v2292 = vld [vmem:[#allocation6 + $0xd18] sm:$0xff]
    %v2293 = vld [vmem:[#allocation6 + $0xd20] sm:$0xff]
    %v2294 = vld [vmem:[#allocation6 + $0xd28] sm:$0xff]
    %v2295 = vld [vmem:[#allocation6 + $0xd30] sm:$0xff]
    %v2296 = vld [vmem:[#allocation6 + $0xd38] sm:$0xff]
    %v2297 = vld [vmem:[#allocation6 + $0xd40] sm:$0xff]
    %v2298 = vld [vmem:[#allocation6 + $0xd48] sm:$0xff]
    %v2299 = vld [vmem:[#allocation6 + $0xd50] sm:$0xff]
    %v2300 = vld [vmem:[#allocation6 + $0xd58] sm:$0xff]
    %v2301 = vld [vmem:[#allocation6 + $0xd60] sm:$0xff]
    %v2302 = vld [vmem:[#allocation6 + $0xd68] sm:$0xff]
    %v2303 = vld [vmem:[#allocation6 + $0xd70] sm:$0xff]
    %v2304 = vld [vmem:[#allocation6 + $0xd78] sm:$0xff]
    %v2305 = vld [vmem:[#allocation6 + $0xd80] sm:$0xff]
    %v2306 = vld [vmem:[#allocation6 + $0xd88] sm:$0xff]
    %v2307 = vld [vmem:[#allocation6 + $0xd90] sm:$0xff]
    %v2308 = vld [vmem:[#allocation6 + $0xd98] sm:$0xff]
    %v2309 = vld [vmem:[#allocation6 + $0xda0] sm:$0xff]
    %v2310 = vld [vmem:[#allocation6 + $0xda8] sm:$0xff]
    %v2311 = vld [vmem:[#allocation6 + $0xdb0] sm:$0xff]
    %v2312 = vld [vmem:[#allocation6 + $0xdb8] sm:$0xff]
    %v2313 = vld [vmem:[#allocation6 + $0xdc0] sm:$0xff]
    %v2314 = vld [vmem:[#allocation6 + $0xdc8] sm:$0xff]
    %v2315 = vld [vmem:[#allocation6 + $0xdd0] sm:$0xff]
    %v2316 = vld [vmem:[#allocation6 + $0xdd8] sm:$0xff]
    %v2317 = vld [vmem:[#allocation6 + $0xde0] sm:$0xff]
    %v2318 = vld [vmem:[#allocation6 + $0xde8] sm:$0xff]
    %v2319 = vld [vmem:[#allocation6 + $0xdf0] sm:$0xff]
    %v2320 = vld [vmem:[#allocation6 + $0xdf8] sm:$0xff]
    %v2321 = vld [vmem:[#allocation6 + $0xe00] sm:$0xff]
    %v2322 = vld [vmem:[#allocation6 + $0xe08] sm:$0xff]
    %v2323 = vld [vmem:[#allocation6 + $0xe10] sm:$0xff]
    %v2324 = vld [vmem:[#allocation6 + $0xe18] sm:$0xff]
    %v2325 = vld [vmem:[#allocation6 + $0xe20] sm:$0xff]
    %v2326 = vld [vmem:[#allocation6 + $0xe28] sm:$0xff]
    %v2327 = vld [vmem:[#allocation6 + $0xe30] sm:$0xff]
    %v2328 = vld [vmem:[#allocation6 + $0xe38] sm:$0xff]
    %v2329 = vld [vmem:[#allocation6 + $0xe40] sm:$0xff]
    %v2330 = vld [vmem:[#allocation6 + $0xe48] sm:$0xff]
    %v2331 = vld [vmem:[#allocation6 + $0xe50] sm:$0xff]
    %v2332 = vld [vmem:[#allocation6 + $0xe58] sm:$0xff]
    %v2333 = vld [vmem:[#allocation6 + $0xe60] sm:$0xff]
    %v2334 = vld [vmem:[#allocation6 + $0xe68] sm:$0xff]
    %v2335 = vld [vmem:[#allocation6 + $0xe70] sm:$0xff]
    %v2336 = vld [vmem:[#allocation6 + $0xe78] sm:$0xff]
    %v2337 = vld [vmem:[#allocation6 + $0xe80] sm:$0xff]
    %v2338 = vld [vmem:[#allocation6 + $0xe88] sm:$0xff]
    %v2339 = vld [vmem:[#allocation6 + $0xe90] sm:$0xff]
    %v2340 = vld [vmem:[#allocation6 + $0xe98] sm:$0xff]
    %v2341 = vld [vmem:[#allocation6 + $0xea0] sm:$0xff]
    %v2342 = vld [vmem:[#allocation6 + $0xea8] sm:$0xff]
    %v2343 = vld [vmem:[#allocation6 + $0xeb0] sm:$0xff]
    %v2344 = vld [vmem:[#allocation6 + $0xeb8] sm:$0xff]
    %v2345 = vld [vmem:[#allocation6 + $0xec0] sm:$0xff]
    %v2346 = vld [vmem:[#allocation6 + $0xec8] sm:$0xff]
    %v2347 = vld [vmem:[#allocation6 + $0xed0] sm:$0xff]
    %v2348 = vld [vmem:[#allocation6 + $0xed8] sm:$0xff]
    %v2349 = vld [vmem:[#allocation6 + $0xee0] sm:$0xff]
    %v2350 = vld [vmem:[#allocation6 + $0xee8] sm:$0xff]
    %v2351 = vld [vmem:[#allocation6 + $0xef0] sm:$0xff]
    %v2352 = vld [vmem:[#allocation6 + $0xef8] sm:$0xff]
    %v2353 = vld [vmem:[#allocation6 + $0xf00] sm:$0xff]
    %v2354 = vld [vmem:[#allocation6 + $0xf08] sm:$0xff]
    %v2355 = vld [vmem:[#allocation6 + $0xf10] sm:$0xff]
    %v2356 = vld [vmem:[#allocation6 + $0xf18] sm:$0xff]
    %v2357 = vld [vmem:[#allocation6 + $0xf20] sm:$0xff]
    %v2358 = vld [vmem:[#allocation6 + $0xf28] sm:$0xff]
    %v2359 = vld [vmem:[#allocation6 + $0xf30] sm:$0xff]
    %v2360 = vld [vmem:[#allocation6 + $0xf38] sm:$0xff]
    %v2361 = vld [vmem:[#allocation6 + $0xf40] sm:$0xff]
    %v2362 = vld [vmem:[#allocation6 + $0xf48] sm:$0xff]
    %v2363 = vld [vmem:[#allocation6 + $0xf50] sm:$0xff]
    %v2364 = vld [vmem:[#allocation6 + $0xf58] sm:$0xff]
    %v2365 = vld [vmem:[#allocation6 + $0xf60] sm:$0xff]
    %v2366 = vld [vmem:[#allocation6 + $0xf68] sm:$0xff]
    %v2367 = vld [vmem:[#allocation6 + $0xf70] sm:$0xff]
    %v2368 = vld [vmem:[#allocation6 + $0xf78] sm:$0xff]
    %v2369 = vld [vmem:[#allocation6 + $0xf80] sm:$0xff]
    %v2370 = vld [vmem:[#allocation6 + $0xf88] sm:$0xff]
    %v2371 = vld [vmem:[#allocation6 + $0xf90] sm:$0xff]
    %v2372 = vld [vmem:[#allocation6 + $0xf98] sm:$0xff]
    %v2373 = vld [vmem:[#allocation6 + $0xfa0] sm:$0xff]
    %v2374 = vld [vmem:[#allocation6 + $0xfa8] sm:$0xff]
    %v2375 = vld [vmem:[#allocation6 + $0xfb0] sm:$0xff]
    %v2376 = vld [vmem:[#allocation6 + $0xfb8] sm:$0xff]
    %v2377 = vld [vmem:[#allocation6 + $0xfc0] sm:$0xff]
    %v2378 = vld [vmem:[#allocation6 + $0xfc8] sm:$0xff]
    %v2379 = vld [vmem:[#allocation6 + $0xfd0] sm:$0xff]
    %v2380 = vld [vmem:[#allocation6 + $0xfd8] sm:$0xff]
    %v2381 = vld [vmem:[#allocation6 + $0xfe0] sm:$0xff]
    %v2382 = vld [vmem:[#allocation6 + $0xfe8] sm:$0xff]
    %v2383 = vld [vmem:[#allocation6 + $0xff0] sm:$0xff]
    %v2384 = vld [vmem:[#allocation6 + $0xff8] sm:$0xff]
    %v2385 = vld [vmem:[#allocation7] sm:$0xf]
    %v2387 = vlaneseq
    %v2388 = vshrl.u32 %v2387, 7
    %v2389 = vsub.s32 0, %v2388
    %v2390 = vrot.slane %v2385, %v2389
    %v2391 = vlaneseq
    %v2392 = vshrl.u32 %v2391, 7
    %v2393 = vsub.s32 1, %v2392
    %v2394 = vrot.slane %v2385, %v2393
    %v2395 = vlaneseq
    %v2396 = vshrl.u32 %v2395, 7
    %v2397 = vsub.s32 2, %v2396
    %v2398 = vrot.slane %v2385, %v2397
    %v2399 = vlaneseq
    %v2400 = vshrl.u32 %v2399, 7
    %v2401 = vsub.s32 3, %v2400
    %v2402 = vrot.slane %v2385, %v2401
    %2407 = vmatprep.subr.mxu0 %v1874
    %2408 = vmatpush1.msra.mxu0 %v1873
    %2409 = vmatprep.subr.mxu0 %v1878
    %2410 = vmatpush1.msra.mxu0 %v1877
    %2411 = vmatprep.subr.mxu0 %v1882
    %2412 = vmatpush1.msra.mxu0 %v1881
    %2413 = vmatprep.subr.mxu0 %v1886
    %2414 = vmatpush1.msra.mxu0 %v1885
    %2415 = vmatprep.subr.mxu0 %v1890
    %2416 = vmatpush1.msra.mxu0 %v1889
    %2417 = vmatprep.subr.mxu0 %v1894
    %2418 = vmatpush1.msra.mxu0 %v1893
    %2419 = vmatprep.subr.mxu0 %v1898
    %2420 = vmatpush1.msra.mxu0 %v1897
    %2421 = vmatprep.subr.mxu0 %v1902
    %2422 = vmatpush1.msra.mxu0 %v1901
    %2423 = vmatprep.subr.mxu0 %v1906
    %2424 = vmatpush1.msra.mxu0 %v1905
    %2425 = vmatprep.subr.mxu0 %v1910
    %2426 = vmatpush1.msra.mxu0 %v1909
    %2427 = vmatprep.subr.mxu0 %v1914
    %2428 = vmatpush1.msra.mxu0 %v1913
    %2429 = vmatprep.subr.mxu0 %v1918
    %2430 = vmatpush1.msra.mxu0 %v1917
    %2431 = vmatprep.subr.mxu0 %v1922
    %2432 = vmatpush1.msra.mxu0 %v1921
    %2433 = vmatprep.subr.mxu0 %v1926
    %2434 = vmatpush1.msra.mxu0 %v1925
    %2435 = vmatprep.subr.mxu0 %v1930
    %2436 = vmatpush1.msra.mxu0 %v1929
    %2437 = vmatprep.subr.mxu0 %v1934
    %2438 = vmatpush1.msra.mxu0 %v1933
    %2439 = vmatprep.subr.mxu0 %v1938
    %2440 = vmatpush1.msra.mxu0 %v1937
    %2441 = vmatprep.subr.mxu0 %v1942
    %2442 = vmatpush1.msra.mxu0 %v1941
    %2443 = vmatprep.subr.mxu0 %v1946
    %2444 = vmatpush1.msra.mxu0 %v1945
    %2445 = vmatprep.subr.mxu0 %v1950
    %2446 = vmatpush1.msra.mxu0 %v1949
    %2447 = vmatprep.subr.mxu0 %v1954
    %2448 = vmatpush1.msra.mxu0 %v1953
    %2449 = vmatprep.subr.mxu0 %v1958
    %2450 = vmatpush1.msra.mxu0 %v1957
    %2451 = vmatprep.subr.mxu0 %v1962
    %2452 = vmatpush1.msra.mxu0 %v1961
    %2453 = vmatprep.subr.mxu0 %v1966
    %2454 = vmatpush1.msra.mxu0 %v1965
    %2455 = vmatprep.subr.mxu0 %v1970
    %2456 = vmatpush1.msra.mxu0 %v1969
    %2457 = vmatprep.subr.mxu0 %v1974
    %2458 = vmatpush1.msra.mxu0 %v1973
    %2459 = vmatprep.subr.mxu0 %v1978
    %2460 = vmatpush1.msra.mxu0 %v1977
    %2461 = vmatprep.subr.mxu0 %v1982
    %2462 = vmatpush1.msra.mxu0 %v1981
    %2463 = vmatprep.subr.mxu0 %v1986
    %2464 = vmatpush1.msra.mxu0 %v1985
    %2465 = vmatprep.subr.mxu0 %v1990
    %2466 = vmatpush1.msra.mxu0 %v1989
    %2467 = vmatprep.subr.mxu0 %v1994
    %2468 = vmatpush1.msra.mxu0 %v1993
    %2469 = vmatprep.subr.mxu0 %v1998
    %2470 = vmatpush1.msra.mxu0 %v1997
    %2471 = vmatprep.mubr.f32.mxu0 %v1866
    %2472 = vmatmul.mubr.f32.gmra.mrb[0].mxu0 %v1865
    %v2473 = vpop.f32.mrb[0].mxu0
    %v2474 = vadd.f32 %v2390, %v2473
    %v2475 = vpop.f32.mrb[0].mxu0
    %v2476 = vadd.f32 %v2394, %v2475
    %2477 = vdwg.mxu0
    %2478 = vmatprep.subr.mxu0 %v2002
    %2479 = vmatpush1.msra.mxu0 %v2001
    %2480 = vmatprep.subr.mxu0 %v2006
    %2481 = vmatpush1.msra.mxu0 %v2005
    %2482 = vmatprep.subr.mxu0 %v2010
    %2483 = vmatpush1.msra.mxu0 %v2009
    %2484 = vmatprep.subr.mxu0 %v2014
    %2485 = vmatpush1.msra.mxu0 %v2013
    %2486 = vmatprep.subr.mxu0 %v2018
    %2487 = vmatpush1.msra.mxu0 %v2017
    %2488 = vmatprep.subr.mxu0 %v2022
    %2489 = vmatpush1.msra.mxu0 %v2021
    %2490 = vmatprep.subr.mxu0 %v2026
    %2491 = vmatpush1.msra.mxu0 %v2025
    %2492 = vmatprep.subr.mxu0 %v2030
    %2493 = vmatpush1.msra.mxu0 %v2029
    %2494 = vmatprep.subr.mxu0 %v2034
    %2495 = vmatpush1.msra.mxu0 %v2033
    %2496 = vmatprep.subr.mxu0 %v2038
    %2497 = vmatpush1.msra.mxu0 %v2037
    %2498 = vmatprep.subr.mxu0 %v2042
    %2499 = vmatpush1.msra.mxu0 %v2041
    %2500 = vmatprep.subr.mxu0 %v2046
    %2501 = vmatpush1.msra.mxu0 %v2045
    %2502 = vmatprep.subr.mxu0 %v2050
    %2503 = vmatpush1.msra.mxu0 %v2049
    %2504 = vmatprep.subr.mxu0 %v2054
    %2505 = vmatpush1.msra.mxu0 %v2053
    %2506 = vmatprep.subr.mxu0 %v2058
    %2507 = vmatpush1.msra.mxu0 %v2057
    %2508 = vmatprep.subr.mxu0 %v2062
    %2509 = vmatpush1.msra.mxu0 %v2061
    %2510 = vmatprep.subr.mxu0 %v2066
    %2511 = vmatpush1.msra.mxu0 %v2065
    %2512 = vmatprep.subr.mxu0 %v2070
    %2513 = vmatpush1.msra.mxu0 %v2069
    %2514 = vmatprep.subr.mxu0 %v2074
    %2515 = vmatpush1.msra.mxu0 %v2073
    %2516 = vmatprep.subr.mxu0 %v2078
    %2517 = vmatpush1.msra.mxu0 %v2077
    %2518 = vmatprep.subr.mxu0 %v2082
    %2519 = vmatpush1.msra.mxu0 %v2081
    %2520 = vmatprep.subr.mxu0 %v2086
    %2521 = vmatpush1.msra.mxu0 %v2085
    %2522 = vmatprep.subr.mxu0 %v2090
    %2523 = vmatpush1.msra.mxu0 %v2089
    %2524 = vmatprep.subr.mxu0 %v2094
    %2525 = vmatpush1.msra.mxu0 %v2093
    %2526 = vmatprep.subr.mxu0 %v2098
    %2527 = vmatpush1.msra.mxu0 %v2097
    %2528 = vmatprep.subr.mxu0 %v2102
    %2529 = vmatpush1.msra.mxu0 %v2101
    %2530 = vmatprep.subr.mxu0 %v2106
    %2531 = vmatpush1.msra.mxu0 %v2105
    %2532 = vmatprep.subr.mxu0 %v2110
    %2533 = vmatpush1.msra.mxu0 %v2109
    %2534 = vmatprep.subr.mxu0 %v2114
    %2535 = vmatpush1.msra.mxu0 %v2113
    %2536 = vmatprep.subr.mxu0 %v2118
    %2537 = vmatpush1.msra.mxu0 %v2117
    %2538 = vmatprep.subr.mxu0 %v2122
    %2539 = vmatpush1.msra.mxu0 %v2121
    %2540 = vmatprep.subr.mxu0 %v2126
    %2541 = vmatpush1.msra.mxu0 %v2125
    %2542 = vmatprep.mubr.f32.mxu0 %v1868
    %2543 = vmatmul.mubr.f32.gmra.mrb[0].mxu0 %v1867
    %v2544 = vpop.f32.mrb[0].mxu0
    %v2545 = vadd.f32 %v2474, %v2544
    %v2546 = vpop.f32.mrb[0].mxu0
    %v2547 = vadd.f32 %v2476, %v2546
    %2548 = vdwg.mxu0
    %2549 = vmatprep.subr.mxu0 %v2130
    %2550 = vmatpush1.msra.mxu0 %v2129
    %2551 = vmatprep.subr.mxu0 %v2134
    %2552 = vmatpush1.msra.mxu0 %v2133
    %2553 = vmatprep.subr.mxu0 %v2138
    %2554 = vmatpush1.msra.mxu0 %v2137
    %2555 = vmatprep.subr.mxu0 %v2142
    %2556 = vmatpush1.msra.mxu0 %v2141
    %2557 = vmatprep.subr.mxu0 %v2146
    %2558 = vmatpush1.msra.mxu0 %v2145
    %2559 = vmatprep.subr.mxu0 %v2150
    %2560 = vmatpush1.msra.mxu0 %v2149
    %2561 = vmatprep.subr.mxu0 %v2154
    %2562 = vmatpush1.msra.mxu0 %v2153
    %2563 = vmatprep.subr.mxu0 %v2158
    %2564 = vmatpush1.msra.mxu0 %v2157
    %2565 = vmatprep.subr.mxu0 %v2162
    %2566 = vmatpush1.msra.mxu0 %v2161
    %2567 = vmatprep.subr.mxu0 %v2166
    %2568 = vmatpush1.msra.mxu0 %v2165
    %2569 = vmatprep.subr.mxu0 %v2170
    %2570 = vmatpush1.msra.mxu0 %v2169
    %2571 = vmatprep.subr.mxu0 %v2174
    %2572 = vmatpush1.msra.mxu0 %v2173
    %2573 = vmatprep.subr.mxu0 %v2178
    %2574 = vmatpush1.msra.mxu0 %v2177
    %2575 = vmatprep.subr.mxu0 %v2182
    %2576 = vmatpush1.msra.mxu0 %v2181
    %2577 = vmatprep.subr.mxu0 %v2186
    %2578 = vmatpush1.msra.mxu0 %v2185
    %2579 = vmatprep.subr.mxu0 %v2190
    %2580 = vmatpush1.msra.mxu0 %v2189
    %2581 = vmatprep.subr.mxu0 %v2194
    %2582 = vmatpush1.msra.mxu0 %v2193
    %2583 = vmatprep.subr.mxu0 %v2198
    %2584 = vmatpush1.msra.mxu0 %v2197
    %2585 = vmatprep.subr.mxu0 %v2202
    %2586 = vmatpush1.msra.mxu0 %v2201
    %2587 = vmatprep.subr.mxu0 %v2206
    %2588 = vmatpush1.msra.mxu0 %v2205
    %2589 = vmatprep.subr.mxu0 %v2210
    %2590 = vmatpush1.msra.mxu0 %v2209
    %2591 = vmatprep.subr.mxu0 %v2214
    %2592 = vmatpush1.msra.mxu0 %v2213
    %2593 = vmatprep.subr.mxu0 %v2218
    %2594 = vmatpush1.msra.mxu0 %v2217
    %2595 = vmatprep.subr.mxu0 %v2222
    %2596 = vmatpush1.msra.mxu0 %v2221
    %2597 = vmatprep.subr.mxu0 %v2226
    %2598 = vmatpush1.msra.mxu0 %v2225
    %2599 = vmatprep.subr.mxu0 %v2230
    %2600 = vmatpush1.msra.mxu0 %v2229
    %2601 = vmatprep.subr.mxu0 %v2234
    %2602 = vmatpush1.msra.mxu0 %v2233
    %2603 = vmatprep.subr.mxu0 %v2238
    %2604 = vmatpush1.msra.mxu0 %v2237
    %2605 = vmatprep.subr.mxu0 %v2242
    %2606 = vmatpush1.msra.mxu0 %v2241
    %2607 = vmatprep.subr.mxu0 %v2246
    %2608 = vmatpush1.msra.mxu0 %v2245
    %2609 = vmatprep.subr.mxu0 %v2250
    %2610 = vmatpush1.msra.mxu0 %v2249
    %2611 = vmatprep.subr.mxu0 %v2254
    %2612 = vmatpush1.msra.mxu0 %v2253
    %2613 = vmatprep.mubr.f32.mxu0 %v1870
    %2614 = vmatmul.mubr.f32.gmra.mrb[0].mxu0 %v1869
    %v2615 = vpop.f32.mrb[0].mxu0
    %v2616 = vadd.f32 %v2545, %v2615
    %v2617 = vpop.f32.mrb[0].mxu0
    %v2618 = vadd.f32 %v2547, %v2617
    %2619 = vdwg.mxu0
    %2620 = vmatprep.subr.mxu0 %v2258
    %2621 = vmatpush1.msra.mxu0 %v2257
    %2622 = vmatprep.subr.mxu0 %v2262
    %2623 = vmatpush1.msra.mxu0 %v2261
    %2624 = vmatprep.subr.mxu0 %v2266
    %2625 = vmatpush1.msra.mxu0 %v2265
    %2626 = vmatprep.subr.mxu0 %v2270
    %2627 = vmatpush1.msra.mxu0 %v2269
    %2628 = vmatprep.subr.mxu0 %v2274
    %2629 = vmatpush1.msra.mxu0 %v2273
    %2630 = vmatprep.subr.mxu0 %v2278
    %2631 = vmatpush1.msra.mxu0 %v2277
    %2632 = vmatprep.subr.mxu0 %v2282
    %2633 = vmatpush1.msra.mxu0 %v2281
    %2634 = vmatprep.subr.mxu0 %v2286
    %2635 = vmatpush1.msra.mxu0 %v2285
    %2636 = vmatprep.subr.mxu0 %v2290
    %2637 = vmatpush1.msra.mxu0 %v2289
    %2638 = vmatprep.subr.mxu0 %v2294
    %2639 = vmatpush1.msra.mxu0 %v2293
    %2640 = vmatprep.subr.mxu0 %v2298
    %2641 = vmatpush1.msra.mxu0 %v2297
    %2642 = vmatprep.subr.mxu0 %v2302
    %2643 = vmatpush1.msra.mxu0 %v2301
    %2644 = vmatprep.subr.mxu0 %v2306
    %2645 = vmatpush1.msra.mxu0 %v2305
    %2646 = vmatprep.subr.mxu0 %v2310
    %2647 = vmatpush1.msra.mxu0 %v2309
    %2648 = vmatprep.subr.mxu0 %v2314
    %2649 = vmatpush1.msra.mxu0 %v2313
    %2650 = vmatprep.subr.mxu0 %v2318
    %2651 = vmatpush1.msra.mxu0 %v2317
    %2652 = vmatprep.subr.mxu0 %v2322
    %2653 = vmatpush1.msra.mxu0 %v2321
    %2654 = vmatprep.subr.mxu0 %v2326
    %2655 = vmatpush1.msra.mxu0 %v2325
    %2656 = vmatprep.subr.mxu0 %v2330
    %2657 = vmatpush1.msra.mxu0 %v2329
    %2658 = vmatprep.subr.mxu0 %v2334
    %2659 = vmatpush1.msra.mxu0 %v2333
    %2660 = vmatprep.subr.mxu0 %v2338
    %2661 = vmatpush1.msra.mxu0 %v2337
    %2662 = vmatprep.subr.mxu0 %v2342
    %2663 = vmatpush1.msra.mxu0 %v2341
    %2664 = vmatprep.subr.mxu0 %v2346
    %2665 = vmatpush1.msra.mxu0 %v2345
    %2666 = vmatprep.subr.mxu0 %v2350
    %2667 = vmatpush1.msra.mxu0 %v2349
    %2668 = vmatprep.subr.mxu0 %v2354
    %2669 = vmatpush1.msra.mxu0 %v2353
    %2670 = vmatprep.subr.mxu0 %v2358
    %2671 = vmatpush1.msra.mxu0 %v2357
    %2672 = vmatprep.subr.mxu0 %v2362
    %2673 = vmatpush1.msra.mxu0 %v2361
    %2674 = vmatprep.subr.mxu0 %v2366
    %2675 = vmatpush1.msra.mxu0 %v2365
    %2676 = vmatprep.subr.mxu0 %v2370
    %2677 = vmatpush1.msra.mxu0 %v2369
    %2678 = vmatprep.subr.mxu0 %v2374
    %2679 = vmatpush1.msra.mxu0 %v2373
    %2680 = vmatprep.subr.mxu0 %v2378
    %2681 = vmatpush1.msra.mxu0 %v2377
    %2682 = vmatprep.subr.mxu0 %v2382
    %2683 = vmatpush1.msra.mxu0 %v2381
    %2684 = vmatprep.mubr.f32.mxu0 %v1872
    %2685 = vmatmul.mubr.f32.gmra.mrb[0].mxu0 %v1871
    %v2686 = vpop.f32.mrb[0].mxu0
    %v2687 = vadd.f32 %v2616, %v2686
    %v2688 = vpop.f32.mrb[0].mxu0
    %v2689 = vadd.f32 %v2618, %v2688
    %2690 = vdwg.mxu0
    %2691 = vmatprep.subr.mxu0 %v1876
    %2692 = vmatpush1.msra.mxu0 %v1875
    %2693 = vmatprep.subr.mxu0 %v1880
    %2694 = vmatpush1.msra.mxu0 %v1879
    %2695 = vmatprep.subr.mxu0 %v1884
    %2696 = vmatpush1.msra.mxu0 %v1883
    %2697 = vmatprep.subr.mxu0 %v1888
    %2698 = vmatpush1.msra.mxu0 %v1887
    %2699 = vmatprep.subr.mxu0 %v1892
    %2700 = vmatpush1.msra.mxu0 %v1891
    %2701 = vmatprep.subr.mxu0 %v1896
    %2702 = vmatpush1.msra.mxu0 %v1895
    %2703 = vmatprep.subr.mxu0 %v1900
    %2704 = vmatpush1.msra.mxu0 %v1899
    %2705 = vmatprep.subr.mxu0 %v1904
    %2706 = vmatpush1.msra.mxu0 %v1903
    %2707 = vmatprep.subr.mxu0 %v1908
    %2708 = vmatpush1.msra.mxu0 %v1907
    %2709 = vmatprep.subr.mxu0 %v1912
    %2710 = vmatpush1.msra.mxu0 %v1911
    %2711 = vmatprep.subr.mxu0 %v1916
    %2712 = vmatpush1.msra.mxu0 %v1915
    %2713 = vmatprep.subr.mxu0 %v1920
    %2714 = vmatpush1.msra.mxu0 %v1919
    %2715 = vmatprep.subr.mxu0 %v1924
    %2716 = vmatpush1.msra.mxu0 %v1923
    %2717 = vmatprep.subr.mxu0 %v1928
    %2718 = vmatpush1.msra.mxu0 %v1927
    %2719 = vmatprep.subr.mxu0 %v1932
    %2720 = vmatpush1.msra.mxu0 %v1931
    %2721 = vmatprep.subr.mxu0 %v1936
    %2722 = vmatpush1.msra.mxu0 %v1935
    %2723 = vmatprep.subr.mxu0 %v1940
    %2724 = vmatpush1.msra.mxu0 %v1939
    %2725 = vmatprep.subr.mxu0 %v1944
    %2726 = vmatpush1.msra.mxu0 %v1943
    %2727 = vmatprep.subr.mxu0 %v1948
    %2728 = vmatpush1.msra.mxu0 %v1947
    %2729 = vmatprep.subr.mxu0 %v1952
    %2730 = vmatpush1.msra.mxu0 %v1951
    %2731 = vmatprep.subr.mxu0 %v1956
    %2732 = vmatpush1.msra.mxu0 %v1955
    %2733 = vmatprep.subr.mxu0 %v1960
    %2734 = vmatpush1.msra.mxu0 %v1959
    %2735 = vmatprep.subr.mxu0 %v1964
    %2736 = vmatpush1.msra.mxu0 %v1963
    %2737 = vmatprep.subr.mxu0 %v1968
    %2738 = vmatpush1.msra.mxu0 %v1967
    %2739 = vmatprep.subr.mxu0 %v1972
    %2740 = vmatpush1.msra.mxu0 %v1971
    %2741 = vmatprep.subr.mxu0 %v1976
    %2742 = vmatpush1.msra.mxu0 %v1975
    %2743 = vmatprep.subr.mxu0 %v1980
    %2744 = vmatpush1.msra.mxu0 %v1979
    %2745 = vmatprep.subr.mxu0 %v1984
    %2746 = vmatpush1.msra.mxu0 %v1983
    %2747 = vmatprep.subr.mxu0 %v1988
    %2748 = vmatpush1.msra.mxu0 %v1987
    %2749 = vmatprep.subr.mxu0 %v1992
    %2750 = vmatpush1.msra.mxu0 %v1991
    %2751 = vmatprep.subr.mxu0 %v1996
    %2752 = vmatpush1.msra.mxu0 %v1995
    %2753 = vmatprep.subr.mxu0 %v2000
    %2754 = vmatpush1.msra.mxu0 %v1999
    %2755 = vmatprep.mubr.f32.mxu0 %v1866
    %2756 = vmatmul.mubr.f32.gmra.mrb[0].mxu0 %v1865
    %v2757 = vpop.f32.mrb[0].mxu0
    %v2758 = vadd.f32 %v2398, %v2757
    %v2759 = vpop.f32.mrb[0].mxu0
    %v2760 = vadd.f32 %v2402, %v2759
    %2761 = vdwg.mxu0
    %2762 = vmatprep.subr.mxu0 %v2004
    %2763 = vmatpush1.msra.mxu0 %v2003
    %2764 = vmatprep.subr.mxu0 %v2008
    %2765 = vmatpush1.msra.mxu0 %v2007
    %2766 = vmatprep.subr.mxu0 %v2012
    %2767 = vmatpush1.msra.mxu0 %v2011
    %2768 = vmatprep.subr.mxu0 %v2016
    %2769 = vmatpush1.msra.mxu0 %v2015
    %2770 = vmatprep.subr.mxu0 %v2020
    %2771 = vmatpush1.msra.mxu0 %v2019
    %2772 = vmatprep.subr.mxu0 %v2024
    %2773 = vmatpush1.msra.mxu0 %v2023
    %2774 = vmatprep.subr.mxu0 %v2028
    %2775 = vmatpush1.msra.mxu0 %v2027
    %2776 = vmatprep.subr.mxu0 %v2032
    %2777 = vmatpush1.msra.mxu0 %v2031
    %2778 = vmatprep.subr.mxu0 %v2036
    %2779 = vmatpush1.msra.mxu0 %v2035
    %2780 = vmatprep.subr.mxu0 %v2040
    %2781 = vmatpush1.msra.mxu0 %v2039
    %2782 = vmatprep.subr.mxu0 %v2044
    %2783 = vmatpush1.msra.mxu0 %v2043
    %2784 = vmatprep.subr.mxu0 %v2048
    %2785 = vmatpush1.msra.mxu0 %v2047
    %2786 = vmatprep.subr.mxu0 %v2052
    %2787 = vmatpush1.msra.mxu0 %v2051
    %2788 = vmatprep.subr.mxu0 %v2056
    %2789 = vmatpush1.msra.mxu0 %v2055
    %2790 = vmatprep.subr.mxu0 %v2060
    %2791 = vmatpush1.msra.mxu0 %v2059
    %2792 = vmatprep.subr.mxu0 %v2064
    %2793 = vmatpush1.msra.mxu0 %v2063
    %2794 = vmatprep.subr.mxu0 %v2068
    %2795 = vmatpush1.msra.mxu0 %v2067
    %2796 = vmatprep.subr.mxu0 %v2072
    %2797 = vmatpush1.msra.mxu0 %v2071
    %2798 = vmatprep.subr.mxu0 %v2076
    %2799 = vmatpush1.msra.mxu0 %v2075
    %2800 = vmatprep.subr.mxu0 %v2080
    %2801 = vmatpush1.msra.mxu0 %v2079
    %2802 = vmatprep.subr.mxu0 %v2084
    %2803 = vmatpush1.msra.mxu0 %v2083
    %2804 = vmatprep.subr.mxu0 %v2088
    %2805 = vmatpush1.msra.mxu0 %v2087
    %2806 = vmatprep.subr.mxu0 %v2092
    %2807 = vmatpush1.msra.mxu0 %v2091
    %2808 = vmatprep.subr.mxu0 %v2096
    %2809 = vmatpush1.msra.mxu0 %v2095
    %2810 = vmatprep.subr.mxu0 %v2100
    %2811 = vmatpush1.msra.mxu0 %v2099
    %2812 = vmatprep.subr.mxu0 %v2104
    %2813 = vmatpush1.msra.mxu0 %v2103
    %2814 = vmatprep.subr.mxu0 %v2108
    %2815 = vmatpush1.msra.mxu0 %v2107
    %2816 = vmatprep.subr.mxu0 %v2112
    %2817 = vmatpush1.msra.mxu0 %v2111
    %2818 = vmatprep.subr.mxu0 %v2116
    %2819 = vmatpush1.msra.mxu0 %v2115
    %2820 = vmatprep.subr.mxu0 %v2120
    %2821 = vmatpush1.msra.mxu0 %v2119
    %2822 = vmatprep.subr.mxu0 %v2124
    %2823 = vmatpush1.msra.mxu0 %v2123
    %2824 = vmatprep.subr.mxu0 %v2128
    %2825 = vmatpush1.msra.mxu0 %v2127
    %2826 = vmatprep.mubr.f32.mxu0 %v1868
    %2827 = vmatmul.mubr.f32.gmra.mrb[0].mxu0 %v1867
    %v2828 = vpop.f32.mrb[0].mxu0
    %v2829 = vadd.f32 %v2758, %v2828
    %v2830 = vpop.f32.mrb[0].mxu0
    %v2831 = vadd.f32 %v2760, %v2830
    %2832 = vdwg.mxu0
    %2833 = vmatprep.subr.mxu0 %v2132
    %2834 = vmatpush1.msra.mxu0 %v2131
    %2835 = vmatprep.subr.mxu0 %v2136
    %2836 = vmatpush1.msra.mxu0 %v2135
    %2837 = vmatprep.subr.mxu0 %v2140
    %2838 = vmatpush1.msra.mxu0 %v2139
    %2839 = vmatprep.subr.mxu0 %v2144
    %2840 = vmatpush1.msra.mxu0 %v2143
    %2841 = vmatprep.subr.mxu0 %v2148
    %2842 = vmatpush1.msra.mxu0 %v2147
    %2843 = vmatprep.subr.mxu0 %v2152
    %2844 = vmatpush1.msra.mxu0 %v2151
    %2845 = vmatprep.subr.mxu0 %v2156
    %2846 = vmatpush1.msra.mxu0 %v2155
    %2847 = vmatprep.subr.mxu0 %v2160
    %2848 = vmatpush1.msra.mxu0 %v2159
    %2849 = vmatprep.subr.mxu0 %v2164
    %2850 = vmatpush1.msra.mxu0 %v2163
    %2851 = vmatprep.subr.mxu0 %v2168
    %2852 = vmatpush1.msra.mxu0 %v2167
    %2853 = vmatprep.subr.mxu0 %v2172
    %2854 = vmatpush1.msra.mxu0 %v2171
    %2855 = vmatprep.subr.mxu0 %v2176
    %2856 = vmatpush1.msra.mxu0 %v2175
    %2857 = vmatprep.subr.mxu0 %v2180
    %2858 = vmatpush1.msra.mxu0 %v2179
    %2859 = vmatprep.subr.mxu0 %v2184
    %2860 = vmatpush1.msra.mxu0 %v2183
    %2861 = vmatprep.subr.mxu0 %v2188
    %2862 = vmatpush1.msra.mxu0 %v2187
    %2863 = vmatprep.subr.mxu0 %v2192
    %2864 = vmatpush1.msra.mxu0 %v2191
    %2865 = vmatprep.subr.mxu0 %v2196
    %2866 = vmatpush1.msra.mxu0 %v2195
    %2867 = vmatprep.subr.mxu0 %v2200
    %2868 = vmatpush1.msra.mxu0 %v2199
    %2869 = vmatprep.subr.mxu0 %v2204
    %2870 = vmatpush1.msra.mxu0 %v2203
    %2871 = vmatprep.subr.mxu0 %v2208
    %2872 = vmatpush1.msra.mxu0 %v2207
    %2873 = vmatprep.subr.mxu0 %v2212
    %2874 = vmatpush1.msra.mxu0 %v2211
    %2875 = vmatprep.subr.mxu0 %v2216
    %2876 = vmatpush1.msra.mxu0 %v2215
    %2877 = vmatprep.subr.mxu0 %v2220
    %2878 = vmatpush1.msra.mxu0 %v2219
    %2879 = vmatprep.subr.mxu0 %v2224
    %2880 = vmatpush1.msra.mxu0 %v2223
    %2881 = vmatprep.subr.mxu0 %v2228
    %2882 = vmatpush1.msra.mxu0 %v2227
    %2883 = vmatprep.subr.mxu0 %v2232
    %2884 = vmatpush1.msra.mxu0 %v2231
    %2885 = vmatprep.subr.mxu0 %v2236
    %2886 = vmatpush1.msra.mxu0 %v2235
    %2887 = vmatprep.subr.mxu0 %v2240
    %2888 = vmatpush1.msra.mxu0 %v2239
    %2889 = vmatprep.subr.mxu0 %v2244
    %2890 = vmatpush1.msra.mxu0 %v2243
    %2891 = vmatprep.subr.mxu0 %v2248
    %2892 = vmatpush1.msra.mxu0 %v2247
    %2893 = vmatprep.subr.mxu0 %v2252
    %2894 = vmatpush1.msra.mxu0 %v2251
    %2895 = vmatprep.subr.mxu0 %v2256
    %2896 = vmatpush1.msra.mxu0 %v2255
    %2897 = vmatprep.mubr.f32.mxu0 %v1870
    %2898 = vmatmul.mubr.f32.gmra.mrb[0].mxu0 %v1869
    %v2899 = vpop.f32.mrb[0].mxu0
    %v2900 = vadd.f32 %v2829, %v2899
    %v2901 = vpop.f32.mrb[0].mxu0
    %v2902 = vadd.f32 %v2831, %v2901
    %2903 = vdwg.mxu0
    %2904 = vmatprep.subr.mxu0 %v2260
    %2905 = vmatpush1.msra.mxu0 %v2259
    %2906 = vmatprep.subr.mxu0 %v2264
    %2907 = vmatpush1.msra.mxu0 %v2263
    %2908 = vmatprep.subr.mxu0 %v2268
    %2909 = vmatpush1.msra.mxu0 %v2267
    %2910 = vmatprep.subr.mxu0 %v2272
    %2911 = vmatpush1.msra.mxu0 %v2271
    %2912 = vmatprep.subr.mxu0 %v2276
    %2913 = vmatpush1.msra.mxu0 %v2275
    %2914 = vmatprep.subr.mxu0 %v2280
    %2915 = vmatpush1.msra.mxu0 %v2279
    %2916 = vmatprep.subr.mxu0 %v2284
    %2917 = vmatpush1.msra.mxu0 %v2283
    %2918 = vmatprep.subr.mxu0 %v2288
    %2919 = vmatpush1.msra.mxu0 %v2287
    %2920 = vmatprep.subr.mxu0 %v2292
    %2921 = vmatpush1.msra.mxu0 %v2291
    %2922 = vmatprep.subr.mxu0 %v2296
    %2923 = vmatpush1.msra.mxu0 %v2295
    %2924 = vmatprep.subr.mxu0 %v2300
    %2925 = vmatpush1.msra.mxu0 %v2299
    %2926 = vmatprep.subr.mxu0 %v2304
    %2927 = vmatpush1.msra.mxu0 %v2303
    %2928 = vmatprep.subr.mxu0 %v2308
    %2929 = vmatpush1.msra.mxu0 %v2307
    %2930 = vmatprep.subr.mxu0 %v2312
    %2931 = vmatpush1.msra.mxu0 %v2311
    %2932 = vmatprep.subr.mxu0 %v2316
    %2933 = vmatpush1.msra.mxu0 %v2315
    %2934 = vmatprep.subr.mxu0 %v2320
    %2935 = vmatpush1.msra.mxu0 %v2319
    %2936 = vmatprep.subr.mxu0 %v2324
    %2937 = vmatpush1.msra.mxu0 %v2323
    %2938 = vmatprep.subr.mxu0 %v2328
    %2939 = vmatpush1.msra.mxu0 %v2327
    %2940 = vmatprep.subr.mxu0 %v2332
    %2941 = vmatpush1.msra.mxu0 %v2331
    %2942 = vmatprep.subr.mxu0 %v2336
    %2943 = vmatpush1.msra.mxu0 %v2335
    %2944 = vmatprep.subr.mxu0 %v2340
    %2945 = vmatpush1.msra.mxu0 %v2339
    %2946 = vmatprep.subr.mxu0 %v2344
    %2947 = vmatpush1.msra.mxu0 %v2343
    %2948 = vmatprep.subr.mxu0 %v2348
    %2949 = vmatpush1.msra.mxu0 %v2347
    %2950 = vmatprep.subr.mxu0 %v2352
    %2951 = vmatpush1.msra.mxu0 %v2351
    %2952 = vmatprep.subr.mxu0 %v2356
    %2953 = vmatpush1.msra.mxu0 %v2355
    %2954 = vmatprep.subr.mxu0 %v2360
    %2955 = vmatpush1.msra.mxu0 %v2359
    %2956 = vmatprep.subr.mxu0 %v2364
    %2957 = vmatpush1.msra.mxu0 %v2363
    %2958 = vmatprep.subr.mxu0 %v2368
    %2959 = vmatpush1.msra.mxu0 %v2367
    %2960 = vmatprep.subr.mxu0 %v2372
    %2961 = vmatpush1.msra.mxu0 %v2371
    %2962 = vmatprep.subr.mxu0 %v2376
    %2963 = vmatpush1.msra.mxu0 %v2375
    %2964 = vmatprep.subr.mxu0 %v2380
    %2965 = vmatpush1.msra.mxu0 %v2379
    %2966 = vmatprep.subr.mxu0 %v2384
    %2967 = vmatpush1.msra.mxu0 %v2383
    %2968 = vmatprep.mubr.f32.mxu0 %v1872
    %2969 = vmatmul.mubr.f32.gmra.mrb[0].mxu0 %v1871
    %v2970 = vpop.f32.mrb[0].mxu0
    %v2971 = vadd.f32 %v2900, %v2970
    %v2972 = vpop.f32.mrb[0].mxu0
    %v2973 = vadd.f32 %v2902, %v2972
    %2974 = vdwg.mxu0
    %vm2975 = vcmp.ge.f32.partialorder %v2687, 0.0
    %vm2976 = vcmp.ge.f32.partialorder %v2689, 0.0
    %vm2977 = vcmp.ge.f32.partialorder %v2971, 0.0
    %vm2978 = vcmp.ge.f32.partialorder %v2973, 0.0
    %v2979 = vmul.f32 %v2687, 0.01
    %v2980 = vmul.f32 %v2689, 0.01
    %v2981 = vmul.f32 %v2971, 0.01
    %v2982 = vmul.f32 %v2973, 0.01
    %v2983 = vsel %vm2975, %v2687, %v2979
    %v2984 = vsel %vm2976, %v2689, %v2980
    %v2985 = vsel %vm2977, %v2971, %v2981
    %v2986 = vsel %vm2978, %v2973, %v2982
    %v2987 = vld [vmem:[#allocation9] sm:$0xff]
    %v2988 = vld [vmem:[#allocation9 + $0x8] sm:$0xff]
    %v2989 = vld [vmem:[#allocation9 + $0x10] sm:$0xff]
    %v2990 = vld [vmem:[#allocation9 + $0x18] sm:$0xff]
    %v2991 = vld [vmem:[#allocation9 + $0x20] sm:$0xff]
    %v2992 = vld [vmem:[#allocation9 + $0x28] sm:$0xff]
    %v2993 = vld [vmem:[#allocation9 + $0x30] sm:$0xff]
    %v2994 = vld [vmem:[#allocation9 + $0x38] sm:$0xff]
    %v2995 = vld [vmem:[#allocation9 + $0x40] sm:$0xff]
    %v2996 = vld [vmem:[#allocation9 + $0x48] sm:$0xff]
    %v2997 = vld [vmem:[#allocation9 + $0x50] sm:$0xff]
    %v2998 = vld [vmem:[#allocation9 + $0x58] sm:$0xff]
    %v2999 = vld [vmem:[#allocation9 + $0x60] sm:$0xff]
    %v3000 = vld [vmem:[#allocation9 + $0x68] sm:$0xff]
    %v3001 = vld [vmem:[#allocation9 + $0x70] sm:$0xff]
    %v3002 = vld [vmem:[#allocation9 + $0x78] sm:$0xff]
    %v3003 = vld [vmem:[#allocation9 + $0x80] sm:$0xff]
    %v3004 = vld [vmem:[#allocation9 + $0x88] sm:$0xff]
    %v3005 = vld [vmem:[#allocation9 + $0x90] sm:$0xff]
    %v3006 = vld [vmem:[#allocation9 + $0x98] sm:$0xff]
    %v3007 = vld [vmem:[#allocation9 + $0xa0] sm:$0xff]
    %v3008 = vld [vmem:[#allocation9 + $0xa8] sm:$0xff]
    %v3009 = vld [vmem:[#allocation9 + $0xb0] sm:$0xff]
    %v3010 = vld [vmem:[#allocation9 + $0xb8] sm:$0xff]
    %v3011 = vld [vmem:[#allocation9 + $0xc0] sm:$0xff]
    %v3012 = vld [vmem:[#allocation9 + $0xc8] sm:$0xff]
    %v3013 = vld [vmem:[#allocation9 + $0xd0] sm:$0xff]
    %v3014 = vld [vmem:[#allocation9 + $0xd8] sm:$0xff]
    %v3015 = vld [vmem:[#allocation9 + $0xe0] sm:$0xff]
    %v3016 = vld [vmem:[#allocation9 + $0xe8] sm:$0xff]
    %v3017 = vld [vmem:[#allocation9 + $0xf0] sm:$0xff]
    %v3018 = vld [vmem:[#allocation9 + $0xf8] sm:$0xff]
    %v3019 = vld [vmem:[#allocation9 + $0x100] sm:$0xff]
    %v3020 = vld [vmem:[#allocation9 + $0x108] sm:$0xff]
    %v3021 = vld [vmem:[#allocation9 + $0x110] sm:$0xff]
    %v3022 = vld [vmem:[#allocation9 + $0x118] sm:$0xff]
    %v3023 = vld [vmem:[#allocation9 + $0x120] sm:$0xff]
    %v3024 = vld [vmem:[#allocation9 + $0x128] sm:$0xff]
    %v3025 = vld [vmem:[#allocation9 + $0x130] sm:$0xff]
    %v3026 = vld [vmem:[#allocation9 + $0x138] sm:$0xff]
    %v3027 = vld [vmem:[#allocation9 + $0x140] sm:$0xff]
    %v3028 = vld [vmem:[#allocation9 + $0x148] sm:$0xff]
    %v3029 = vld [vmem:[#allocation9 + $0x150] sm:$0xff]
    %v3030 = vld [vmem:[#allocation9 + $0x158] sm:$0xff]
    %v3031 = vld [vmem:[#allocation9 + $0x160] sm:$0xff]
    %v3032 = vld [vmem:[#allocation9 + $0x168] sm:$0xff]
    %v3033 = vld [vmem:[#allocation9 + $0x170] sm:$0xff]
    %v3034 = vld [vmem:[#allocation9 + $0x178] sm:$0xff]
    %v3035 = vld [vmem:[#allocation9 + $0x180] sm:$0xff]
    %v3036 = vld [vmem:[#allocation9 + $0x188] sm:$0xff]
    %v3037 = vld [vmem:[#allocation9 + $0x190] sm:$0xff]
    %v3038 = vld [vmem:[#allocation9 + $0x198] sm:$0xff]
    %v3039 = vld [vmem:[#allocation9 + $0x1a0] sm:$0xff]
    %v3040 = vld [vmem:[#allocation9 + $0x1a8] sm:$0xff]
    %v3041 = vld [vmem:[#allocation9 + $0x1b0] sm:$0xff]
    %v3042 = vld [vmem:[#allocation9 + $0x1b8] sm:$0xff]
    %v3043 = vld [vmem:[#allocation9 + $0x1c0] sm:$0xff]
    %v3044 = vld [vmem:[#allocation9 + $0x1c8] sm:$0xff]
    %v3045 = vld [vmem:[#allocation9 + $0x1d0] sm:$0xff]
    %v3046 = vld [vmem:[#allocation9 + $0x1d8] sm:$0xff]
    %v3047 = vld [vmem:[#allocation9 + $0x1e0] sm:$0xff]
    %v3048 = vld [vmem:[#allocation9 + $0x1e8] sm:$0xff]
    %v3049 = vld [vmem:[#allocation9 + $0x1f0] sm:$0xff]
    %v3050 = vld [vmem:[#allocation9 + $0x1f8] sm:$0xff]
    %v3051 = vld [vmem:[#allocation9 + $0x200] sm:$0xff]
    %v3052 = vld [vmem:[#allocation9 + $0x208] sm:$0xff]
    %v3053 = vld [vmem:[#allocation9 + $0x210] sm:$0xff]
    %v3054 = vld [vmem:[#allocation9 + $0x218] sm:$0xff]
    %v3055 = vld [vmem:[#allocation9 + $0x220] sm:$0xff]
    %v3056 = vld [vmem:[#allocation9 + $0x228] sm:$0xff]
    %v3057 = vld [vmem:[#allocation9 + $0x230] sm:$0xff]
    %v3058 = vld [vmem:[#allocation9 + $0x238] sm:$0xff]
    %v3059 = vld [vmem:[#allocation9 + $0x240] sm:$0xff]
    %v3060 = vld [vmem:[#allocation9 + $0x248] sm:$0xff]
    %v3061 = vld [vmem:[#allocation9 + $0x250] sm:$0xff]
    %v3062 = vld [vmem:[#allocation9 + $0x258] sm:$0xff]
    %v3063 = vld [vmem:[#allocation9 + $0x260] sm:$0xff]
    %v3064 = vld [vmem:[#allocation9 + $0x268] sm:$0xff]
    %v3065 = vld [vmem:[#allocation9 + $0x270] sm:$0xff]
    %v3066 = vld [vmem:[#allocation9 + $0x278] sm:$0xff]
    %v3067 = vld [vmem:[#allocation9 + $0x280] sm:$0xff]
    %v3068 = vld [vmem:[#allocation9 + $0x288] sm:$0xff]
    %v3069 = vld [vmem:[#allocation9 + $0x290] sm:$0xff]
    %v3070 = vld [vmem:[#allocation9 + $0x298] sm:$0xff]
    %v3071 = vld [vmem:[#allocation9 + $0x2a0] sm:$0xff]
    %v3072 = vld [vmem:[#allocation9 + $0x2a8] sm:$0xff]
    %v3073 = vld [vmem:[#allocation9 + $0x2b0] sm:$0xff]
    %v3074 = vld [vmem:[#allocation9 + $0x2b8] sm:$0xff]
    %v3075 = vld [vmem:[#allocation9 + $0x2c0] sm:$0xff]
    %v3076 = vld [vmem:[#allocation9 + $0x2c8] sm:$0xff]
    %v3077 = vld [vmem:[#allocation9 + $0x2d0] sm:$0xff]
    %v3078 = vld [vmem:[#allocation9 + $0x2d8] sm:$0xff]
    %v3079 = vld [vmem:[#allocation9 + $0x2e0] sm:$0xff]
    %v3080 = vld [vmem:[#allocation9 + $0x2e8] sm:$0xff]
    %v3081 = vld [vmem:[#allocation9 + $0x2f0] sm:$0xff]
    %v3082 = vld [vmem:[#allocation9 + $0x2f8] sm:$0xff]
    %v3083 = vld [vmem:[#allocation9 + $0x300] sm:$0xff]
    %v3084 = vld [vmem:[#allocation9 + $0x308] sm:$0xff]
    %v3085 = vld [vmem:[#allocation9 + $0x310] sm:$0xff]
    %v3086 = vld [vmem:[#allocation9 + $0x318] sm:$0xff]
    %v3087 = vld [vmem:[#allocation9 + $0x320] sm:$0xff]
    %v3088 = vld [vmem:[#allocation9 + $0x328] sm:$0xff]
    %v3089 = vld [vmem:[#allocation9 + $0x330] sm:$0xff]
    %v3090 = vld [vmem:[#allocation9 + $0x338] sm:$0xff]
    %v3091 = vld [vmem:[#allocation9 + $0x340] sm:$0xff]
    %v3092 = vld [vmem:[#allocation9 + $0x348] sm:$0xff]
    %v3093 = vld [vmem:[#allocation9 + $0x350] sm:$0xff]
    %v3094 = vld [vmem:[#allocation9 + $0x358] sm:$0xff]
    %v3095 = vld [vmem:[#allocation9 + $0x360] sm:$0xff]
    %v3096 = vld [vmem:[#allocation9 + $0x368] sm:$0xff]
    %v3097 = vld [vmem:[#allocation9 + $0x370] sm:$0xff]
    %v3098 = vld [vmem:[#allocation9 + $0x378] sm:$0xff]
    %v3099 = vld [vmem:[#allocation9 + $0x380] sm:$0xff]
    %v3100 = vld [vmem:[#allocation9 + $0x388] sm:$0xff]
    %v3101 = vld [vmem:[#allocation9 + $0x390] sm:$0xff]
    %v3102 = vld [vmem:[#allocation9 + $0x398] sm:$0xff]
    %v3103 = vld [vmem:[#allocation9 + $0x3a0] sm:$0xff]
    %v3104 = vld [vmem:[#allocation9 + $0x3a8] sm:$0xff]
    %v3105 = vld [vmem:[#allocation9 + $0x3b0] sm:$0xff]
    %v3106 = vld [vmem:[#allocation9 + $0x3b8] sm:$0xff]
    %v3107 = vld [vmem:[#allocation9 + $0x3c0] sm:$0xff]
    %v3108 = vld [vmem:[#allocation9 + $0x3c8] sm:$0xff]
    %v3109 = vld [vmem:[#allocation9 + $0x3d0] sm:$0xff]
    %v3110 = vld [vmem:[#allocation9 + $0x3d8] sm:$0xff]
    %v3111 = vld [vmem:[#allocation9 + $0x3e0] sm:$0xff]
    %v3112 = vld [vmem:[#allocation9 + $0x3e8] sm:$0xff]
    %v3113 = vld [vmem:[#allocation9 + $0x3f0] sm:$0xff]
    %v3114 = vld [vmem:[#allocation9 + $0x3f8] sm:$0xff]
    %v3115 = vld [vmem:[#allocation10] sm:$0x3]
    %v3117 = vlaneseq
    %v3118 = vshrl.u32 %v3117, 7
    %v3119 = vsub.s32 0, %v3118
    %v3120 = vrot.slane %v3115, %v3119
    %v3121 = vlaneseq
    %v3122 = vshrl.u32 %v3121, 7
    %v3123 = vsub.s32 1, %v3122
    %v3124 = vrot.slane %v3115, %v3123
    %3127 = vmatprep.subr.mxu0 %v2988
    %3128 = vmatpush1.msra.mxu0 %v2987
    %3129 = vmatprep.subr.mxu0 %v2990
    %3130 = vmatpush1.msra.mxu0 %v2989
    %3131 = vmatprep.subr.mxu0 %v2992
    %3132 = vmatpush1.msra.mxu0 %v2991
    %3133 = vmatprep.subr.mxu0 %v2994
    %3134 = vmatpush1.msra.mxu0 %v2993
    %3135 = vmatprep.subr.mxu0 %v2996
    %3136 = vmatpush1.msra.mxu0 %v2995
    %3137 = vmatprep.subr.mxu0 %v2998
    %3138 = vmatpush1.msra.mxu0 %v2997
    %3139 = vmatprep.subr.mxu0 %v3000
    %3140 = vmatpush1.msra.mxu0 %v2999
    %3141 = vmatprep.subr.mxu0 %v3002
    %3142 = vmatpush1.msra.mxu0 %v3001
    %3143 = vmatprep.subr.mxu0 %v3004
    %3144 = vmatpush1.msra.mxu0 %v3003
    %3145 = vmatprep.subr.mxu0 %v3006
    %3146 = vmatpush1.msra.mxu0 %v3005
    %3147 = vmatprep.subr.mxu0 %v3008
    %3148 = vmatpush1.msra.mxu0 %v3007
    %3149 = vmatprep.subr.mxu0 %v3010
    %3150 = vmatpush1.msra.mxu0 %v3009
    %3151 = vmatprep.subr.mxu0 %v3012
    %3152 = vmatpush1.msra.mxu0 %v3011
    %3153 = vmatprep.subr.mxu0 %v3014
    %3154 = vmatpush1.msra.mxu0 %v3013
    %3155 = vmatprep.subr.mxu0 %v3016
    %3156 = vmatpush1.msra.mxu0 %v3015
    %3157 = vmatprep.subr.mxu0 %v3018
    %3158 = vmatpush1.msra.mxu0 %v3017
    %3159 = vmatprep.subr.mxu0 %v3020
    %3160 = vmatpush1.msra.mxu0 %v3019
    %3161 = vmatprep.subr.mxu0 %v3022
    %3162 = vmatpush1.msra.mxu0 %v3021
    %3163 = vmatprep.subr.mxu0 %v3024
    %3164 = vmatpush1.msra.mxu0 %v3023
    %3165 = vmatprep.subr.mxu0 %v3026
    %3166 = vmatpush1.msra.mxu0 %v3025
    %3167 = vmatprep.subr.mxu0 %v3028
    %3168 = vmatpush1.msra.mxu0 %v3027
    %3169 = vmatprep.subr.mxu0 %v3030
    %3170 = vmatpush1.msra.mxu0 %v3029
    %3171 = vmatprep.subr.mxu0 %v3032
    %3172 = vmatpush1.msra.mxu0 %v3031
    %3173 = vmatprep.subr.mxu0 %v3034
    %3174 = vmatpush1.msra.mxu0 %v3033
    %3175 = vmatprep.subr.mxu0 %v3036
    %3176 = vmatpush1.msra.mxu0 %v3035
    %3177 = vmatprep.subr.mxu0 %v3038
    %3178 = vmatpush1.msra.mxu0 %v3037
    %3179 = vmatprep.subr.mxu0 %v3040
    %3180 = vmatpush1.msra.mxu0 %v3039
    %3181 = vmatprep.subr.mxu0 %v3042
    %3182 = vmatpush1.msra.mxu0 %v3041
    %3183 = vmatprep.subr.mxu0 %v3044
    %3184 = vmatpush1.msra.mxu0 %v3043
    %3185 = vmatprep.subr.mxu0 %v3046
    %3186 = vmatpush1.msra.mxu0 %v3045
    %3187 = vmatprep.subr.mxu0 %v3048
    %3188 = vmatpush1.msra.mxu0 %v3047
    %3189 = vmatprep.subr.mxu0 %v3050
    %3190 = vmatpush1.msra.mxu0 %v3049
    %3191 = vmatprep.mubr.f32.mxu0 %v2984
    %3192 = vmatmul.mubr.f32.gmra.mrb[0].mxu0 %v2983
    %v3193 = vpop.f32.mrb[0].mxu0
    %v3194 = vadd.f32 %v3120, %v3193
    %v3195 = vpop.f32.mrb[0].mxu0
    %v3196 = vadd.f32 %v3124, %v3195
    %3197 = vdwg.mxu0
    %3198 = vmatprep.subr.mxu0 %v3052
    %3199 = vmatpush1.msra.mxu0 %v3051
    %3200 = vmatprep.subr.mxu0 %v3054
    %3201 = vmatpush1.msra.mxu0 %v3053
    %3202 = vmatprep.subr.mxu0 %v3056
    %3203 = vmatpush1.msra.mxu0 %v3055
    %3204 = vmatprep.subr.mxu0 %v3058
    %3205 = vmatpush1.msra.mxu0 %v3057
    %3206 = vmatprep.subr.mxu0 %v3060
    %3207 = vmatpush1.msra.mxu0 %v3059
    %3208 = vmatprep.subr.mxu0 %v3062
    %3209 = vmatpush1.msra.mxu0 %v3061
    %3210 = vmatprep.subr.mxu0 %v3064
    %3211 = vmatpush1.msra.mxu0 %v3063
    %3212 = vmatprep.subr.mxu0 %v3066
    %3213 = vmatpush1.msra.mxu0 %v3065
    %3214 = vmatprep.subr.mxu0 %v3068
    %3215 = vmatpush1.msra.mxu0 %v3067
    %3216 = vmatprep.subr.mxu0 %v3070
    %3217 = vmatpush1.msra.mxu0 %v3069
    %3218 = vmatprep.subr.mxu0 %v3072
    %3219 = vmatpush1.msra.mxu0 %v3071
    %3220 = vmatprep.subr.mxu0 %v3074
    %3221 = vmatpush1.msra.mxu0 %v3073
    %3222 = vmatprep.subr.mxu0 %v3076
    %3223 = vmatpush1.msra.mxu0 %v3075
    %3224 = vmatprep.subr.mxu0 %v3078
    %3225 = vmatpush1.msra.mxu0 %v3077
    %3226 = vmatprep.subr.mxu0 %v3080
    %3227 = vmatpush1.msra.mxu0 %v3079
    %3228 = vmatprep.subr.mxu0 %v3082
    %3229 = vmatpush1.msra.mxu0 %v3081
    %3230 = vmatprep.subr.mxu0 %v3084
    %3231 = vmatpush1.msra.mxu0 %v3083
    %3232 = vmatprep.subr.mxu0 %v3086
    %3233 = vmatpush1.msra.mxu0 %v3085
    %3234 = vmatprep.subr.mxu0 %v3088
    %3235 = vmatpush1.msra.mxu0 %v3087
    %3236 = vmatprep.subr.mxu0 %v3090
    %3237 = vmatpush1.msra.mxu0 %v3089
    %3238 = vmatprep.subr.mxu0 %v3092
    %3239 = vmatpush1.msra.mxu0 %v3091
    %3240 = vmatprep.subr.mxu0 %v3094
    %3241 = vmatpush1.msra.mxu0 %v3093
    %3242 = vmatprep.subr.mxu0 %v3096
    %3243 = vmatpush1.msra.mxu0 %v3095
    %3244 = vmatprep.subr.mxu0 %v3098
    %3245 = vmatpush1.msra.mxu0 %v3097
    %3246 = vmatprep.subr.mxu0 %v3100
    %3247 = vmatpush1.msra.mxu0 %v3099
    %3248 = vmatprep.subr.mxu0 %v3102
    %3249 = vmatpush1.msra.mxu0 %v3101
    %3250 = vmatprep.subr.mxu0 %v3104
    %3251 = vmatpush1.msra.mxu0 %v3103
    %3252 = vmatprep.subr.mxu0 %v3106
    %3253 = vmatpush1.msra.mxu0 %v3105
    %3254 = vmatprep.subr.mxu0 %v3108
    %3255 = vmatpush1.msra.mxu0 %v3107
    %3256 = vmatprep.subr.mxu0 %v3110
    %3257 = vmatpush1.msra.mxu0 %v3109
    %3258 = vmatprep.subr.mxu0 %v3112
    %3259 = vmatpush1.msra.mxu0 %v3111
    %3260 = vmatprep.subr.mxu0 %v3114
    %3261 = vmatpush1.msra.mxu0 %v3113
    %3262 = vmatprep.mubr.f32.mxu0 %v2986
    %3263 = vmatmul.mubr.f32.gmra.mrb[0].mxu0 %v2985
    %v3264 = vpop.f32.mrb[0].mxu0
    %v3265 = vadd.f32 %v3194, %v3264
    %v3266 = vpop.f32.mrb[0].mxu0
    %v3267 = vadd.f32 %v3196, %v3266
    %3268 = vdwg.mxu0
    %vm3269 = vcmp.ge.f32.partialorder %v3265, 0.0
    %vm3270 = vcmp.ge.f32.partialorder %v3267, 0.0
    %v3271 = vmul.f32 %v3265, 0.01
    %v3272 = vmul.f32 %v3267, 0.01
    %v3273 = vsel %vm3269, %v3265, %v3271
    %v3274 = vsel %vm3270, %v3267, %v3272
    %v3275 = vld [vmem:[#allocation12] sm:$0xff]
    %v3276 = vld [vmem:[#allocation12 + $0x8] sm:$0xff]
    %v3277 = vld [vmem:[#allocation12 + $0x10] sm:$0xff]
    %v3278 = vld [vmem:[#allocation12 + $0x18] sm:$0xff]
    %v3279 = vld [vmem:[#allocation12 + $0x20] sm:$0xff]
    %v3280 = vld [vmem:[#allocation12 + $0x28] sm:$0xff]
    %v3281 = vld [vmem:[#allocation12 + $0x30] sm:$0xff]
    %v3282 = vld [vmem:[#allocation12 + $0x38] sm:$0xff]
    %v3283 = vld [vmem:[#allocation12 + $0x40] sm:$0xff]
    %v3284 = vld [vmem:[#allocation12 + $0x48] sm:$0xff]
    %v3285 = vld [vmem:[#allocation12 + $0x50] sm:$0xff]
    %v3286 = vld [vmem:[#allocation12 + $0x58] sm:$0xff]
    %v3287 = vld [vmem:[#allocation12 + $0x60] sm:$0xff]
    %v3288 = vld [vmem:[#allocation12 + $0x68] sm:$0xff]
    %v3289 = vld [vmem:[#allocation12 + $0x70] sm:$0xff]
    %v3290 = vld [vmem:[#allocation12 + $0x78] sm:$0xff]
    %v3291 = vld [vmem:[#allocation12 + $0x80] sm:$0xff]
    %v3292 = vld [vmem:[#allocation12 + $0x88] sm:$0xff]
    %v3293 = vld [vmem:[#allocation12 + $0x90] sm:$0xff]
    %v3294 = vld [vmem:[#allocation12 + $0x98] sm:$0xff]
    %v3295 = vld [vmem:[#allocation12 + $0xa0] sm:$0xff]
    %v3296 = vld [vmem:[#allocation12 + $0xa8] sm:$0xff]
    %v3297 = vld [vmem:[#allocation12 + $0xb0] sm:$0xff]
    %v3298 = vld [vmem:[#allocation12 + $0xb8] sm:$0xff]
    %v3299 = vld [vmem:[#allocation12 + $0xc0] sm:$0xff]
    %v3300 = vld [vmem:[#allocation12 + $0xc8] sm:$0xff]
    %v3301 = vld [vmem:[#allocation12 + $0xd0] sm:$0xff]
    %v3302 = vld [vmem:[#allocation12 + $0xd8] sm:$0xff]
    %v3303 = vld [vmem:[#allocation12 + $0xe0] sm:$0xff]
    %v3304 = vld [vmem:[#allocation12 + $0xe8] sm:$0xff]
    %v3305 = vld [vmem:[#allocation12 + $0xf0] sm:$0xff]
    %v3306 = vld [vmem:[#allocation12 + $0xf8] sm:$0xff]
    %v3307 = vld [vmem:[#allocation13] sm:$0x1]
    %v3309 = vlaneseq
    %v3310 = vshrl.u32 %v3309, 7
    %v3311 = vsub.s32 0, %v3310
    %v3312 = vrot.slane %v3307, %v3311
    %3314 = vmatprep.subr.mxu0 0.0
    %3315 = vmatpush1.msra.mxu0 %v3275
    %3316 = vmatprep.subr.mxu0 0.0
    %3317 = vmatpush1.msra.mxu0 %v3276
    %3318 = vmatprep.subr.mxu0 0.0
    %3319 = vmatpush1.msra.mxu0 %v3277
    %3320 = vmatprep.subr.mxu0 0.0
    %3321 = vmatpush1.msra.mxu0 %v3278
    %3322 = vmatprep.subr.mxu0 0.0
    %3323 = vmatpush1.msra.mxu0 %v3279
    %3324 = vmatprep.subr.mxu0 0.0
    %3325 = vmatpush1.msra.mxu0 %v3280
    %3326 = vmatprep.subr.mxu0 0.0
    %3327 = vmatpush1.msra.mxu0 %v3281
    %3328 = vmatprep.subr.mxu0 0.0
    %3329 = vmatpush1.msra.mxu0 %v3282
    %3330 = vmatprep.subr.mxu0 0.0
    %3331 = vmatpush1.msra.mxu0 %v3283
    %3332 = vmatprep.subr.mxu0 0.0
    %3333 = vmatpush1.msra.mxu0 %v3284
    %3334 = vmatprep.subr.mxu0 0.0
    %3335 = vmatpush1.msra.mxu0 %v3285
    %3336 = vmatprep.subr.mxu0 0.0
    %3337 = vmatpush1.msra.mxu0 %v3286
    %3338 = vmatprep.subr.mxu0 0.0
    %3339 = vmatpush1.msra.mxu0 %v3287
    %3340 = vmatprep.subr.mxu0 0.0
    %3341 = vmatpush1.msra.mxu0 %v3288
    %3342 = vmatprep.subr.mxu0 0.0
    %3343 = vmatpush1.msra.mxu0 %v3289
    %3344 = vmatprep.subr.mxu0 0.0
    %3345 = vmatpush1.msra.mxu0 %v3290
    %3346 = vmatprep.subr.mxu0 0.0
    %3347 = vmatpush1.msra.mxu0 %v3291
    %3348 = vmatprep.subr.mxu0 0.0
    %3349 = vmatpush1.msra.mxu0 %v3292
    %3350 = vmatprep.subr.mxu0 0.0
    %3351 = vmatpush1.msra.mxu0 %v3293
    %3352 = vmatprep.subr.mxu0 0.0
    %3353 = vmatpush1.msra.mxu0 %v3294
    %3354 = vmatprep.subr.mxu0 0.0
    %3355 = vmatpush1.msra.mxu0 %v3295
    %3356 = vmatprep.subr.mxu0 0.0
    %3357 = vmatpush1.msra.mxu0 %v3296
    %3358 = vmatprep.subr.mxu0 0.0
    %3359 = vmatpush1.msra.mxu0 %v3297
    %3360 = vmatprep.subr.mxu0 0.0
    %3361 = vmatpush1.msra.mxu0 %v3298
    %3362 = vmatprep.subr.mxu0 0.0
    %3363 = vmatpush1.msra.mxu0 %v3299
    %3364 = vmatprep.subr.mxu0 0.0
    %3365 = vmatpush1.msra.mxu0 %v3300
    %3366 = vmatprep.subr.mxu0 0.0
    %3367 = vmatpush1.msra.mxu0 %v3301
    %3368 = vmatprep.subr.mxu0 0.0
    %3369 = vmatpush1.msra.mxu0 %v3302
    %3370 = vmatprep.subr.mxu0 0.0
    %3371 = vmatpush1.msra.mxu0 %v3303
    %3372 = vmatprep.subr.mxu0 0.0
    %3373 = vmatpush1.msra.mxu0 %v3304
    %3374 = vmatprep.subr.mxu0 0.0
    %3375 = vmatpush1.msra.mxu0 %v3305
    %3376 = vmatprep.subr.mxu0 0.0
    %3377 = vmatpush1.msra.mxu0 %v3306
    %3378 = vmatprep.mubr.f32.mxu0 %v3274
    %3379 = vmatmul.mubr.f32.gmra.mrb[0].mxu0 %v3273
    %v3380 = vpop.f32.mrb[0].mxu0
    %v3381 = vadd.f32 %v3312, %v3380
    %v3382 = vpop.f32.mrb[0].mxu0
    %3383 = vdwg.mxu0
    %vm3384 = vcmp.ge.f32.partialorder %v3381, 0.0
    %v3385 = vmul.f32 %v3381, 0.01
    %v3386 = vsel %vm3384, %v3381, %v3385
    %v3387 = vld [vmem:[%s9] sm:$0xff]
    %v3388 = vld [vmem:[%s9 + $0x8] sm:$0xff]
    %v3389 = vld [vmem:[%s9 + $0x10] sm:$0xff]
    %v3390 = vld [vmem:[%s9 + $0x18] sm:$0xff]
    %v3391 = vld [vmem:[%s9 + $0x20] sm:$0xff]
    %v3392 = vld [vmem:[%s9 + $0x28] sm:$0xff]
    %v3393 = vld [vmem:[%s9 + $0x30] sm:$0xff]
    %v3394 = vld [vmem:[%s9 + $0x38] sm:$0xff]
    %v3395 = vld [vmem:[%s9 + $0x40] sm:$0xff]
    %v3396 = vld [vmem:[%s9 + $0x48] sm:$0xff]
    %v3397 = vld [vmem:[%s9 + $0x50] sm:$0xff]
    %v3398 = vld [vmem:[%s9 + $0x58] sm:$0xff]
    %v3399 = vld [vmem:[%s9 + $0x60] sm:$0xff]
    %v3400 = vld [vmem:[%s9 + $0x68] sm:$0xff]
    %v3401 = vld [vmem:[%s9 + $0x70] sm:$0xff]
    %v3402 = vld [vmem:[%s9 + $0x78] sm:$0xff]
    %v3403 = vld [vmem:[#allocation15] sm:$0x1]
    %v3405 = vlaneseq
    %v3406 = vshrl.u32 %v3405, 7
    %v3407 = vsub.s32 0, %v3406
    %v3408 = vrot.slane %v3403, %v3407
    %3410 = vmatprep.subr.mxu0 0.0
    %3411 = vmatpush1.msra.mxu0 %v3387
    %3412 = vmatprep.subr.mxu0 0.0
    %3413 = vmatpush1.msra.mxu0 %v3388
    %3414 = vmatprep.subr.mxu0 0.0
    %3415 = vmatpush1.msra.mxu0 %v3389
    %3416 = vmatprep.subr.mxu0 0.0
    %3417 = vmatpush1.msra.mxu0 %v3390
    %3418 = vmatprep.subr.mxu0 0.0
    %3419 = vmatpush1.msra.mxu0 %v3391
    %3420 = vmatprep.subr.mxu0 0.0
    %3421 = vmatpush1.msra.mxu0 %v3392
    %3422 = vmatprep.subr.mxu0 0.0
    %3423 = vmatpush1.msra.mxu0 %v3393
    %3424 = vmatprep.subr.mxu0 0.0
    %3425 = vmatpush1.msra.mxu0 %v3394
    %3426 = vmatprep.subr.mxu0 0.0
    %3427 = vmatpush1.msra.mxu0 %v3395
    %3428 = vmatprep.subr.mxu0 0.0
    %3429 = vmatpush1.msra.mxu0 %v3396
    %3430 = vmatprep.subr.mxu0 0.0
    %3431 = vmatpush1.msra.mxu0 %v3397
    %3432 = vmatprep.subr.mxu0 0.0
    %3433 = vmatpush1.msra.mxu0 %v3398
    %3434 = vmatprep.subr.mxu0 0.0
    %3435 = vmatpush1.msra.mxu0 %v3399
    %3436 = vmatprep.subr.mxu0 0.0
    %3437 = vmatpush1.msra.mxu0 %v3400
    %3438 = vmatprep.subr.mxu0 0.0
    %3439 = vmatpush1.msra.mxu0 %v3401
    %3440 = vmatprep.subr.mxu0 0.0
    %3441 = vmatpush1.msra.mxu0 %v3402
    %3442 = vmatprep.subr.mxu0 0.0
    %3443 = vmatpush1.msra.mxu0 0.0
    %3444 = vmatprep.subr.mxu0 0.0
    %3445 = vmatpush1.msra.mxu0 0.0
    %3446 = vmatprep.subr.mxu0 0.0
    %3447 = vmatpush1.msra.mxu0 0.0
    %3448 = vmatprep.subr.mxu0 0.0
    %3449 = vmatpush1.msra.mxu0 0.0
    %3450 = vmatprep.subr.mxu0 0.0
    %3451 = vmatpush1.msra.mxu0 0.0
    %3452 = vmatprep.subr.mxu0 0.0
    %3453 = vmatpush1.msra.mxu0 0.0
    %3454 = vmatprep.subr.mxu0 0.0
    %3455 = vmatpush1.msra.mxu0 0.0
    %3456 = vmatprep.subr.mxu0 0.0
    %3457 = vmatpush1.msra.mxu0 0.0
    %3458 = vmatprep.subr.mxu0 0.0
    %3459 = vmatpush1.msra.mxu0 0.0
    %3460 = vmatprep.subr.mxu0 0.0
    %3461 = vmatpush1.msra.mxu0 0.0
    %3462 = vmatprep.subr.mxu0 0.0
    %3463 = vmatpush1.msra.mxu0 0.0
    %3464 = vmatprep.subr.mxu0 0.0
    %3465 = vmatpush1.msra.mxu0 0.0
    %3466 = vmatprep.subr.mxu0 0.0
    %3467 = vmatpush1.msra.mxu0 0.0
    %3468 = vmatprep.subr.mxu0 0.0
    %3469 = vmatpush1.msra.mxu0 0.0
    %3470 = vmatprep.subr.mxu0 0.0
    %3471 = vmatpush1.msra.mxu0 0.0
    %3472 = vmatprep.subr.mxu0 0.0
    %3473 = vmatpush1.msra.mxu0 0.0
    %3474 = vmatprep.mubr.f32.mxu0 0.0
    %3475 = vmatmul.mubr.f32.gmra.mrb[0].mxu0 %v3386
    %v3476 = vpop.f32.mrb[0].mxu0
    %v3477 = vadd.f32 %v3408, %v3476
    %v3478 = vpop.f32.mrb[0].mxu0
    %3479 = vdwg.mxu0
    %vm3480 = vcmp.ge.f32.partialorder %v3477, 0.0
    %v3481 = vmul.f32 %v3477, 0.01
    %v3482 = vsel %vm3480, %v3477, %v3481
    %v3483 = vld [vmem:[#allocation16] sm:$0xff]
    %v3484 = vld [vmem:[#allocation16 + $0x8] sm:$0xff]
    %v3485 = vld [vmem:[#allocation16 + $0x10] sm:$0xff]
    %v3486 = vld [vmem:[#allocation16 + $0x18] sm:$0xff]
    %v3487 = vld [vmem:[#allocation16 + $0x20] sm:$0xff]
    %v3488 = vld [vmem:[#allocation16 + $0x28] sm:$0xff]
    %v3489 = vld [vmem:[#allocation16 + $0x30] sm:$0xff]
    %v3490 = vld [vmem:[#allocation16 + $0x38] sm:$0xff]
    %v3491 = vld [vmem:[#allocation18] sm:$0x1]
    %v3493 = vlaneseq
    %v3494 = vshrl.u32 %v3493, 7
    %v3495 = vsub.s32 0, %v3494
    %v3496 = vrot.slane %v3491, %v3495
    %vm3498 = vcmask 523264
    %v3500 = vsel %vm3498, %v3482, 0
    %3502 = vmatprep.subr.mxu0 0.0
    %3503 = vmatpush1.msra.mxu0 %v3483
    %3504 = vmatprep.subr.mxu0 0.0
    %3505 = vmatpush1.msra.mxu0 %v3484
    %3506 = vmatprep.subr.mxu0 0.0
    %3507 = vmatpush1.msra.mxu0 %v3485
    %3508 = vmatprep.subr.mxu0 0.0
    %3509 = vmatpush1.msra.mxu0 %v3486
    %3510 = vmatprep.subr.mxu0 0.0
    %3511 = vmatpush1.msra.mxu0 %v3487
    %3512 = vmatprep.subr.mxu0 0.0
    %3513 = vmatpush1.msra.mxu0 %v3488
    %3514 = vmatprep.subr.mxu0 0.0
    %3515 = vmatpush1.msra.mxu0 %v3489
    %3516 = vmatprep.subr.mxu0 0.0
    %3517 = vmatpush1.msra.mxu0 %v3490
    %3518 = vmatprep.subr.mxu0 0.0
    %3519 = vmatpush1.msra.mxu0 0.0
    %3520 = vmatprep.subr.mxu0 0.0
    %3521 = vmatpush1.msra.mxu0 0.0
    %3522 = vmatprep.subr.mxu0 0.0
    %3523 = vmatpush1.msra.mxu0 0.0
    %3524 = vmatprep.subr.mxu0 0.0
    %3525 = vmatpush1.msra.mxu0 0.0
    %3526 = vmatprep.subr.mxu0 0.0
    %3527 = vmatpush1.msra.mxu0 0.0
    %3528 = vmatprep.subr.mxu0 0.0
    %3529 = vmatpush1.msra.mxu0 0.0
    %3530 = vmatprep.subr.mxu0 0.0
    %3531 = vmatpush1.msra.mxu0 0.0
    %3532 = vmatprep.subr.mxu0 0.0
    %3533 = vmatpush1.msra.mxu0 0.0
    %3534 = vmatprep.subr.mxu0 0.0
    %3535 = vmatpush1.msra.mxu0 0.0
    %3536 = vmatprep.subr.mxu0 0.0
    %3537 = vmatpush1.msra.mxu0 0.0
    %3538 = vmatprep.subr.mxu0 0.0
    %3539 = vmatpush1.msra.mxu0 0.0
    %3540 = vmatprep.subr.mxu0 0.0
    %3541 = vmatpush1.msra.mxu0 0.0
    %3542 = vmatprep.subr.mxu0 0.0
    %3543 = vmatpush1.msra.mxu0 0.0
    %3544 = vmatprep.subr.mxu0 0.0
    %3545 = vmatpush1.msra.mxu0 0.0
    %3546 = vmatprep.subr.mxu0 0.0
    %3547 = vmatpush1.msra.mxu0 0.0
    %3548 = vmatprep.subr.mxu0 0.0
    %3549 = vmatpush1.msra.mxu0 0.0
    %3550 = vmatprep.subr.mxu0 0.0
    %3551 = vmatpush1.msra.mxu0 0.0
    %3552 = vmatprep.subr.mxu0 0.0
    %3553 = vmatpush1.msra.mxu0 0.0
    %3554 = vmatprep.subr.mxu0 0.0
    %3555 = vmatpush1.msra.mxu0 0.0
    %3556 = vmatprep.subr.mxu0 0.0
    %3557 = vmatpush1.msra.mxu0 0.0
    %3558 = vmatprep.subr.mxu0 0.0
    %3559 = vmatpush1.msra.mxu0 0.0
    %3560 = vmatprep.subr.mxu0 0.0
    %3561 = vmatpush1.msra.mxu0 0.0
    %3562 = vmatprep.subr.mxu0 0.0
    %3563 = vmatpush1.msra.mxu0 0.0
    %3564 = vmatprep.subr.mxu0 0.0
    %3565 = vmatpush1.msra.mxu0 0.0
    %3566 = vmatprep.mubr.f32.mxu0 0.0
    %3567 = vmatmul.mubr.f32.gmra.mrb[0].mxu0 %v3500
    %v3568 = vpop.f32.mrb[0].mxu0
    %v3569 = vadd.f32 %v3496, %v3568
    %v3570 = vpop.f32.mrb[0].mxu0
    %3571 = vdwg.mxu0
    %3572 = vst [vmem:[%s13] sm:$0xff] %v3569
    // Predicated region
    $region98: #{cifarnet_fused_forward.1} parent=1 // pred_check
      _
    $region99: #{cifarnet_fused_forward.1} parent=1 // pred_check_branch
      %3574 = sbr.rel (0) target = $region101
    $region100: #{cifarnet_fused_forward.1} parent=1 // pred_region
      _
    $region101: #{cifarnet_fused_forward.1} parent=1 // pred_fallthru
      _
    // Predicated region
    $region102: #{cifarnet_fused_forward.1} parent=1 // pred_check
      _
    $region103: #{cifarnet_fused_forward.1} parent=1 // pred_check_branch
      %3576 = sbr.rel (0) target = $region105
    $region104: #{cifarnet_fused_forward.1} parent=1 // pred_region
      _
    $region105: #{cifarnet_fused_forward.1} parent=1 // pred_fallthru
      _
    %3577 = vsyncpa [#allocation3], 1
    %3578 = vsyncpa [#allocation5], 1
    %3579 = vsyncpa [#allocation8], 1
    %3580 = vsyncpa [#allocation11], 1
    %3581 = vsyncpa [#allocation14], 1
    %3582 = vsyncpa [#allocation17], 1

</llo_original>
